<compile_context>
chip_gen: v6e
topology: v6e:2x2x1
jax: 0.10.0
libtpu: 0.0.40
codegen_flags: <defaults>
</compile_context>

<pallas_src>
import math

import jax
import jax.numpy as jnp
from jax.experimental import pallas as pl
from jax.experimental.pallas import tpu as pltpu

_INNER_MLP_MULT = 2
_BN_EPS = 1e-5
_LANE = 128  # pad channel dims to this many lanes


def _round_up(x, m):
    return ((x + m - 1) // m) * m


# --------------------------------------------------------------------------------------
# In-kernel helpers
# --------------------------------------------------------------------------------------
def _bn_relu(h, g, b):
    """BatchNorm1d (training-mode, biased batch stats) + ReLU, centered two-pass variance.

    Stays in f32 on the VPU (v5e has no native bf16 VPU path)."""
    mu = jnp.mean(h, axis=0, keepdims=True)
    d = h - mu
    var = jnp.mean(d * d, axis=0, keepdims=True)
    return jnp.maximum(d * jax.lax.rsqrt(var + _BN_EPS) * g + b, 0.0)


def _dot(a_bf16, b_bf16):
    """bf16 GEMM with f32 accumulation (MXU fast path on v5e/v6e/v7x)."""
    return jnp.dot(a_bf16, b_bf16, preferred_element_type=jnp.float32)


def _seg_onehot(idx_row, n_dst):
    """(n_dst, rows) 0/1 segment-sum operator from an int32 (1, rows) index row, in bf16."""
    rows = idx_row.shape[1]
    iota = jax.lax.broadcasted_iota(jnp.int32, (n_dst, rows), 0)
    return (iota == idx_row).astype(jnp.float32).astype(jnp.bfloat16)


# --------------------------------------------------------------------------------------
# Fused conv stack: edge lift (l==0) + all ConvLayers, grid=(num_layers,)
# --------------------------------------------------------------------------------------
def _conv_stack_kernel(vcol_ref, pvcol_ref,                       # scalar-prefetch (SMEM)
                       node0_ref, e0_ref, vrow_ref, deg_ref,      # graph data (VMEM)
                       ew1_ref, eg1_ref, eb1_ref, ew2_ref, eg2_ref, eb2_ref,
                       nw1_ref, ng1_ref, nb1_ref, nw2_ref, ng2_ref, nb2_ref,
                       node_out_ref, edge_out_ref,
                       nr_s, er_s, gat_s, gatp_s, pvx_s):
    l = pl.program_id(0)
    n_nodes, hp = nr_s.shape
    two_e = er_s.shape[0]
    bf16 = jnp.bfloat16

    # edge-row -> node segment-sum operator (0/1 exact in bf16)
    seg = _seg_onehot(vrow_ref[...], n_nodes)                       # (N, 2E) bf16

    @pl.when(l == 0)
    def _init():
        # node order-0 embeddings -> VMEM-resident activations
        nr_s[...] = node0_ref[...]
        # edge order-0 -> order-1 edge layer:
        #   per_vertex[v] = sum_{rows r' with vert(r')==v} e0[r'];  er0[r] = per_vertex[vert(r)]
        pvx_s[...] = _dot(seg, e0_ref[...].astype(bf16))            # (N, Hp) f32
        for r in range(two_e):   # direct row gather (no one-hot matmul)
            er_s[pl.ds(r, 1), :] = pvx_s[pl.ds(vcol_ref[r], 1), :]

    # ---- direct row gathers of node_rep (replaces (2E,N) one-hot matmuls) ----
    for r in range(two_e):
        gat_s[pl.ds(r, 1), :] = nr_s[pl.ds(vcol_ref[r], 1), :]      # node_rep[vert(r)]
        gatp_s[pl.ds(r, 1), :] = nr_s[pl.ds(pvcol_ref[r], 1), :]    # node_rep[partner(r)]

    nr = nr_s[...]                                                  # (N,  Hp) f32
    er = er_s[...]                                                  # (2E, Hp) f32
    copy_f = deg_ref[...] * gat_s[...]                              # deg(u) * node_rep[u]
    bcast_f = copy_f + gatp_s[...]                                  # + node_rep[u']

    er_b = er.astype(bf16)
    bc_b = bcast_f.astype(bf16)
    cp_b = copy_f.astype(bf16)

    # ---- edge MLP: K-slab first GEMM (edge_new = [er | bcast | copy], never materialized) ----
    ew1 = ew1_ref[0]
    he = (_dot(er_b, ew1[0:hp])
          + _dot(bc_b, ew1[hp:2 * hp])
          + _dot(cp_b, ew1[2 * hp:3 * hp]))
    he = _bn_relu(he, eg1_ref[0], eb1_ref[0])
    er_new = _bn_relu(_dot(he.astype(bf16), ew2_ref[0]), eg2_ref[0], eb2_ref[0])

    # ---- edge -> node segment sums, per channel segment (bf16 one-hot matmul) ----
    e2n_e = _dot(seg, er_b)                                         # (N, Hp) f32
    e2n_b = _dot(seg, bc_b)
    e2n_c = _dot(seg, cp_b)

    # ---- node MLP: K-slab first GEMM (node_in = [nr | e2n_e | e2n_b | e2n_c]) ----
    nw1 = nw1_ref[0]
    hn = (_dot(nr.astype(bf16), nw1[0:hp])
          + _dot(e2n_e.astype(bf16), nw1[hp:2 * hp])
          + _dot(e2n_b.astype(bf16), nw1[2 * hp:3 * hp])
          + _dot(e2n_c.astype(bf16), nw1[3 * hp:4 * hp]))
    hn = _bn_relu(hn, ng1_ref[0], nb1_ref[0])
    nr_new = _bn_relu(_dot(hn.astype(bf16), nw2_ref[0]), ng2_ref[0], nb2_ref[0])

    # carry activations in VMEM across grid steps
    nr_s[...] = nr_new
    er_s[...] = er_new

    @pl.when(l == pl.num_programs(0) - 1)
    def _finalize():
        node_out_ref[...] = nr_new.astype(node_out_ref.dtype)
        edge_out_ref[...] = er_new.astype(edge_out_ref.dtype)


# --------------------------------------------------------------------------------------
# Fused readout (edge->node gather, mean pool) + final_mlp + classifier
# --------------------------------------------------------------------------------------
def _readout_head_kernel(nr_ref, er_ref, vrow_ref, pool_ref,
                         w1_ref, bb1_ref, g1_ref, be1_ref,
                         w2_ref, bb2_ref, g2_ref, be2_ref,
                         w3_ref, bb3_ref, out_ref):
    bf16 = jnp.bfloat16
    nr = nr_ref[...]                                                # (N,  Hp) bf16
    er = er_ref[...]                                                # (2E, Hp) bf16
    n_nodes, hp = nr.shape

    seg = _seg_onehot(vrow_ref[...], n_nodes)                       # (N, 2E) bf16
    e2n = _dot(seg, er)                                             # (N, Hp) f32
    pool = pool_ref[...].astype(bf16)                               # (B, N)
    pooled_n = _dot(pool, nr)                                       # (B, Hp)
    pooled_e = _dot(pool, e2n.astype(bf16))                         # (B, Hp)

    # final_mlp: Linear(2H, dense, bias) -> BN -> ReLU -> Linear(dense, dense, bias) -> BN -> ReLU
    w1 = w1_ref[...]
    h = (_dot(pooled_n.astype(bf16), w1[0:hp])
         + _dot(pooled_e.astype(bf16), w1[hp:2 * hp]) + bb1_ref[...])
    h = _bn_relu(h, g1_ref[...], be1_ref[...])
    h = _bn_relu(_dot(h.astype(bf16), w2_ref[...]) + bb2_ref[...], g2_ref[...], be2_ref[...])
    # classifier
    out_ref[...] = _dot(h.astype(bf16), w3_ref[...]) + bb3_ref[...]


# --------------------------------------------------------------------------------------
# VMEM budget: footprint-derived, capped well below v7x's 64 MiB physical VMEM
# --------------------------------------------------------------------------------------
def _vmem_budget(arrays, out_shapes, scratch_bytes=0):
    def nbytes(x):
        return int(math.prod(x.shape)) * jnp.dtype(x.dtype).itemsize
    total = 2 * sum(nbytes(a) for a in arrays)          # double-buffer headroom for inputs
    total += 2 * sum(nbytes(o) for o in out_shapes)
    total += int(scratch_bytes)
    return int(min(max(total + (8 << 20), 32 << 20), 48 << 20))


# --------------------------------------------------------------------------------------
# pallas_call wrappers
# --------------------------------------------------------------------------------------
def pallas_conv_stack(node0, e0_rows, graph, lp):
    n_nodes, hp = node0.shape
    two_e = e0_rows.shape[0]
    num_layers = lp["ew1"].shape[0]

    def const2(l, *_):      # graph data / activations: one block for the whole grid
        return (0, 0)

    def per_layer(l, *_):   # stacked weights: pick layer l's slab (prefetched while l-1 runs)
        return (l, 0, 0)

    data_args = (node0, e0_rows, graph["vrow"], graph["deg"])
    w_names = ("ew1", "eg1", "eb1", "ew2", "eg2", "eb2",
               "nw1", "ng1", "nb1", "nw2", "ng2", "nb2")
    w_args = tuple(lp[n] for n in w_names)

    in_specs = [pl.BlockSpec(a.shape, const2) for a in data_args]
    in_specs += [pl.BlockSpec((1,) + w.shape[1:], per_layer) for w in w_args]

    out_shape = (jax.ShapeDtypeStruct((n_nodes, hp), jnp.bfloat16),
                 jax.ShapeDtypeStruct((two_e, hp), jnp.bfloat16))
    out_specs = [pl.BlockSpec((n_nodes, hp), const2),
                 pl.BlockSpec((two_e, hp), const2)]

    scratch = [pltpu.VMEM((n_nodes, hp), jnp.float32),   # node activations (carried)
               pltpu.VMEM((two_e, hp), jnp.float32),     # edge activations (carried)
               pltpu.VMEM((two_e, hp), jnp.float32),     # gathered node_rep[vert]
               pltpu.VMEM((two_e, hp), jnp.float32),     # gathered node_rep[partner]
               pltpu.VMEM((n_nodes, hp), jnp.float32)]   # per-vertex sum (edge lift)
    scratch_bytes = 4 * hp * (3 * two_e + 2 * n_nodes)

    grid_spec = pltpu.PrefetchScalarGridSpec(
        num_scalar_prefetch=2,
        grid=(num_layers,),
        in_specs=in_specs,
        out_specs=out_specs,
        scratch_shapes=scratch)

    return pl.pallas_call(
        _conv_stack_kernel,
        grid_spec=grid_spec,
        out_shape=out_shape,
        compiler_params=pltpu.CompilerParams(
            dimension_semantics=("arbitrary",),
            vmem_limit_bytes=_vmem_budget(data_args + w_args, out_shape, scratch_bytes)),
    )(graph["vcol"], graph["pvcol"], *data_args, *w_args)


def pallas_readout_head(node_rep, edge_rep, graph, hp):
    num_graphs = graph["pool"].shape[0]
    out_dim = hp["w3"].shape[1]
    args = (node_rep, edge_rep, graph["vrow"], graph["pool"],
            hp["w1"], hp["bb1"], hp["g1"], hp["be1"],
            hp["w2"], hp["bb2"], hp["g2"], hp["be2"],
            hp["w3"], hp["bb3"])
    out_shape = jax.ShapeDtypeStruct((num_graphs, out_dim), jnp.float32)
    # Grid-less single-step call: operands pinned in VMEM, no pointless double buffering.
    return pl.pallas_call(
        _readout_head_kernel,
        out_shape=out_shape,
        in_specs=[pl.BlockSpec(memory_space=pltpu.MemorySpace.VMEM) for _ in args],
        out_specs=pl.BlockSpec(memory_space=pltpu.MemorySpace.VMEM),
        compiler_params=pltpu.CompilerParams(
            vmem_limit_bytes=_vmem_budget(args, (out_shape,))),
    )(*args)


# --------------------------------------------------------------------------------------
# Graph preprocessing (plain-JAX glue, built once per graph batch)
# --------------------------------------------------------------------------------------
def build_graph(edges, n_nodes, batch, num_graphs):
    edges = jnp.asarray(edges, jnp.int32)
    vert = edges.reshape(-1)                         # vertex of order-1 row r = 2e + slot
    pvert = edges[:, ::-1].reshape(-1)               # the other endpoint of row r's edge
    deg = jnp.zeros((n_nodes,), jnp.float32).at[vert].add(1.0)

    onehot = (jnp.asarray(batch)[None, :] == jnp.arange(num_graphs)[:, None]).astype(jnp.float32)
    pool = onehot / jnp.sum(onehot, axis=1, keepdims=True)   # (B, N) mean readout

    return dict(vcol=vert.astype(jnp.int32),                 # (2E,)  SMEM gather indices
                pvcol=pvert.astype(jnp.int32),                # (2E,)
                vrow=vert[None, :].astype(jnp.int32),         # (1,2E) segment-sum indices
                deg=deg[vert][:, None],                       # (2E,1) degree of vert(r)
                pool=pool)


# --------------------------------------------------------------------------------------
# Parameter initialization (channels zero-padded to 128-lane multiples; GEMM weights bf16)
# --------------------------------------------------------------------------------------
def init_params(key, hidden, dense, out_dim, num_layers,
                num_node_types=3, num_edge_types=4):
    Hp = _round_up(hidden, _LANE)
    inner = hidden * _INNER_MLP_MULT
    Ip = _round_up(inner, _LANE)
    Dp = _round_up(dense, _LANE)

    keys = iter(jax.random.split(key, 4 * num_layers + 16))

    def lin(in_f, out_f):
        bound = 1.0 / (in_f ** 0.5)
        return jax.random.uniform(next(keys), (in_f, out_f), jnp.float32, -bound, bound)

    def bias_row(out_f, in_f):
        bound = 1.0 / (in_f ** 0.5)
        return jax.random.uniform(next(keys), (1, out_f), jnp.float32, -bound, bound)

    def pad2(x, rp, cp):
        return jnp.pad(x, ((0, rp - x.shape[0]), (0, cp - x.shape[1])))

    def seg_weight(w, n_seg, seg_in, seg_in_p, out_p):
        # place the real rows of each concatenated input segment at its padded offset
        out_f = w.shape[1]
        wp = jnp.zeros((n_seg, seg_in_p, out_p), jnp.float32)
        wp = wp.at[:, :seg_in, :out_f].set(w.reshape(n_seg, seg_in, out_f))
        return wp.reshape(n_seg * seg_in_p, out_p).astype(jnp.bfloat16)

    def mlp2(n_seg):
        # Sequential(Linear(no bias), BatchNorm1d, ReLU, Linear(no bias), BatchNorm1d, ReLU)
        return dict(w1=seg_weight(lin(n_seg * hidden, inner), n_seg, hidden, Hp, Ip),
                    g1=jnp.ones((1, Ip), jnp.float32), b1=jnp.zeros((1, Ip), jnp.float32),
                    w2=pad2(lin(inner, hidden), Ip, Hp).astype(jnp.bfloat16),
                    g2=jnp.ones((1, Hp), jnp.float32), b2=jnp.zeros((1, Hp), jnp.float32))

    per_layer = [dict(edge=mlp2(3), node=mlp2(4)) for _ in range(num_layers)]

    def stack(fn):
        return jnp.stack([fn(lp) for lp in per_layer], axis=0)

    layers = dict(
        ew1=stack(lambda p: p["edge"]["w1"]), eg1=stack(lambda p: p["edge"]["g1"]),
        eb1=stack(lambda p: p["edge"]["b1"]), ew2=stack(lambda p: p["edge"]["w2"]),
        eg2=stack(lambda p: p["edge"]["g2"]), eb2=stack(lambda p: p["edge"]["b2"]),
        nw1=stack(lambda p: p["node"]["w1"]), ng1=stack(lambda p: p["node"]["g1"]),
        nb1=stack(lambda p: p["node"]["b1"]), nw2=stack(lambda p: p["node"]["w2"]),
        ng2=stack(lambda p: p["node"]["g2"]), nb2=stack(lambda p: p["node"]["b2"]))

    head = dict(
        w1=seg_weight(lin(2 * hidden, dense), 2, hidden, Hp, Dp),
        bb1=pad2(bias_row(dense, 2 * hidden), 1, Dp),
        g1=jnp.ones((1, Dp), jnp.float32), be1=jnp.zeros((1, Dp), jnp.float32),
        w2=pad2(lin(dense, dense), Dp, Dp).astype(jnp.bfloat16),
        bb2=pad2(bias_row(dense, dense), 1, Dp),
        g2=jnp.ones((1, Dp), jnp.float32), be2=jnp.zeros((1, Dp), jnp.float32),
        w3=pad2(lin(dense, out_dim), Dp, out_dim).astype(jnp.bfloat16),
        bb3=bias_row(out_dim, dense))

    node_table = pad2(jax.random.normal(next(keys), (num_node_types, hidden), jnp.float32),
                      num_node_types, Hp)
    edge_table = pad2(jax.random.normal(next(keys), (num_edge_types, hidden), jnp.float32),
                      num_edge_types, Hp)

    return dict(node_table=node_table, edge_table=edge_table, layers=layers, head=head)


# --------------------------------------------------------------------------------------
# Forward pass (mirrors Model_Proteins_batch.forward)
# --------------------------------------------------------------------------------------
@jax.jit
def forward(params, graph, node_labels, edge_labels):
    # embeddings (glue: table lookups)
    node0 = jnp.take(params["node_table"], node_labels, axis=0)                 # (N,  Hp)
    e0_rows = jnp.take(params["edge_table"], jnp.repeat(edge_labels, 2), axis=0)  # (2E, Hp)

    # edge lift + all conv layers, fused into one pallas_call (activations stay in VMEM)
    node_rep, edge_rep = pallas_conv_stack(node0, e0_rows, graph, params["layers"])

    # fused readout (edge->node gather, concat-as-slabs, mean-pool) + final_mlp + classifier
    return pallas_readout_head(node_rep, edge_rep, graph, params["head"])        # (B, out_dim)


# --------------------------------------------------------------------------------------
if __name__ == "__main__":
    hidden_dim, dense_dim, out_dim, num_layers = 32, 32, 2, 2
    key = jax.random.PRNGKey(0)
    k_par, k_nl, k_el = jax.random.split(key, 3)

    # Small deterministic batch of 2 graphs (10 nodes, 11 undirected edges total).
    edges = jnp.array([[0, 1], [1, 2], [2, 3], [3, 4], [4, 0], [1, 3],
                       [5, 6], [6, 7], [7, 8], [8, 9], [9, 5]], dtype=jnp.int32)
    n_nodes = 10
    num_graphs = 2
    batch = jnp.array([0] * 5 + [1] * 5, dtype=jnp.int32)
    node_labels = jax.random.randint(k_nl, (n_nodes,), 0, 3)
    edge_labels = jax.random.randint(k_el, (edges.shape[0],), 0, 4)

    params = init_params(k_par, hidden_dim, dense_dim, out_dim, num_layers)
    graph = build_graph(edges, n_nodes, batch, num_graphs)

    out = forward(params, graph, node_labels, edge_labels)
    out = jax.block_until_ready(out)
    assert out.shape == (num_graphs, out_dim), out.shape
    assert bool(jnp.all(jnp.isfinite(out)))
    print("KERNEL_OK")
</pallas_src>

<mosaic_0001>
module attributes {stable_mosaic.version = 11 : i64} {
  func.func @_readout_head_kernel(%arg0: memref<10x128xbf16, #tpu.memory_space<vmem>>, %arg1: memref<22x128xbf16, #tpu.memory_space<vmem>>, %arg2: memref<1x22xi32, #tpu.memory_space<vmem>>, %arg3: memref<2x10xf32, #tpu.memory_space<vmem>>, %arg4: memref<256x128xbf16, #tpu.memory_space<vmem>>, %arg5: memref<1x128xf32, #tpu.memory_space<vmem>>, %arg6: memref<1x128xf32, #tpu.memory_space<vmem>>, %arg7: memref<1x128xf32, #tpu.memory_space<vmem>>, %arg8: memref<128x128xbf16, #tpu.memory_space<vmem>>, %arg9: memref<1x128xf32, #tpu.memory_space<vmem>>, %arg10: memref<1x128xf32, #tpu.memory_space<vmem>>, %arg11: memref<1x128xf32, #tpu.memory_space<vmem>>, %arg12: memref<128x2xbf16, #tpu.memory_space<vmem>>, %arg13: memref<1x2xf32, #tpu.memory_space<vmem>>, %arg14: memref<2x2xf32, #tpu.memory_space<vmem>>) attributes {dimension_semantics = [], scalar_prefetch = 0 : i64, scratch_operands = 0 : i64, tpu.core_type = #tpu.core_type<tc>} {
    %c0 = arith.constant 0 : index
    %c0_0 = arith.constant 0 : index
    %0 = vector.load %arg0[%c0, %c0_0] : memref<10x128xbf16, #tpu.memory_space<vmem>>, vector<10x128xbf16>
    %c0_1 = arith.constant 0 : index
    %c0_2 = arith.constant 0 : index
    %1 = vector.load %arg1[%c0_1, %c0_2] : memref<22x128xbf16, #tpu.memory_space<vmem>>, vector<22x128xbf16>
    %c0_3 = arith.constant 0 : index
    %c0_4 = arith.constant 0 : index
    %2 = vector.load %arg2[%c0_3, %c0_4] : memref<1x22xi32, #tpu.memory_space<vmem>>, vector<1x22xi32>
    %3 = tpu.iota {dimensions = array<i32: 0>} : vector<10x22xi32>
    %4 = vector.broadcast %2 : vector<1x22xi32> to vector<10x22xi32>
    %5 = arith.cmpi eq, %3, %4 : vector<10x22xi32>
    %6 = arith.extui %5 : vector<10x22xi1> to vector<10x22xi32>
    %7 = arith.sitofp %6 : vector<10x22xi32> to vector<10x22xf32>
    %8 = arith.truncf %7 : vector<10x22xf32> to vector<10x22xbf16>
    %cst = arith.constant dense<0.000000e+00> : vector<10x128xf32>
    %9 = tpu.matmul %8, %1, %cst {dimension_numbers = #tpu.dot_dimension_numbers<[1], [0], [0], [1], [0, 0, 1, 1], [], []>} : vector<10x22xbf16>, vector<22x128xbf16>, vector<10x128xf32> -> vector<10x128xf32>
    %c0_5 = arith.constant 0 : index
    %c0_6 = arith.constant 0 : index
    %10 = vector.load %arg3[%c0_5, %c0_6] : memref<2x10xf32, #tpu.memory_space<vmem>>, vector<2x10xf32>
    %11 = arith.truncf %10 : vector<2x10xf32> to vector<2x10xbf16>
    %cst_7 = arith.constant dense<0.000000e+00> : vector<2x128xf32>
    %12 = tpu.matmul %11, %0, %cst_7 {dimension_numbers = #tpu.dot_dimension_numbers<[1], [0], [0], [1], [0, 0, 1, 1], [], []>} : vector<2x10xbf16>, vector<10x128xbf16>, vector<2x128xf32> -> vector<2x128xf32>
    %13 = arith.truncf %9 : vector<10x128xf32> to vector<10x128xbf16>
    %cst_8 = arith.constant dense<0.000000e+00> : vector<2x128xf32>
    %14 = tpu.matmul %11, %13, %cst_8 {dimension_numbers = #tpu.dot_dimension_numbers<[1], [0], [0], [1], [0, 0, 1, 1], [], []>} : vector<2x10xbf16>, vector<10x128xbf16>, vector<2x128xf32> -> vector<2x128xf32>
    %c0_9 = arith.constant 0 : index
    %c0_10 = arith.constant 0 : index
    %15 = vector.load %arg4[%c0_9, %c0_10] : memref<256x128xbf16, #tpu.memory_space<vmem>>, vector<256x128xbf16>
    %16 = arith.truncf %12 : vector<2x128xf32> to vector<2x128xbf16>
    %17 = vector.extract_strided_slice %15 {offsets = [0, 0], sizes = [128, 128], strides = [1, 1]} : vector<256x128xbf16> to vector<128x128xbf16>
    %cst_11 = arith.constant dense<0.000000e+00> : vector<2x128xf32>
    %18 = tpu.matmul %16, %17, %cst_11 {dimension_numbers = #tpu.dot_dimension_numbers<[1], [0], [0], [1], [0, 0, 1, 1], [], []>} : vector<2x128xbf16>, vector<128x128xbf16>, vector<2x128xf32> -> vector<2x128xf32>
    %19 = arith.truncf %14 : vector<2x128xf32> to vector<2x128xbf16>
    %20 = vector.extract_strided_slice %15 {offsets = [128, 0], sizes = [128, 128], strides = [1, 1]} : vector<256x128xbf16> to vector<128x128xbf16>
    %cst_12 = arith.constant dense<0.000000e+00> : vector<2x128xf32>
    %21 = tpu.matmul %19, %20, %cst_12 {dimension_numbers = #tpu.dot_dimension_numbers<[1], [0], [0], [1], [0, 0, 1, 1], [], []>} : vector<2x128xbf16>, vector<128x128xbf16>, vector<2x128xf32> -> vector<2x128xf32>
    %22 = arith.addf %18, %21 : vector<2x128xf32>
    %c0_13 = arith.constant 0 : index
    %c0_14 = arith.constant 0 : index
    %23 = vector.load %arg5[%c0_13, %c0_14] : memref<1x128xf32, #tpu.memory_space<vmem>>, vector<1x128xf32>
    %24 = vector.broadcast %23 : vector<1x128xf32> to vector<2x128xf32>
    %25 = arith.addf %22, %24 : vector<2x128xf32>
    %c0_15 = arith.constant 0 : index
    %c0_16 = arith.constant 0 : index
    %26 = vector.load %arg6[%c0_15, %c0_16] : memref<1x128xf32, #tpu.memory_space<vmem>>, vector<1x128xf32>
    %c0_17 = arith.constant 0 : index
    %c0_18 = arith.constant 0 : index
    %27 = vector.load %arg7[%c0_17, %c0_18] : memref<1x128xf32, #tpu.memory_space<vmem>>, vector<1x128xf32>
    %cst_19 = arith.constant dense<0.000000e+00> : vector<128xf32>
    %28 = vector.multi_reduction <add>, %25, %cst_19 [0] : vector<2x128xf32> to vector<128xf32>
    %29 = vector.shape_cast %28 : vector<128xf32> to vector<1x128xf32>
    %cst_20 = arith.constant 2.000000e+00 : f32
    %30 = vector.broadcast %cst_20 : f32 to vector<1x128xf32>
    %31 = arith.divf %29, %30 : vector<1x128xf32>
    %32 = vector.broadcast %31 : vector<1x128xf32> to vector<2x128xf32>
    %33 = arith.subf %25, %32 : vector<2x128xf32>
    %34 = arith.mulf %33, %33 : vector<2x128xf32>
    %cst_21 = arith.constant dense<0.000000e+00> : vector<128xf32>
    %35 = vector.multi_reduction <add>, %34, %cst_21 [0] : vector<2x128xf32> to vector<128xf32>
    %36 = vector.shape_cast %35 : vector<128xf32> to vector<1x128xf32>
    %cst_22 = arith.constant 2.000000e+00 : f32
    %37 = vector.broadcast %cst_22 : f32 to vector<1x128xf32>
    %38 = arith.divf %36, %37 : vector<1x128xf32>
    %cst_23 = arith.constant 9.99999974E-6 : f32
    %39 = vector.broadcast %cst_23 : f32 to vector<1x128xf32>
    %40 = arith.addf %38, %39 : vector<1x128xf32>
    %41 = math.rsqrt %40 : vector<1x128xf32>
    %42 = vector.broadcast %41 : vector<1x128xf32> to vector<2x128xf32>
    %43 = arith.mulf %33, %42 : vector<2x128xf32>
    %44 = vector.broadcast %26 : vector<1x128xf32> to vector<2x128xf32>
    %45 = arith.mulf %43, %44 : vector<2x128xf32>
    %46 = vector.broadcast %27 : vector<1x128xf32> to vector<2x128xf32>
    %47 = arith.addf %45, %46 : vector<2x128xf32>
    %cst_24 = arith.constant 0.000000e+00 : f32
    %48 = vector.broadcast %cst_24 : f32 to vector<2x128xf32>
    %49 = arith.maximumf %47, %48 : vector<2x128xf32>
    %50 = arith.truncf %49 : vector<2x128xf32> to vector<2x128xbf16>
    %c0_25 = arith.constant 0 : index
    %c0_26 = arith.constant 0 : index
    %51 = vector.load %arg8[%c0_25, %c0_26] : memref<128x128xbf16, #tpu.memory_space<vmem>>, vector<128x128xbf16>
    %cst_27 = arith.constant dense<0.000000e+00> : vector<2x128xf32>
    %52 = tpu.matmul %50, %51, %cst_27 {dimension_numbers = #tpu.dot_dimension_numbers<[1], [0], [0], [1], [0, 0, 1, 1], [], []>} : vector<2x128xbf16>, vector<128x128xbf16>, vector<2x128xf32> -> vector<2x128xf32>
    %c0_28 = arith.constant 0 : index
    %c0_29 = arith.constant 0 : index
    %53 = vector.load %arg9[%c0_28, %c0_29] : memref<1x128xf32, #tpu.memory_space<vmem>>, vector<1x128xf32>
    %54 = vector.broadcast %53 : vector<1x128xf32> to vector<2x128xf32>
    %55 = arith.addf %52, %54 : vector<2x128xf32>
    %c0_30 = arith.constant 0 : index
    %c0_31 = arith.constant 0 : index
    %56 = vector.load %arg10[%c0_30, %c0_31] : memref<1x128xf32, #tpu.memory_space<vmem>>, vector<1x128xf32>
    %c0_32 = arith.constant 0 : index
    %c0_33 = arith.constant 0 : index
    %57 = vector.load %arg11[%c0_32, %c0_33] : memref<1x128xf32, #tpu.memory_space<vmem>>, vector<1x128xf32>
    %cst_34 = arith.constant dense<0.000000e+00> : vector<128xf32>
    %58 = vector.multi_reduction <add>, %55, %cst_34 [0] : vector<2x128xf32> to vector<128xf32>
    %59 = vector.shape_cast %58 : vector<128xf32> to vector<1x128xf32>
    %cst_35 = arith.constant 2.000000e+00 : f32
    %60 = vector.broadcast %cst_35 : f32 to vector<1x128xf32>
    %61 = arith.divf %59, %60 : vector<1x128xf32>
    %62 = vector.broadcast %61 : vector<1x128xf32> to vector<2x128xf32>
    %63 = arith.subf %55, %62 : vector<2x128xf32>
    %64 = arith.mulf %63, %63 : vector<2x128xf32>
    %cst_36 = arith.constant dense<0.000000e+00> : vector<128xf32>
    %65 = vector.multi_reduction <add>, %64, %cst_36 [0] : vector<2x128xf32> to vector<128xf32>
    %66 = vector.shape_cast %65 : vector<128xf32> to vector<1x128xf32>
    %cst_37 = arith.constant 2.000000e+00 : f32
    %67 = vector.broadcast %cst_37 : f32 to vector<1x128xf32>
    %68 = arith.divf %66, %67 : vector<1x128xf32>
    %cst_38 = arith.constant 9.99999974E-6 : f32
    %69 = vector.broadcast %cst_38 : f32 to vector<1x128xf32>
    %70 = arith.addf %68, %69 : vector<1x128xf32>
    %71 = math.rsqrt %70 : vector<1x128xf32>
    %72 = vector.broadcast %71 : vector<1x128xf32> to vector<2x128xf32>
    %73 = arith.mulf %63, %72 : vector<2x128xf32>
    %74 = vector.broadcast %56 : vector<1x128xf32> to vector<2x128xf32>
    %75 = arith.mulf %73, %74 : vector<2x128xf32>
    %76 = vector.broadcast %57 : vector<1x128xf32> to vector<2x128xf32>
    %77 = arith.addf %75, %76 : vector<2x128xf32>
    %cst_39 = arith.constant 0.000000e+00 : f32
    %78 = vector.broadcast %cst_39 : f32 to vector<2x128xf32>
    %79 = arith.maximumf %77, %78 : vector<2x128xf32>
    %80 = arith.truncf %79 : vector<2x128xf32> to vector<2x128xbf16>
    %c0_40 = arith.constant 0 : index
    %c0_41 = arith.constant 0 : index
    %81 = vector.load %arg12[%c0_40, %c0_41] : memref<128x2xbf16, #tpu.memory_space<vmem>>, vector<128x2xbf16>
    %cst_42 = arith.constant dense<0.000000e+00> : vector<2x2xf32>
    %82 = tpu.matmul %80, %81, %cst_42 {dimension_numbers = #tpu.dot_dimension_numbers<[1], [0], [0], [1], [0, 0, 1, 1], [], []>} : vector<2x128xbf16>, vector<128x2xbf16>, vector<2x2xf32> -> vector<2x2xf32>
    %c0_43 = arith.constant 0 : index
    %c0_44 = arith.constant 0 : index
    %83 = vector.load %arg13[%c0_43, %c0_44] : memref<1x2xf32, #tpu.memory_space<vmem>>, vector<1x2xf32>
    %84 = vector.broadcast %83 : vector<1x2xf32> to vector<2x2xf32>
    %85 = arith.addf %82, %84 : vector<2x2xf32>
    %c0_45 = arith.constant 0 : index
    %c0_46 = arith.constant 0 : index
    %86 = vector.load %arg14[%c0_45, %c0_46] : memref<2x2xf32, #tpu.memory_space<vmem>>, vector<2x2xf32>
    tpu.vector_store %arg14[%c0_45, %c0_46], %85 {strides = array<i32>} : memref<2x2xf32, #tpu.memory_space<vmem>>, vector<2x2xf32>,
    return
  }
}

module attributes {stable_mosaic.version = 11 : i64} {
  func.func @_conv_stack_kernel(%arg0: i32, %arg1: memref<22xi32, #tpu.memory_space<smem>>, %arg2: memref<22xi32, #tpu.memory_space<smem>>, %arg3: memref<10x128xf32, #tpu.memory_space<vmem>>, %arg4: memref<22x128xf32, #tpu.memory_space<vmem>>, %arg5: memref<1x22xi32, #tpu.memory_space<vmem>>, %arg6: memref<22x1xf32, #tpu.memory_space<vmem>>, %arg7: memref<1x384x128xbf16, #tpu.memory_space<vmem>>, %arg8: memref<1x1x128xf32, #tpu.memory_space<vmem>>, %arg9: memref<1x1x128xf32, #tpu.memory_space<vmem>>, %arg10: memref<1x128x128xbf16, #tpu.memory_space<vmem>>, %arg11: memref<1x1x128xf32, #tpu.memory_space<vmem>>, %arg12: memref<1x1x128xf32, #tpu.memory_space<vmem>>, %arg13: memref<1x512x128xbf16, #tpu.memory_space<vmem>>, %arg14: memref<1x1x128xf32, #tpu.memory_space<vmem>>, %arg15: memref<1x1x128xf32, #tpu.memory_space<vmem>>, %arg16: memref<1x128x128xbf16, #tpu.memory_space<vmem>>, %arg17: memref<1x1x128xf32, #tpu.memory_space<vmem>>, %arg18: memref<1x1x128xf32, #tpu.memory_space<vmem>>, %arg19: memref<10x128xbf16, #tpu.memory_space<vmem>>, %arg20: memref<22x128xbf16, #tpu.memory_space<vmem>>, %arg21: memref<10x128xf32, #tpu.memory_space<vmem>>, %arg22: memref<22x128xf32, #tpu.memory_space<vmem>>, %arg23: memref<22x128xf32, #tpu.memory_space<vmem>>, %arg24: memref<22x128xf32, #tpu.memory_space<vmem>>, %arg25: memref<10x128xf32, #tpu.memory_space<vmem>>) attributes {dimension_semantics = [#tpu.dimension_semantics<arbitrary>], iteration_bounds = array<i64: 2>, scalar_prefetch = 2 : i64, scratch_operands = 5 : i64, tpu.core_type = #tpu.core_type<tc>, window_params = [{pipeline_mode = #tpu.pipeline_mode<synchronous>, transform_indices = @transform_0, window_bounds = array<i64: 10, 128>}, {pipeline_mode = #tpu.pipeline_mode<synchronous>, transform_indices = @transform_1, window_bounds = array<i64: 22, 128>}, {pipeline_mode = #tpu.pipeline_mode<synchronous>, transform_indices = @transform_2, window_bounds = array<i64: 1, 22>}, {pipeline_mode = #tpu.pipeline_mode<synchronous>, transform_indices = @transform_3, window_bounds = array<i64: 22, 1>}, {transform_indices = @transform_4, window_bounds = array<i64: 1, 384, 128>}, {transform_indices = @transform_5, window_bounds = array<i64: 1, 1, 128>}, {transform_indices = @transform_6, window_bounds = array<i64: 1, 1, 128>}, {transform_indices = @transform_7, window_bounds = array<i64: 1, 128, 128>}, {transform_indices = @transform_8, window_bounds = array<i64: 1, 1, 128>}, {transform_indices = @transform_9, window_bounds = array<i64: 1, 1, 128>}, {transform_indices = @transform_10, window_bounds = array<i64: 1, 512, 128>}, {transform_indices = @transform_11, window_bounds = array<i64: 1, 1, 128>}, {transform_indices = @transform_12, window_bounds = array<i64: 1, 1, 128>}, {transform_indices = @transform_13, window_bounds = array<i64: 1, 128, 128>}, {transform_indices = @transform_14, window_bounds = array<i64: 1, 1, 128>}, {transform_indices = @transform_15, window_bounds = array<i64: 1, 1, 128>}, {pipeline_mode = #tpu.pipeline_mode<synchronous>, transform_indices = @transform_16, window_bounds = array<i64: 10, 128>}, {pipeline_mode = #tpu.pipeline_mode<synchronous>, transform_indices = @transform_17, window_bounds = array<i64: 22, 128>}]} {
    %c0 = arith.constant 0 : index
    %c0_0 = arith.constant 0 : index
    %0 = vector.load %arg5[%c0, %c0_0] : memref<1x22xi32, #tpu.memory_space<vmem>>, vector<1x22xi32>
    %1 = tpu.iota {dimensions = array<i32: 0>} : vector<10x22xi32>
    %2 = vector.broadcast %0 : vector<1x22xi32> to vector<10x22xi32>
    %3 = arith.cmpi eq, %1, %2 : vector<10x22xi32>
    %4 = arith.extui %3 : vector<10x22xi1> to vector<10x22xi32>
    %5 = arith.sitofp %4 : vector<10x22xi32> to vector<10x22xf32>
    %6 = arith.truncf %5 : vector<10x22xf32> to vector<10x22xbf16>
    %c0_i32 = arith.constant 0 : i32
    %7 = arith.cmpi eq, %arg0, %c0_i32 : i32
    %8 = arith.extui %7 : i1 to i32
    %c0_i32_1 = arith.constant 0 : i32
    %9 = arith.cmpi ne, %8, %c0_i32_1 : i32
    scf.if %9 {
      %c0_243 = arith.constant 0 : index
      %c0_244 = arith.constant 0 : index
      %344 = vector.load %arg3[%c0_243, %c0_244] : memref<10x128xf32, #tpu.memory_space<vmem>>, vector<10x128xf32>
      %c0_245 = arith.constant 0 : index
      %c0_246 = arith.constant 0 : index
      %345 = vector.load %arg21[%c0_245, %c0_246] : memref<10x128xf32, #tpu.memory_space<vmem>>, vector<10x128xf32>
      tpu.vector_store %arg21[%c0_245, %c0_246], %344 {strides = array<i32>} : memref<10x128xf32, #tpu.memory_space<vmem>>, vector<10x128xf32>,
      %c0_247 = arith.constant 0 : index
      %c0_248 = arith.constant 0 : index
      %346 = vector.load %arg4[%c0_247, %c0_248] : memref<22x128xf32, #tpu.memory_space<vmem>>, vector<22x128xf32>
      %347 = arith.truncf %346 : vector<22x128xf32> to vector<22x128xbf16>
      %cst_249 = arith.constant dense<0.000000e+00> : vector<10x128xf32>
      %348 = tpu.matmul %6, %347, %cst_249 {dimension_numbers = #tpu.dot_dimension_numbers<[1], [0], [0], [1], [0, 0, 1, 1], [], []>} : vector<10x22xbf16>, vector<22x128xbf16>, vector<10x128xf32> -> vector<10x128xf32>
      %c0_250 = arith.constant 0 : index
      %c0_251 = arith.constant 0 : index
      %349 = vector.load %arg25[%c0_250, %c0_251] : memref<10x128xf32, #tpu.memory_space<vmem>>, vector<10x128xf32>
      tpu.vector_store %arg25[%c0_250, %c0_251], %348 {strides = array<i32>} : memref<10x128xf32, #tpu.memory_space<vmem>>, vector<10x128xf32>,
      %c0_252 = arith.constant 0 : index
      %350 = memref.load %arg1[%c0_252] : memref<22xi32, #tpu.memory_space<smem>>
      %351 = arith.index_cast %350 : i32 to index
      %c0_253 = arith.constant 0 : index
      %352 = vector.load %arg25[%351, %c0_253] : memref<10x128xf32, #tpu.memory_space<vmem>>, vector<1x128xf32>
      %c0_254 = arith.constant 0 : index
      %c0_255 = arith.constant 0 : index
      %353 = vector.load %arg22[%c0_254, %c0_255] : memref<22x128xf32, #tpu.memory_space<vmem>>, vector<1x128xf32>
      tpu.vector_store %arg22[%c0_254, %c0_255], %352 {strides = array<i32>} : memref<22x128xf32, #tpu.memory_space<vmem>>, vector<1x128xf32>,
      %c1_256 = arith.constant 1 : index
      %354 = memref.load %arg1[%c1_256] : memref<22xi32, #tpu.memory_space<smem>>
      %355 = arith.index_cast %354 : i32 to index
      %c0_257 = arith.constant 0 : index
      %356 = vector.load %arg25[%355, %c0_257] : memref<10x128xf32, #tpu.memory_space<vmem>>, vector<1x128xf32>
      %c1_258 = arith.constant 1 : index
      %c0_259 = arith.constant 0 : index
      %357 = vector.load %arg22[%c1_258, %c0_259] : memref<22x128xf32, #tpu.memory_space<vmem>>, vector<1x128xf32>
      tpu.vector_store %arg22[%c1_258, %c0_259], %356 {strides = array<i32>} : memref<22x128xf32, #tpu.memory_space<vmem>>, vector<1x128xf32>,
      %c2_260 = arith.constant 2 : index
      %358 = memref.load %arg1[%c2_260] : memref<22xi32, #tpu.memory_space<smem>>
      %359 = arith.index_cast %358 : i32 to index
      %c0_261 = arith.constant 0 : index
      %360 = vector.load %arg25[%359, %c0_261] : memref<10x128xf32, #tpu.memory_space<vmem>>, vector<1x128xf32>
      %c2_262 = arith.constant 2 : index
      %c0_263 = arith.constant 0 : index
      %361 = vector.load %arg22[%c2_262, %c0_263] : memref<22x128xf32, #tpu.memory_space<vmem>>, vector<1x128xf32>
      tpu.vector_store %arg22[%c2_262, %c0_263], %360 {strides = array<i32>} : memref<22x128xf32, #tpu.memory_space<vmem>>, vector<1x128xf32>,
      %c3_264 = arith.constant 3 : index
      %362 = memref.load %arg1[%c3_264] : memref<22xi32, #tpu.memory_space<smem>>
      %363 = arith.index_cast %362 : i32 to index
      %c0_265 = arith.constant 0 : index
      %364 = vector.load %arg25[%363, %c0_265] : memref<10x128xf32, #tpu.memory_space<vmem>>, vector<1x128xf32>
      %c3_266 = arith.constant 3 : index
      %c0_267 = arith.constant 0 : index
      %365 = vector.load %arg22[%c3_266, %c0_267] : memref<22x128xf32, #tpu.memory_space<vmem>>, vector<1x128xf32>
      tpu.vector_store %arg22[%c3_266, %c0_267], %364 {strides = array<i32>} : memref<22x128xf32, #tpu.memory_space<vmem>>, vector<1x128xf32>,
      %c4_268 = arith.constant 4 : index
      %366 = memref.load %arg1[%c4_268] : memref<22xi32, #tpu.memory_space<smem>>
      %367 = arith.index_cast %366 : i32 to index
      %c0_269 = arith.constant 0 : index
      %368 = vector.load %arg25[%367, %c0_269] : memref<10x128xf32, #tpu.memory_space<vmem>>, vector<1x128xf32>
      %c4_270 = arith.constant 4 : index
      %c0_271 = arith.constant 0 : index
      %369 = vector.load %arg22[%c4_270, %c0_271] : memref<22x128xf32, #tpu.memory_space<vmem>>, vector<1x128xf32>
      tpu.vector_store %arg22[%c4_270, %c0_271], %368 {strides = array<i32>} : memref<22x128xf32, #tpu.memory_space<vmem>>, vector<1x128xf32>,
      %c5_272 = arith.constant 5 : index
      %370 = memref.load %arg1[%c5_272] : memref<22xi32, #tpu.memory_space<smem>>
      %371 = arith.index_cast %370 : i32 to index
      %c0_273 = arith.constant 0 : index
      %372 = vector.load %arg25[%371, %c0_273] : memref<10x128xf32, #tpu.memory_space<vmem>>, vector<1x128xf32>
      %c5_274 = arith.constant 5 : index
      %c0_275 = arith.constant 0 : index
      %373 = vector.load %arg22[%c5_274, %c0_275] : memref<22x128xf32, #tpu.memory_space<vmem>>, vector<1x128xf32>
      tpu.vector_store %arg22[%c5_274, %c0_275], %372 {strides = array<i32>} : memref<22x128xf32, #tpu.memory_space<vmem>>, vector<1x128xf32>,
      %c6_276 = arith.constant 6 : index
      %374 = memref.load %arg1[%c6_276] : memref<22xi32, #tpu.memory_space<smem>>
      %375 = arith.index_cast %374 : i32 to index
      %c0_277 = arith.constant 0 : index
      %376 = vector.load %arg25[%375, %c0_277] : memref<10x128xf32, #tpu.memory_space<vmem>>, vector<1x128xf32>
      %c6_278 = arith.constant 6 : index
      %c0_279 = arith.constant 0 : index
      %377 = vector.load %arg22[%c6_278, %c0_279] : memref<22x128xf32, #tpu.memory_space<vmem>>, vector<1x128xf32>
      tpu.vector_store %arg22[%c6_278, %c0_279], %376 {strides = array<i32>} : memref<22x128xf32, #tpu.memory_space<vmem>>, vector<1x128xf32>,
      %c7_280 = arith.constant 7 : index
      %378 = memref.load %arg1[%c7_280] : memref<22xi32, #tpu.memory_space<smem>>
      %379 = arith.index_cast %378 : i32 to index
      %c0_281 = arith.constant 0 : index
      %380 = vector.load %arg25[%379, %c0_281] : memref<10x128xf32, #tpu.memory_space<vmem>>, vector<1x128xf32>
      %c7_282 = arith.constant 7 : index
      %c0_283 = arith.constant 0 : index
      %381 = vector.load %arg22[%c7_282, %c0_283] : memref<22x128xf32, #tpu.memory_space<vmem>>, vector<1x128xf32>
      tpu.vector_store %arg22[%c7_282, %c0_283], %380 {strides = array<i32>} : memref<22x128xf32, #tpu.memory_space<vmem>>, vector<1x128xf32>,
      %c8_284 = arith.constant 8 : index
      %382 = memref.load %arg1[%c8_284] : memref<22xi32, #tpu.memory_space<smem>>
      %383 = arith.index_cast %382 : i32 to index
      %c0_285 = arith.constant 0 : index
      %384 = vector.load %arg25[%383, %c0_285] : memref<10x128xf32, #tpu.memory_space<vmem>>, vector<1x128xf32>
      %c8_286 = arith.constant 8 : index
      %c0_287 = arith.constant 0 : index
      %385 = vector.load %arg22[%c8_286, %c0_287] : memref<22x128xf32, #tpu.memory_space<vmem>>, vector<1x128xf32>
      tpu.vector_store %arg22[%c8_286, %c0_287], %384 {strides = array<i32>} : memref<22x128xf32, #tpu.memory_space<vmem>>, vector<1x128xf32>,
      %c9_288 = arith.constant 9 : index
      %386 = memref.load %arg1[%c9_288] : memref<22xi32, #tpu.memory_space<smem>>
      %387 = arith.index_cast %386 : i32 to index
      %c0_289 = arith.constant 0 : index
      %388 = vector.load %arg25[%387, %c0_289] : memref<10x128xf32, #tpu.memory_space<vmem>>, vector<1x128xf32>
      %c9_290 = arith.constant 9 : index
      %c0_291 = arith.constant 0 : index
      %389 = vector.load %arg22[%c9_290, %c0_291] : memref<22x128xf32, #tpu.memory_space<vmem>>, vector<1x128xf32>
      tpu.vector_store %arg22[%c9_290, %c0_291], %388 {strides = array<i32>} : memref<22x128xf32, #tpu.memory_space<vmem>>, vector<1x128xf32>,
      %c10_292 = arith.constant 10 : index
      %390 = memref.load %arg1[%c10_292] : memref<22xi32, #tpu.memory_space<smem>>
      %391 = arith.index_cast %390 : i32 to index
      %c0_293 = arith.constant 0 : index
      %392 = vector.load %arg25[%391, %c0_293] : memref<10x128xf32, #tpu.memory_space<vmem>>, vector<1x128xf32>
      %c10_294 = arith.constant 10 : index
      %c0_295 = arith.constant 0 : index
      %393 = vector.load %arg22[%c10_294, %c0_295] : memref<22x128xf32, #tpu.memory_space<vmem>>, vector<1x128xf32>
      tpu.vector_store %arg22[%c10_294, %c0_295], %392 {strides = array<i32>} : memref<22x128xf32, #tpu.memory_space<vmem>>, vector<1x128xf32>,
      %c11_296 = arith.constant 11 : index
      %394 = memref.load %arg1[%c11_296] : memref<22xi32, #tpu.memory_space<smem>>
      %395 = arith.index_cast %394 : i32 to index
      %c0_297 = arith.constant 0 : index
      %396 = vector.load %arg25[%395, %c0_297] : memref<10x128xf32, #tpu.memory_space<vmem>>, vector<1x128xf32>
      %c11_298 = arith.constant 11 : index
      %c0_299 = arith.constant 0 : index
      %397 = vector.load %arg22[%c11_298, %c0_299] : memref<22x128xf32, #tpu.memory_space<vmem>>, vector<1x128xf32>
      tpu.vector_store %arg22[%c11_298, %c0_299], %396 {strides = array<i32>} : memref<22x128xf32, #tpu.memory_space<vmem>>, vector<1x128xf32>,
      %c12_300 = arith.constant 12 : index
      %398 = memref.load %arg1[%c12_300] : memref<22xi32, #tpu.memory_space<smem>>
      %399 = arith.index_cast %398 : i32 to index
      %c0_301 = arith.constant 0 : index
      %400 = vector.load %arg25[%399, %c0_301] : memref<10x128xf32, #tpu.memory_space<vmem>>, vector<1x128xf32>
      %c12_302 = arith.constant 12 : index
      %c0_303 = arith.constant 0 : index
      %401 = vector.load %arg22[%c12_302, %c0_303] : memref<22x128xf32, #tpu.memory_space<vmem>>, vector<1x128xf32>
      tpu.vector_store %arg22[%c12_302, %c0_303], %400 {strides = array<i32>} : memref<22x128xf32, #tpu.memory_space<vmem>>, vector<1x128xf32>,
      %c13_304 = arith.constant 13 : index
      %402 = memref.load %arg1[%c13_304] : memref<22xi32, #tpu.memory_space<smem>>
      %403 = arith.index_cast %402 : i32 to index
      %c0_305 = arith.constant 0 : index
      %404 = vector.load %arg25[%403, %c0_305] : memref<10x128xf32, #tpu.memory_space<vmem>>, vector<1x128xf32>
      %c13_306 = arith.constant 13 : index
      %c0_307 = arith.constant 0 : index
      %405 = vector.load %arg22[%c13_306, %c0_307] : memref<22x128xf32, #tpu.memory_space<vmem>>, vector<1x128xf32>
      tpu.vector_store %arg22[%c13_306, %c0_307], %404 {strides = array<i32>} : memref<22x128xf32, #tpu.memory_space<vmem>>, vector<1x128xf32>,
      %c14_308 = arith.constant 14 : index
      %406 = memref.load %arg1[%c14_308] : memref<22xi32, #tpu.memory_space<smem>>
      %407 = arith.index_cast %406 : i32 to index
      %c0_309 = arith.constant 0 : index
      %408 = vector.load %arg25[%407, %c0_309] : memref<10x128xf32, #tpu.memory_space<vmem>>, vector<1x128xf32>
      %c14_310 = arith.constant 14 : index
      %c0_311 = arith.constant 0 : index
      %409 = vector.load %arg22[%c14_310, %c0_311] : memref<22x128xf32, #tpu.memory_space<vmem>>, vector<1x128xf32>
      tpu.vector_store %arg22[%c14_310, %c0_311], %408 {strides = array<i32>} : memref<22x128xf32, #tpu.memory_space<vmem>>, vector<1x128xf32>,
      %c15_312 = arith.constant 15 : index
      %410 = memref.load %arg1[%c15_312] : memref<22xi32, #tpu.memory_space<smem>>
      %411 = arith.index_cast %410 : i32 to index
      %c0_313 = arith.constant 0 : index
      %412 = vector.load %arg25[%411, %c0_313] : memref<10x128xf32, #tpu.memory_space<vmem>>, vector<1x128xf32>
      %c15_314 = arith.constant 15 : index
      %c0_315 = arith.constant 0 : index
      %413 = vector.load %arg22[%c15_314, %c0_315] : memref<22x128xf32, #tpu.memory_space<vmem>>, vector<1x128xf32>
      tpu.vector_store %arg22[%c15_314, %c0_315], %412 {strides = array<i32>} : memref<22x128xf32, #tpu.memory_space<vmem>>, vector<1x128xf32>,
      %c16_316 = arith.constant 16 : index
      %414 = memref.load %arg1[%c16_316] : memref<22xi32, #tpu.memory_space<smem>>
      %415 = arith.index_cast %414 : i32 to index
      %c0_317 = arith.constant 0 : index
      %416 = vector.load %arg25[%415, %c0_317] : memref<10x128xf32, #tpu.memory_space<vmem>>, vector<1x128xf32>
      %c16_318 = arith.constant 16 : index
      %c0_319 = arith.constant 0 : index
      %417 = vector.load %arg22[%c16_318, %c0_319] : memref<22x128xf32, #tpu.memory_space<vmem>>, vector<1x128xf32>
      tpu.vector_store %arg22[%c16_318, %c0_319], %416 {strides = array<i32>} : memref<22x128xf32, #tpu.memory_space<vmem>>, vector<1x128xf32>,
      %c17_320 = arith.constant 17 : index
      %418 = memref.load %arg1[%c17_320] : memref<22xi32, #tpu.memory_space<smem>>
      %419 = arith.index_cast %418 : i32 to index
      %c0_321 = arith.constant 0 : index
      %420 = vector.load %arg25[%419, %c0_321] : memref<10x128xf32, #tpu.memory_space<vmem>>, vector<1x128xf32>
      %c17_322 = arith.constant 17 : index
      %c0_323 = arith.constant 0 : index
      %421 = vector.load %arg22[%c17_322, %c0_323] : memref<22x128xf32, #tpu.memory_space<vmem>>, vector<1x128xf32>
      tpu.vector_store %arg22[%c17_322, %c0_323], %420 {strides = array<i32>} : memref<22x128xf32, #tpu.memory_space<vmem>>, vector<1x128xf32>,
      %c18_324 = arith.constant 18 : index
      %422 = memref.load %arg1[%c18_324] : memref<22xi32, #tpu.memory_space<smem>>
      %423 = arith.index_cast %422 : i32 to index
      %c0_325 = arith.constant 0 : index
      %424 = vector.load %arg25[%423, %c0_325] : memref<10x128xf32, #tpu.memory_space<vmem>>, vector<1x128xf32>
      %c18_326 = arith.constant 18 : index
      %c0_327 = arith.constant 0 : index
      %425 = vector.load %arg22[%c18_326, %c0_327] : memref<22x128xf32, #tpu.memory_space<vmem>>, vector<1x128xf32>
      tpu.vector_store %arg22[%c18_326, %c0_327], %424 {strides = array<i32>} : memref<22x128xf32, #tpu.memory_space<vmem>>, vector<1x128xf32>,
      %c19_328 = arith.constant 19 : index
      %426 = memref.load %arg1[%c19_328] : memref<22xi32, #tpu.memory_space<smem>>
      %427 = arith.index_cast %426 : i32 to index
      %c0_329 = arith.constant 0 : index
      %428 = vector.load %arg25[%427, %c0_329] : memref<10x128xf32, #tpu.memory_space<vmem>>, vector<1x128xf32>
      %c19_330 = arith.constant 19 : index
      %c0_331 = arith.constant 0 : index
      %429 = vector.load %arg22[%c19_330, %c0_331] : memref<22x128xf32, #tpu.memory_space<vmem>>, vector<1x128xf32>
      tpu.vector_store %arg22[%c19_330, %c0_331], %428 {strides = array<i32>} : memref<22x128xf32, #tpu.memory_space<vmem>>, vector<1x128xf32>,
      %c20_332 = arith.constant 20 : index
      %430 = memref.load %arg1[%c20_332] : memref<22xi32, #tpu.memory_space<smem>>
      %431 = arith.index_cast %430 : i32 to index
      %c0_333 = arith.constant 0 : index
      %432 = vector.load %arg25[%431, %c0_333] : memref<10x128xf32, #tpu.memory_space<vmem>>, vector<1x128xf32>
      %c20_334 = arith.constant 20 : index
      %c0_335 = arith.constant 0 : index
      %433 = vector.load %arg22[%c20_334, %c0_335] : memref<22x128xf32, #tpu.memory_space<vmem>>, vector<1x128xf32>
      tpu.vector_store %arg22[%c20_334, %c0_335], %432 {strides = array<i32>} : memref<22x128xf32, #tpu.memory_space<vmem>>, vector<1x128xf32>,
      %c21_336 = arith.constant 21 : index
      %434 = memref.load %arg1[%c21_336] : memref<22xi32, #tpu.memory_space<smem>>
      %435 = arith.index_cast %434 : i32 to index
      %c0_337 = arith.constant 0 : index
      %436 = vector.load %arg25[%435, %c0_337] : memref<10x128xf32, #tpu.memory_space<vmem>>, vector<1x128xf32>
      %c21_338 = arith.constant 21 : index
      %c0_339 = arith.constant 0 : index
      %437 = vector.load %arg22[%c21_338, %c0_339] : memref<22x128xf32, #tpu.memory_space<vmem>>, vector<1x128xf32>
      tpu.vector_store %arg22[%c21_338, %c0_339], %436 {strides = array<i32>} : memref<22x128xf32, #tpu.memory_space<vmem>>, vector<1x128xf32>,
    } else {
    }
    %c0_2 = arith.constant 0 : index
    %10 = memref.load %arg1[%c0_2] : memref<22xi32, #tpu.memory_space<smem>>
    %11 = arith.index_cast %10 : i32 to index
    %c0_3 = arith.constant 0 : index
    %12 = vector.load %arg21[%11, %c0_3] : memref<10x128xf32, #tpu.memory_space<vmem>>, vector<1x128xf32>
    %c0_4 = arith.constant 0 : index
    %c0_5 = arith.constant 0 : index
    %13 = vector.load %arg23[%c0_4, %c0_5] : memref<22x128xf32, #tpu.memory_space<vmem>>, vector<1x128xf32>
    tpu.vector_store %arg23[%c0_4, %c0_5], %12 {strides = array<i32>} : memref<22x128xf32, #tpu.memory_space<vmem>>, vector<1x128xf32>,
    %c0_6 = arith.constant 0 : index
    %14 = memref.load %arg2[%c0_6] : memref<22xi32, #tpu.memory_space<smem>>
    %15 = arith.index_cast %14 : i32 to index
    %c0_7 = arith.constant 0 : index
    %16 = vector.load %arg21[%15, %c0_7] : memref<10x128xf32, #tpu.memory_space<vmem>>, vector<1x128xf32>
    %c0_8 = arith.constant 0 : index
    %c0_9 = arith.constant 0 : index
    %17 = vector.load %arg24[%c0_8, %c0_9] : memref<22x128xf32, #tpu.memory_space<vmem>>, vector<1x128xf32>
    tpu.vector_store %arg24[%c0_8, %c0_9], %16 {strides = array<i32>} : memref<22x128xf32, #tpu.memory_space<vmem>>, vector<1x128xf32>,
    %c1 = arith.constant 1 : index
    %18 = memref.load %arg1[%c1] : memref<22xi32, #tpu.memory_space<smem>>
    %19 = arith.index_cast %18 : i32 to index
    %c0_10 = arith.constant 0 : index
    %20 = vector.load %arg21[%19, %c0_10] : memref<10x128xf32, #tpu.memory_space<vmem>>, vector<1x128xf32>
    %c1_11 = arith.constant 1 : index
    %c0_12 = arith.constant 0 : index
    %21 = vector.load %arg23[%c1_11, %c0_12] : memref<22x128xf32, #tpu.memory_space<vmem>>, vector<1x128xf32>
    tpu.vector_store %arg23[%c1_11, %c0_12], %20 {strides = array<i32>} : memref<22x128xf32, #tpu.memory_space<vmem>>, vector<1x128xf32>,
    %c1_13 = arith.constant 1 : index
    %22 = memref.load %arg2[%c1_13] : memref<22xi32, #tpu.memory_space<smem>>
    %23 = arith.index_cast %22 : i32 to index
    %c0_14 = arith.constant 0 : index
    %24 = vector.load %arg21[%23, %c0_14] : memref<10x128xf32, #tpu.memory_space<vmem>>, vector<1x128xf32>
    %c1_15 = arith.constant 1 : index
    %c0_16 = arith.constant 0 : index
    %25 = vector.load %arg24[%c1_15, %c0_16] : memref<22x128xf32, #tpu.memory_space<vmem>>, vector<1x128xf32>
    tpu.vector_store %arg24[%c1_15, %c0_16], %24 {strides = array<i32>} : memref<22x128xf32, #tpu.memory_space<vmem>>, vector<1x128xf32>,
    %c2 = arith.constant 2 : index
    %26 = memref.load %arg1[%c2] : memref<22xi32, #tpu.memory_space<smem>>
    %27 = arith.index_cast %26 : i32 to index
    %c0_17 = arith.constant 0 : index
    %28 = vector.load %arg21[%27, %c0_17] : memref<10x128xf32, #tpu.memory_space<vmem>>, vector<1x128xf32>
    %c2_18 = arith.constant 2 : index
    %c0_19 = arith.constant 0 : index
    %29 = vector.load %arg23[%c2_18, %c0_19] : memref<22x128xf32, #tpu.memory_space<vmem>>, vector<1x128xf32>
    tpu.vector_store %arg23[%c2_18, %c0_19], %28 {strides = array<i32>} : memref<22x128xf32, #tpu.memory_space<vmem>>, vector<1x128xf32>,
    %c2_20 = arith.constant 2 : index
    %30 = memref.load %arg2[%c2_20] : memref<22xi32, #tpu.memory_space<smem>>
    %31 = arith.index_cast %30 : i32 to index
    %c0_21 = arith.constant 0 : index
    %32 = vector.load %arg21[%31, %c0_21] : memref<10x128xf32, #tpu.memory_space<vmem>>, vector<1x128xf32>
    %c2_22 = arith.constant 2 : index
    %c0_23 = arith.constant 0 : index
    %33 = vector.load %arg24[%c2_22, %c0_23] : memref<22x128xf32, #tpu.memory_space<vmem>>, vector<1x128xf32>
    tpu.vector_store %arg24[%c2_22, %c0_23], %32 {strides = array<i32>} : memref<22x128xf32, #tpu.memory_space<vmem>>, vector<1x128xf32>,
    %c3 = arith.constant 3 : index
    %34 = memref.load %arg1[%c3] : memref<22xi32, #tpu.memory_space<smem>>
    %35 = arith.index_cast %34 : i32 to index
    %c0_24 = arith.constant 0 : index
    %36 = vector.load %arg21[%35, %c0_24] : memref<10x128xf32, #tpu.memory_space<vmem>>, vector<1x128xf32>
    %c3_25 = arith.constant 3 : index
    %c0_26 = arith.constant 0 : index
    %37 = vector.load %arg23[%c3_25, %c0_26] : memref<22x128xf32, #tpu.memory_space<vmem>>, vector<1x128xf32>
    tpu.vector_store %arg23[%c3_25, %c0_26], %36 {strides = array<i32>} : memref<22x128xf32, #tpu.memory_space<vmem>>, vector<1x128xf32>,
    %c3_27 = arith.constant 3 : index
    %38 = memref.load %arg2[%c3_27] : memref<22xi32, #tpu.memory_space<smem>>
    %39 = arith.index_cast %38 : i32 to index
    %c0_28 = arith.constant 0 : index
    %40 = vector.load %arg21[%39, %c0_28] : memref<10x128xf32, #tpu.memory_space<vmem>>, vector<1x128xf32>
    %c3_29 = arith.constant 3 : index
    %c0_30 = arith.constant 0 : index
    %41 = vector.load %arg24[%c3_29, %c0_30] : memref<22x128xf32, #tpu.memory_space<vmem>>, vector<1x128xf32>
    tpu.vector_store %arg24[%c3_29, %c0_30], %40 {strides = array<i32>} : memref<22x128xf32, #tpu.memory_space<vmem>>, vector<1x128xf32>,
    %c4 = arith.constant 4 : index
    %42 = memref.load %arg1[%c4] : memref<22xi32, #tpu.memory_space<smem>>
    %43 = arith.index_cast %42 : i32 to index
    %c0_31 = arith.constant 0 : index
    %44 = vector.load %arg21[%43, %c0_31] : memref<10x128xf32, #tpu.memory_space<vmem>>, vector<1x128xf32>
    %c4_32 = arith.constant 4 : index
    %c0_33 = arith.constant 0 : index
    %45 = vector.load %arg23[%c4_32, %c0_33] : memref<22x128xf32, #tpu.memory_space<vmem>>, vector<1x128xf32>
    tpu.vector_store %arg23[%c4_32, %c0_33], %44 {strides = array<i32>} : memref<22x128xf32, #tpu.memory_space<vmem>>, vector<1x128xf32>,
    %c4_34 = arith.constant 4 : index
    %46 = memref.load %arg2[%c4_34] : memref<22xi32, #tpu.memory_space<smem>>
    %47 = arith.index_cast %46 : i32 to index
    %c0_35 = arith.constant 0 : index
    %48 = vector.load %arg21[%47, %c0_35] : memref<10x128xf32, #tpu.memory_space<vmem>>, vector<1x128xf32>
    %c4_36 = arith.constant 4 : index
    %c0_37 = arith.constant 0 : index
    %49 = vector.load %arg24[%c4_36, %c0_37] : memref<22x128xf32, #tpu.memory_space<vmem>>, vector<1x128xf32>
    tpu.vector_store %arg24[%c4_36, %c0_37], %48 {strides = array<i32>} : memref<22x128xf32, #tpu.memory_space<vmem>>, vector<1x128xf32>,
    %c5 = arith.constant 5 : index
    %50 = memref.load %arg1[%c5] : memref<22xi32, #tpu.memory_space<smem>>
    %51 = arith.index_cast %50 : i32 to index
    %c0_38 = arith.constant 0 : index
    %52 = vector.load %arg21[%51, %c0_38] : memref<10x128xf32, #tpu.memory_space<vmem>>, vector<1x128xf32>
    %c5_39 = arith.constant 5 : index
    %c0_40 = arith.constant 0 : index
    %53 = vector.load %arg23[%c5_39, %c0_40] : memref<22x128xf32, #tpu.memory_space<vmem>>, vector<1x128xf32>
    tpu.vector_store %arg23[%c5_39, %c0_40], %52 {strides = array<i32>} : memref<22x128xf32, #tpu.memory_space<vmem>>, vector<1x128xf32>,
    %c5_41 = arith.constant 5 : index
    %54 = memref.load %arg2[%c5_41] : memref<22xi32, #tpu.memory_space<smem>>
    %55 = arith.index_cast %54 : i32 to index
    %c0_42 = arith.constant 0 : index
    %56 = vector.load %arg21[%55, %c0_42] : memref<10x128xf32, #tpu.memory_space<vmem>>, vector<1x128xf32>
    %c5_43 = arith.constant 5 : index
    %c0_44 = arith.constant 0 : index
    %57 = vector.load %arg24[%c5_43, %c0_44] : memref<22x128xf32, #tpu.memory_space<vmem>>, vector<1x128xf32>
    tpu.vector_store %arg24[%c5_43, %c0_44], %56 {strides = array<i32>} : memref<22x128xf32, #tpu.memory_space<vmem>>, vector<1x128xf32>,
    %c6 = arith.constant 6 : index
    %58 = memref.load %arg1[%c6] : memref<22xi32, #tpu.memory_space<smem>>
    %59 = arith.index_cast %58 : i32 to index
    %c0_45 = arith.constant 0 : index
    %60 = vector.load %arg21[%59, %c0_45] : memref<10x128xf32, #tpu.memory_space<vmem>>, vector<1x128xf32>
    %c6_46 = arith.constant 6 : index
    %c0_47 = arith.constant 0 : index
    %61 = vector.load %arg23[%c6_46, %c0_47] : memref<22x128xf32, #tpu.memory_space<vmem>>, vector<1x128xf32>
    tpu.vector_store %arg23[%c6_46, %c0_47], %60 {strides = array<i32>} : memref<22x128xf32, #tpu.memory_space<vmem>>, vector<1x128xf32>,
    %c6_48 = arith.constant 6 : index
    %62 = memref.load %arg2[%c6_48] : memref<22xi32, #tpu.memory_space<smem>>
    %63 = arith.index_cast %62 : i32 to index
    %c0_49 = arith.constant 0 : index
    %64 = vector.load %arg21[%63, %c0_49] : memref<10x128xf32, #tpu.memory_space<vmem>>, vector<1x128xf32>
    %c6_50 = arith.constant 6 : index
    %c0_51 = arith.constant 0 : index
    %65 = vector.load %arg24[%c6_50, %c0_51] : memref<22x128xf32, #tpu.memory_space<vmem>>, vector<1x128xf32>
    tpu.vector_store %arg24[%c6_50, %c0_51], %64 {strides = array<i32>} : memref<22x128xf32, #tpu.memory_space<vmem>>, vector<1x128xf32>,
    %c7 = arith.constant 7 : index
    %66 = memref.load %arg1[%c7] : memref<22xi32, #tpu.memory_space<smem>>
    %67 = arith.index_cast %66 : i32 to index
    %c0_52 = arith.constant 0 : index
    %68 = vector.load %arg21[%67, %c0_52] : memref<10x128xf32, #tpu.memory_space<vmem>>, vector<1x128xf32>
    %c7_53 = arith.constant 7 : index
    %c0_54 = arith.constant 0 : index
    %69 = vector.load %arg23[%c7_53, %c0_54] : memref<22x128xf32, #tpu.memory_space<vmem>>, vector<1x128xf32>
    tpu.vector_store %arg23[%c7_53, %c0_54], %68 {strides = array<i32>} : memref<22x128xf32, #tpu.memory_space<vmem>>, vector<1x128xf32>,
    %c7_55 = arith.constant 7 : index
    %70 = memref.load %arg2[%c7_55] : memref<22xi32, #tpu.memory_space<smem>>
    %71 = arith.index_cast %70 : i32 to index
    %c0_56 = arith.constant 0 : index
    %72 = vector.load %arg21[%71, %c0_56] : memref<10x128xf32, #tpu.memory_space<vmem>>, vector<1x128xf32>
    %c7_57 = arith.constant 7 : index
    %c0_58 = arith.constant 0 : index
    %73 = vector.load %arg24[%c7_57, %c0_58] : memref<22x128xf32, #tpu.memory_space<vmem>>, vector<1x128xf32>
    tpu.vector_store %arg24[%c7_57, %c0_58], %72 {strides = array<i32>} : memref<22x128xf32, #tpu.memory_space<vmem>>, vector<1x128xf32>,
    %c8 = arith.constant 8 : index
    %74 = memref.load %arg1[%c8] : memref<22xi32, #tpu.memory_space<smem>>
    %75 = arith.index_cast %74 : i32 to index
    %c0_59 = arith.constant 0 : index
    %76 = vector.load %arg21[%75, %c0_59] : memref<10x128xf32, #tpu.memory_space<vmem>>, vector<1x128xf32>
    %c8_60 = arith.constant 8 : index
    %c0_61 = arith.constant 0 : index
    %77 = vector.load %arg23[%c8_60, %c0_61] : memref<22x128xf32, #tpu.memory_space<vmem>>, vector<1x128xf32>
    tpu.vector_store %arg23[%c8_60, %c0_61], %76 {strides = array<i32>} : memref<22x128xf32, #tpu.memory_space<vmem>>, vector<1x128xf32>,
    %c8_62 = arith.constant 8 : index
    %78 = memref.load %arg2[%c8_62] : memref<22xi32, #tpu.memory_space<smem>>
    %79 = arith.index_cast %78 : i32 to index
    %c0_63 = arith.constant 0 : index
    %80 = vector.load %arg21[%79, %c0_63] : memref<10x128xf32, #tpu.memory_space<vmem>>, vector<1x128xf32>
    %c8_64 = arith.constant 8 : index
    %c0_65 = arith.constant 0 : index
    %81 = vector.load %arg24[%c8_64, %c0_65] : memref<22x128xf32, #tpu.memory_space<vmem>>, vector<1x128xf32>
    tpu.vector_store %arg24[%c8_64, %c0_65], %80 {strides = array<i32>} : memref<22x128xf32, #tpu.memory_space<vmem>>, vector<1x128xf32>,
    %c9 = arith.constant 9 : index
    %82 = memref.load %arg1[%c9] : memref<22xi32, #tpu.memory_space<smem>>
    %83 = arith.index_cast %82 : i32 to index
    %c0_66 = arith.constant 0 : index
    %84 = vector.load %arg21[%83, %c0_66] : memref<10x128xf32, #tpu.memory_space<vmem>>, vector<1x128xf32>
    %c9_67 = arith.constant 9 : index
    %c0_68 = arith.constant 0 : index
    %85 = vector.load %arg23[%c9_67, %c0_68] : memref<22x128xf32, #tpu.memory_space<vmem>>, vector<1x128xf32>
    tpu.vector_store %arg23[%c9_67, %c0_68], %84 {strides = array<i32>} : memref<22x128xf32, #tpu.memory_space<vmem>>, vector<1x128xf32>,
    %c9_69 = arith.constant 9 : index
    %86 = memref.load %arg2[%c9_69] : memref<22xi32, #tpu.memory_space<smem>>
    %87 = arith.index_cast %86 : i32 to index
    %c0_70 = arith.constant 0 : index
    %88 = vector.load %arg21[%87, %c0_70] : memref<10x128xf32, #tpu.memory_space<vmem>>, vector<1x128xf32>
    %c9_71 = arith.constant 9 : index
    %c0_72 = arith.constant 0 : index
    %89 = vector.load %arg24[%c9_71, %c0_72] : memref<22x128xf32, #tpu.memory_space<vmem>>, vector<1x128xf32>
    tpu.vector_store %arg24[%c9_71, %c0_72], %88 {strides = array<i32>} : memref<22x128xf32, #tpu.memory_space<vmem>>, vector<1x128xf32>,
    %c10 = arith.constant 10 : index
    %90 = memref.load %arg1[%c10] : memref<22xi32, #tpu.memory_space<smem>>
    %91 = arith.index_cast %90 : i32 to index
    %c0_73 = arith.constant 0 : index
    %92 = vector.load %arg21[%91, %c0_73] : memref<10x128xf32, #tpu.memory_space<vmem>>, vector<1x128xf32>
    %c10_74 = arith.constant 10 : index
    %c0_75 = arith.constant 0 : index
    %93 = vector.load %arg23[%c10_74, %c0_75] : memref<22x128xf32, #tpu.memory_space<vmem>>, vector<1x128xf32>
    tpu.vector_store %arg23[%c10_74, %c0_75], %92 {strides = array<i32>} : memref<22x128xf32, #tpu.memory_space<vmem>>, vector<1x128xf32>,
    %c10_76 = arith.constant 10 : index
    %94 = memref.load %arg2[%c10_76] : memref<22xi32, #tpu.memory_space<smem>>
    %95 = arith.index_cast %94 : i32 to index
    %c0_77 = arith.constant 0 : index
    %96 = vector.load %arg21[%95, %c0_77] : memref<10x128xf32, #tpu.memory_space<vmem>>, vector<1x128xf32>
    %c10_78 = arith.constant 10 : index
    %c0_79 = arith.constant 0 : index
    %97 = vector.load %arg24[%c10_78, %c0_79] : memref<22x128xf32, #tpu.memory_space<vmem>>, vector<1x128xf32>
    tpu.vector_store %arg24[%c10_78, %c0_79], %96 {strides = array<i32>} : memref<22x128xf32, #tpu.memory_space<vmem>>, vector<1x128xf32>,
    %c11 = arith.constant 11 : index
    %98 = memref.load %arg1[%c11] : memref<22xi32, #tpu.memory_space<smem>>
    %99 = arith.index_cast %98 : i32 to index
    %c0_80 = arith.constant 0 : index
    %100 = vector.load %arg21[%99, %c0_80] : memref<10x128xf32, #tpu.memory_space<vmem>>, vector<1x128xf32>
    %c11_81 = arith.constant 11 : index
    %c0_82 = arith.constant 0 : index
    %101 = vector.load %arg23[%c11_81, %c0_82] : memref<22x128xf32, #tpu.memory_space<vmem>>, vector<1x128xf32>
    tpu.vector_store %arg23[%c11_81, %c0_82], %100 {strides = array<i32>} : memref<22x128xf32, #tpu.memory_space<vmem>>, vector<1x128xf32>,
    %c11_83 = arith.constant 11 : index
    %102 = memref.load %arg2[%c11_83] : memref<22xi32, #tpu.memory_space<smem>>
    %103 = arith.index_cast %102 : i32 to index
    %c0_84 = arith.constant 0 : index
    %104 = vector.load %arg21[%103, %c0_84] : memref<10x128xf32, #tpu.memory_space<vmem>>, vector<1x128xf32>
    %c11_85 = arith.constant 11 : index
    %c0_86 = arith.constant 0 : index
    %105 = vector.load %arg24[%c11_85, %c0_86] : memref<22x128xf32, #tpu.memory_space<vmem>>, vector<1x128xf32>
    tpu.vector_store %arg24[%c11_85, %c0_86], %104 {strides = array<i32>} : memref<22x128xf32, #tpu.memory_space<vmem>>, vector<1x128xf32>,
    %c12 = arith.constant 12 : index
    %106 = memref.load %arg1[%c12] : memref<22xi32, #tpu.memory_space<smem>>
    %107 = arith.index_cast %106 : i32 to index
    %c0_87 = arith.constant 0 : index
    %108 = vector.load %arg21[%107, %c0_87] : memref<10x128xf32, #tpu.memory_space<vmem>>, vector<1x128xf32>
    %c12_88 = arith.constant 12 : index
    %c0_89 = arith.constant 0 : index
    %109 = vector.load %arg23[%c12_88, %c0_89] : memref<22x128xf32, #tpu.memory_space<vmem>>, vector<1x128xf32>
    tpu.vector_store %arg23[%c12_88, %c0_89], %108 {strides = array<i32>} : memref<22x128xf32, #tpu.memory_space<vmem>>, vector<1x128xf32>,
    %c12_90 = arith.constant 12 : index
    %110 = memref.load %arg2[%c12_90] : memref<22xi32, #tpu.memory_space<smem>>
    %111 = arith.index_cast %110 : i32 to index
    %c0_91 = arith.constant 0 : index
    %112 = vector.load %arg21[%111, %c0_91] : memref<10x128xf32, #tpu.memory_space<vmem>>, vector<1x128xf32>
    %c12_92 = arith.constant 12 : index
    %c0_93 = arith.constant 0 : index
    %113 = vector.load %arg24[%c12_92, %c0_93] : memref<22x128xf32, #tpu.memory_space<vmem>>, vector<1x128xf32>
    tpu.vector_store %arg24[%c12_92, %c0_93], %112 {strides = array<i32>} : memref<22x128xf32, #tpu.memory_space<vmem>>, vector<1x128xf32>,
    %c13 = arith.constant 13 : index
    %114 = memref.load %arg1[%c13] : memref<22xi32, #tpu.memory_space<smem>>
    %115 = arith.index_cast %114 : i32 to index
    %c0_94 = arith.constant 0 : index
    %116 = vector.load %arg21[%115, %c0_94] : memref<10x128xf32, #tpu.memory_space<vmem>>, vector<1x128xf32>
    %c13_95 = arith.constant 13 : index
    %c0_96 = arith.constant 0 : index
    %117 = vector.load %arg23[%c13_95, %c0_96] : memref<22x128xf32, #tpu.memory_space<vmem>>, vector<1x128xf32>
    tpu.vector_store %arg23[%c13_95, %c0_96], %116 {strides = array<i32>} : memref<22x128xf32, #tpu.memory_space<vmem>>, vector<1x128xf32>,
    %c13_97 = arith.constant 13 : index
    %118 = memref.load %arg2[%c13_97] : memref<22xi32, #tpu.memory_space<smem>>
    %119 = arith.index_cast %118 : i32 to index
    %c0_98 = arith.constant 0 : index
    %120 = vector.load %arg21[%119, %c0_98] : memref<10x128xf32, #tpu.memory_space<vmem>>, vector<1x128xf32>
    %c13_99 = arith.constant 13 : index
    %c0_100 = arith.constant 0 : index
    %121 = vector.load %arg24[%c13_99, %c0_100] : memref<22x128xf32, #tpu.memory_space<vmem>>, vector<1x128xf32>
    tpu.vector_store %arg24[%c13_99, %c0_100], %120 {strides = array<i32>} : memref<22x128xf32, #tpu.memory_space<vmem>>, vector<1x128xf32>,
    %c14 = arith.constant 14 : index
    %122 = memref.load %arg1[%c14] : memref<22xi32, #tpu.memory_space<smem>>
    %123 = arith.index_cast %122 : i32 to index
    %c0_101 = arith.constant 0 : index
    %124 = vector.load %arg21[%123, %c0_101] : memref<10x128xf32, #tpu.memory_space<vmem>>, vector<1x128xf32>
    %c14_102 = arith.constant 14 : index
    %c0_103 = arith.constant 0 : index
    %125 = vector.load %arg23[%c14_102, %c0_103] : memref<22x128xf32, #tpu.memory_space<vmem>>, vector<1x128xf32>
    tpu.vector_store %arg23[%c14_102, %c0_103], %124 {strides = array<i32>} : memref<22x128xf32, #tpu.memory_space<vmem>>, vector<1x128xf32>,
    %c14_104 = arith.constant 14 : index
    %126 = memref.load %arg2[%c14_104] : memref<22xi32, #tpu.memory_space<smem>>
    %127 = arith.index_cast %126 : i32 to index
    %c0_105 = arith.constant 0 : index
    %128 = vector.load %arg21[%127, %c0_105] : memref<10x128xf32, #tpu.memory_space<vmem>>, vector<1x128xf32>
    %c14_106 = arith.constant 14 : index
    %c0_107 = arith.constant 0 : index
    %129 = vector.load %arg24[%c14_106, %c0_107] : memref<22x128xf32, #tpu.memory_space<vmem>>, vector<1x128xf32>
    tpu.vector_store %arg24[%c14_106, %c0_107], %128 {strides = array<i32>} : memref<22x128xf32, #tpu.memory_space<vmem>>, vector<1x128xf32>,
    %c15 = arith.constant 15 : index
    %130 = memref.load %arg1[%c15] : memref<22xi32, #tpu.memory_space<smem>>
    %131 = arith.index_cast %130 : i32 to index
    %c0_108 = arith.constant 0 : index
    %132 = vector.load %arg21[%131, %c0_108] : memref<10x128xf32, #tpu.memory_space<vmem>>, vector<1x128xf32>
    %c15_109 = arith.constant 15 : index
    %c0_110 = arith.constant 0 : index
    %133 = vector.load %arg23[%c15_109, %c0_110] : memref<22x128xf32, #tpu.memory_space<vmem>>, vector<1x128xf32>
    tpu.vector_store %arg23[%c15_109, %c0_110], %132 {strides = array<i32>} : memref<22x128xf32, #tpu.memory_space<vmem>>, vector<1x128xf32>,
    %c15_111 = arith.constant 15 : index
    %134 = memref.load %arg2[%c15_111] : memref<22xi32, #tpu.memory_space<smem>>
    %135 = arith.index_cast %134 : i32 to index
    %c0_112 = arith.constant 0 : index
    %136 = vector.load %arg21[%135, %c0_112] : memref<10x128xf32, #tpu.memory_space<vmem>>, vector<1x128xf32>
    %c15_113 = arith.constant 15 : index
    %c0_114 = arith.constant 0 : index
    %137 = vector.load %arg24[%c15_113, %c0_114] : memref<22x128xf32, #tpu.memory_space<vmem>>, vector<1x128xf32>
    tpu.vector_store %arg24[%c15_113, %c0_114], %136 {strides = array<i32>} : memref<22x128xf32, #tpu.memory_space<vmem>>, vector<1x128xf32>,
    %c16 = arith.constant 16 : index
    %138 = memref.load %arg1[%c16] : memref<22xi32, #tpu.memory_space<smem>>
    %139 = arith.index_cast %138 : i32 to index
    %c0_115 = arith.constant 0 : index
    %140 = vector.load %arg21[%139, %c0_115] : memref<10x128xf32, #tpu.memory_space<vmem>>, vector<1x128xf32>
    %c16_116 = arith.constant 16 : index
    %c0_117 = arith.constant 0 : index
    %141 = vector.load %arg23[%c16_116, %c0_117] : memref<22x128xf32, #tpu.memory_space<vmem>>, vector<1x128xf32>
    tpu.vector_store %arg23[%c16_116, %c0_117], %140 {strides = array<i32>} : memref<22x128xf32, #tpu.memory_space<vmem>>, vector<1x128xf32>,
    %c16_118 = arith.constant 16 : index
    %142 = memref.load %arg2[%c16_118] : memref<22xi32, #tpu.memory_space<smem>>
    %143 = arith.index_cast %142 : i32 to index
    %c0_119 = arith.constant 0 : index
    %144 = vector.load %arg21[%143, %c0_119] : memref<10x128xf32, #tpu.memory_space<vmem>>, vector<1x128xf32>
    %c16_120 = arith.constant 16 : index
    %c0_121 = arith.constant 0 : index
    %145 = vector.load %arg24[%c16_120, %c0_121] : memref<22x128xf32, #tpu.memory_space<vmem>>, vector<1x128xf32>
    tpu.vector_store %arg24[%c16_120, %c0_121], %144 {strides = array<i32>} : memref<22x128xf32, #tpu.memory_space<vmem>>, vector<1x128xf32>,
    %c17 = arith.constant 17 : index
    %146 = memref.load %arg1[%c17] : memref<22xi32, #tpu.memory_space<smem>>
    %147 = arith.index_cast %146 : i32 to index
    %c0_122 = arith.constant 0 : index
    %148 = vector.load %arg21[%147, %c0_122] : memref<10x128xf32, #tpu.memory_space<vmem>>, vector<1x128xf32>
    %c17_123 = arith.constant 17 : index
    %c0_124 = arith.constant 0 : index
    %149 = vector.load %arg23[%c17_123, %c0_124] : memref<22x128xf32, #tpu.memory_space<vmem>>, vector<1x128xf32>
    tpu.vector_store %arg23[%c17_123, %c0_124], %148 {strides = array<i32>} : memref<22x128xf32, #tpu.memory_space<vmem>>, vector<1x128xf32>,
    %c17_125 = arith.constant 17 : index
    %150 = memref.load %arg2[%c17_125] : memref<22xi32, #tpu.memory_space<smem>>
    %151 = arith.index_cast %150 : i32 to index
    %c0_126 = arith.constant 0 : index
    %152 = vector.load %arg21[%151, %c0_126] : memref<10x128xf32, #tpu.memory_space<vmem>>, vector<1x128xf32>
    %c17_127 = arith.constant 17 : index
    %c0_128 = arith.constant 0 : index
    %153 = vector.load %arg24[%c17_127, %c0_128] : memref<22x128xf32, #tpu.memory_space<vmem>>, vector<1x128xf32>
    tpu.vector_store %arg24[%c17_127, %c0_128], %152 {strides = array<i32>} : memref<22x128xf32, #tpu.memory_space<vmem>>, vector<1x128xf32>,
    %c18 = arith.constant 18 : index
    %154 = memref.load %arg1[%c18] : memref<22xi32, #tpu.memory_space<smem>>
    %155 = arith.index_cast %154 : i32 to index
    %c0_129 = arith.constant 0 : index
    %156 = vector.load %arg21[%155, %c0_129] : memref<10x128xf32, #tpu.memory_space<vmem>>, vector<1x128xf32>
    %c18_130 = arith.constant 18 : index
    %c0_131 = arith.constant 0 : index
    %157 = vector.load %arg23[%c18_130, %c0_131] : memref<22x128xf32, #tpu.memory_space<vmem>>, vector<1x128xf32>
    tpu.vector_store %arg23[%c18_130, %c0_131], %156 {strides = array<i32>} : memref<22x128xf32, #tpu.memory_space<vmem>>, vector<1x128xf32>,
    %c18_132 = arith.constant 18 : index
    %158 = memref.load %arg2[%c18_132] : memref<22xi32, #tpu.memory_space<smem>>
    %159 = arith.index_cast %158 : i32 to index
    %c0_133 = arith.constant 0 : index
    %160 = vector.load %arg21[%159, %c0_133] : memref<10x128xf32, #tpu.memory_space<vmem>>, vector<1x128xf32>
    %c18_134 = arith.constant 18 : index
    %c0_135 = arith.constant 0 : index
    %161 = vector.load %arg24[%c18_134, %c0_135] : memref<22x128xf32, #tpu.memory_space<vmem>>, vector<1x128xf32>
    tpu.vector_store %arg24[%c18_134, %c0_135], %160 {strides = array<i32>} : memref<22x128xf32, #tpu.memory_space<vmem>>, vector<1x128xf32>,
    %c19 = arith.constant 19 : index
    %162 = memref.load %arg1[%c19] : memref<22xi32, #tpu.memory_space<smem>>
    %163 = arith.index_cast %162 : i32 to index
    %c0_136 = arith.constant 0 : index
    %164 = vector.load %arg21[%163, %c0_136] : memref<10x128xf32, #tpu.memory_space<vmem>>, vector<1x128xf32>
    %c19_137 = arith.constant 19 : index
    %c0_138 = arith.constant 0 : index
    %165 = vector.load %arg23[%c19_137, %c0_138] : memref<22x128xf32, #tpu.memory_space<vmem>>, vector<1x128xf32>
    tpu.vector_store %arg23[%c19_137, %c0_138], %164 {strides = array<i32>} : memref<22x128xf32, #tpu.memory_space<vmem>>, vector<1x128xf32>,
    %c19_139 = arith.constant 19 : index
    %166 = memref.load %arg2[%c19_139] : memref<22xi32, #tpu.memory_space<smem>>
    %167 = arith.index_cast %166 : i32 to index
    %c0_140 = arith.constant 0 : index
    %168 = vector.load %arg21[%167, %c0_140] : memref<10x128xf32, #tpu.memory_space<vmem>>, vector<1x128xf32>
    %c19_141 = arith.constant 19 : index
    %c0_142 = arith.constant 0 : index
    %169 = vector.load %arg24[%c19_141, %c0_142] : memref<22x128xf32, #tpu.memory_space<vmem>>, vector<1x128xf32>
    tpu.vector_store %arg24[%c19_141, %c0_142], %168 {strides = array<i32>} : memref<22x128xf32, #tpu.memory_space<vmem>>, vector<1x128xf32>,
    %c20 = arith.constant 20 : index
    %170 = memref.load %arg1[%c20] : memref<22xi32, #tpu.memory_space<smem>>
    %171 = arith.index_cast %170 : i32 to index
    %c0_143 = arith.constant 0 : index
    %172 = vector.load %arg21[%171, %c0_143] : memref<10x128xf32, #tpu.memory_space<vmem>>, vector<1x128xf32>
    %c20_144 = arith.constant 20 : index
    %c0_145 = arith.constant 0 : index
    %173 = vector.load %arg23[%c20_144, %c0_145] : memref<22x128xf32, #tpu.memory_space<vmem>>, vector<1x128xf32>
    tpu.vector_store %arg23[%c20_144, %c0_145], %172 {strides = array<i32>} : memref<22x128xf32, #tpu.memory_space<vmem>>, vector<1x128xf32>,
    %c20_146 = arith.constant 20 : index
    %174 = memref.load %arg2[%c20_146] : memref<22xi32, #tpu.memory_space<smem>>
    %175 = arith.index_cast %174 : i32 to index
    %c0_147 = arith.constant 0 : index
    %176 = vector.load %arg21[%175, %c0_147] : memref<10x128xf32, #tpu.memory_space<vmem>>, vector<1x128xf32>
    %c20_148 = arith.constant 20 : index
    %c0_149 = arith.constant 0 : index
    %177 = vector.load %arg24[%c20_148, %c0_149] : memref<22x128xf32, #tpu.memory_space<vmem>>, vector<1x128xf32>
    tpu.vector_store %arg24[%c20_148, %c0_149], %176 {strides = array<i32>} : memref<22x128xf32, #tpu.memory_space<vmem>>, vector<1x128xf32>,
    %c21 = arith.constant 21 : index
    %178 = memref.load %arg1[%c21] : memref<22xi32, #tpu.memory_space<smem>>
    %179 = arith.index_cast %178 : i32 to index
    %c0_150 = arith.constant 0 : index
    %180 = vector.load %arg21[%179, %c0_150] : memref<10x128xf32, #tpu.memory_space<vmem>>, vector<1x128xf32>
    %c21_151 = arith.constant 21 : index
    %c0_152 = arith.constant 0 : index
    %181 = vector.load %arg23[%c21_151, %c0_152] : memref<22x128xf32, #tpu.memory_space<vmem>>, vector<1x128xf32>
    tpu.vector_store %arg23[%c21_151, %c0_152], %180 {strides = array<i32>} : memref<22x128xf32, #tpu.memory_space<vmem>>, vector<1x128xf32>,
    %c21_153 = arith.constant 21 : index
    %182 = memref.load %arg2[%c21_153] : memref<22xi32, #tpu.memory_space<smem>>
    %183 = arith.index_cast %182 : i32 to index
    %c0_154 = arith.constant 0 : index
    %184 = vector.load %arg21[%183, %c0_154] : memref<10x128xf32, #tpu.memory_space<vmem>>, vector<1x128xf32>
    %c21_155 = arith.constant 21 : index
    %c0_156 = arith.constant 0 : index
    %185 = vector.load %arg24[%c21_155, %c0_156] : memref<22x128xf32, #tpu.memory_space<vmem>>, vector<1x128xf32>
    tpu.vector_store %arg24[%c21_155, %c0_156], %184 {strides = array<i32>} : memref<22x128xf32, #tpu.memory_space<vmem>>, vector<1x128xf32>,
    %c0_157 = arith.constant 0 : index
    %c0_158 = arith.constant 0 : index
    %186 = vector.load %arg21[%c0_157, %c0_158] : memref<10x128xf32, #tpu.memory_space<vmem>>, vector<10x128xf32>
    %c0_159 = arith.constant 0 : index
    %c0_160 = arith.constant 0 : index
    %187 = vector.load %arg22[%c0_159, %c0_160] : memref<22x128xf32, #tpu.memory_space<vmem>>, vector<22x128xf32>
    %c0_161 = arith.constant 0 : index
    %c0_162 = arith.constant 0 : index
    %188 = vector.load %arg6[%c0_161, %c0_162] : memref<22x1xf32, #tpu.memory_space<vmem>>, vector<22x1xf32>
    %c0_163 = arith.constant 0 : index
    %c0_164 = arith.constant 0 : index
    %189 = vector.load %arg23[%c0_163, %c0_164] : memref<22x128xf32, #tpu.memory_space<vmem>>, vector<22x128xf32>
    %190 = vector.broadcast %188 : vector<22x1xf32> to vector<22x128xf32>
    %191 = arith.mulf %190, %189 : vector<22x128xf32>
    %c0_165 = arith.constant 0 : index
    %c0_166 = arith.constant 0 : index
    %192 = vector.load %arg24[%c0_165, %c0_166] : memref<22x128xf32, #tpu.memory_space<vmem>>, vector<22x128xf32>
    %193 = arith.addf %191, %192 : vector<22x128xf32>
    %194 = arith.truncf %187 : vector<22x128xf32> to vector<22x128xbf16>
    %195 = arith.truncf %193 : vector<22x128xf32> to vector<22x128xbf16>
    %196 = arith.truncf %191 : vector<22x128xf32> to vector<22x128xbf16>
    %c0_167 = arith.constant 0 : index
    %c0_168 = arith.constant 0 : index
    %c0_169 = arith.constant 0 : index
    %197 = vector.load %arg7[%c0_167, %c0_168, %c0_169] : memref<1x384x128xbf16, #tpu.memory_space<vmem>>, vector<1x384x128xbf16>
    %198 = vector.shape_cast %197 : vector<1x384x128xbf16> to vector<384x128xbf16>
    %199 = vector.extract_strided_slice %198 {offsets = [0, 0], sizes = [128, 128], strides = [1, 1]} : vector<384x128xbf16> to vector<128x128xbf16>
    %cst = arith.constant dense<0.000000e+00> : vector<22x128xf32>
    %200 = tpu.matmul %194, %199, %cst {dimension_numbers = #tpu.dot_dimension_numbers<[1], [0], [0], [1], [0, 0, 1, 1], [], []>} : vector<22x128xbf16>, vector<128x128xbf16>, vector<22x128xf32> -> vector<22x128xf32>
    %201 = vector.extract_strided_slice %198 {offsets = [128, 0], sizes = [128, 128], strides = [1, 1]} : vector<384x128xbf16> to vector<128x128xbf16>
    %cst_170 = arith.constant dense<0.000000e+00> : vector<22x128xf32>
    %202 = tpu.matmul %195, %201, %cst_170 {dimension_numbers = #tpu.dot_dimension_numbers<[1], [0], [0], [1], [0, 0, 1, 1], [], []>} : vector<22x128xbf16>, vector<128x128xbf16>, vector<22x128xf32> -> vector<22x128xf32>
    %203 = arith.addf %200, %202 : vector<22x128xf32>
    %204 = vector.extract_strided_slice %198 {offsets = [256, 0], sizes = [128, 128], strides = [1, 1]} : vector<384x128xbf16> to vector<128x128xbf16>
    %cst_171 = arith.constant dense<0.000000e+00> : vector<22x128xf32>
    %205 = tpu.matmul %196, %204, %cst_171 {dimension_numbers = #tpu.dot_dimension_numbers<[1], [0], [0], [1], [0, 0, 1, 1], [], []>} : vector<22x128xbf16>, vector<128x128xbf16>, vector<22x128xf32> -> vector<22x128xf32>
    %206 = arith.addf %203, %205 : vector<22x128xf32>
    %c0_172 = arith.constant 0 : index
    %c0_173 = arith.constant 0 : index
    %c0_174 = arith.constant 0 : index
    %207 = vector.load %arg8[%c0_172, %c0_173, %c0_174] : memref<1x1x128xf32, #tpu.memory_space<vmem>>, vector<1x1x128xf32>
    %208 = vector.shape_cast %207 : vector<1x1x128xf32> to vector<1x128xf32>
    %c0_175 = arith.constant 0 : index
    %c0_176 = arith.constant 0 : index
    %c0_177 = arith.constant 0 : index
    %209 = vector.load %arg9[%c0_175, %c0_176, %c0_177] : memref<1x1x128xf32, #tpu.memory_space<vmem>>, vector<1x1x128xf32>
    %210 = vector.shape_cast %209 : vector<1x1x128xf32> to vector<1x128xf32>
    %cst_178 = arith.constant dense<0.000000e+00> : vector<128xf32>
    %211 = vector.multi_reduction <add>, %206, %cst_178 [0] : vector<22x128xf32> to vector<128xf32>
    %212 = vector.shape_cast %211 : vector<128xf32> to vector<1x128xf32>
    %cst_179 = arith.constant 2.200000e+01 : f32
    %213 = vector.broadcast %cst_179 : f32 to vector<1x128xf32>
    %214 = arith.divf %212, %213 : vector<1x128xf32>
    %215 = vector.broadcast %214 : vector<1x128xf32> to vector<22x128xf32>
    %216 = arith.subf %206, %215 : vector<22x128xf32>
    %217 = arith.mulf %216, %216 : vector<22x128xf32>
    %cst_180 = arith.constant dense<0.000000e+00> : vector<128xf32>
    %218 = vector.multi_reduction <add>, %217, %cst_180 [0] : vector<22x128xf32> to vector<128xf32>
    %219 = vector.shape_cast %218 : vector<128xf32> to vector<1x128xf32>
    %cst_181 = arith.constant 2.200000e+01 : f32
    %220 = vector.broadcast %cst_181 : f32 to vector<1x128xf32>
    %221 = arith.divf %219, %220 : vector<1x128xf32>
    %cst_182 = arith.constant 9.99999974E-6 : f32
    %222 = vector.broadcast %cst_182 : f32 to vector<1x128xf32>
    %223 = arith.addf %221, %222 : vector<1x128xf32>
    %224 = math.rsqrt %223 : vector<1x128xf32>
    %225 = vector.broadcast %224 : vector<1x128xf32> to vector<22x128xf32>
    %226 = arith.mulf %216, %225 : vector<22x128xf32>
    %227 = vector.broadcast %208 : vector<1x128xf32> to vector<22x128xf32>
    %228 = arith.mulf %226, %227 : vector<22x128xf32>
    %229 = vector.broadcast %210 : vector<1x128xf32> to vector<22x128xf32>
    %230 = arith.addf %228, %229 : vector<22x128xf32>
    %cst_183 = arith.constant 0.000000e+00 : f32
    %231 = vector.broadcast %cst_183 : f32 to vector<22x128xf32>
    %232 = arith.maximumf %230, %231 : vector<22x128xf32>
    %233 = arith.truncf %232 : vector<22x128xf32> to vector<22x128xbf16>
    %c0_184 = arith.constant 0 : index
    %c0_185 = arith.constant 0 : index
    %c0_186 = arith.constant 0 : index
    %234 = vector.load %arg10[%c0_184, %c0_185, %c0_186] : memref<1x128x128xbf16, #tpu.memory_space<vmem>>, vector<1x128x128xbf16>
    %235 = vector.shape_cast %234 : vector<1x128x128xbf16> to vector<128x128xbf16>
    %cst_187 = arith.constant dense<0.000000e+00> : vector<22x128xf32>
    %236 = tpu.matmul %233, %235, %cst_187 {dimension_numbers = #tpu.dot_dimension_numbers<[1], [0], [0], [1], [0, 0, 1, 1], [], []>} : vector<22x128xbf16>, vector<128x128xbf16>, vector<22x128xf32> -> vector<22x128xf32>
    %c0_188 = arith.constant 0 : index
    %c0_189 = arith.constant 0 : index
    %c0_190 = arith.constant 0 : index
    %237 = vector.load %arg11[%c0_188, %c0_189, %c0_190] : memref<1x1x128xf32, #tpu.memory_space<vmem>>, vector<1x1x128xf32>
    %238 = vector.shape_cast %237 : vector<1x1x128xf32> to vector<1x128xf32>
    %c0_191 = arith.constant 0 : index
    %c0_192 = arith.constant 0 : index
    %c0_193 = arith.constant 0 : index
    %239 = vector.load %arg12[%c0_191, %c0_192, %c0_193] : memref<1x1x128xf32, #tpu.memory_space<vmem>>, vector<1x1x128xf32>
    %240 = vector.shape_cast %239 : vector<1x1x128xf32> to vector<1x128xf32>
    %cst_194 = arith.constant dense<0.000000e+00> : vector<128xf32>
    %241 = vector.multi_reduction <add>, %236, %cst_194 [0] : vector<22x128xf32> to vector<128xf32>
    %242 = vector.shape_cast %241 : vector<128xf32> to vector<1x128xf32>
    %cst_195 = arith.constant 2.200000e+01 : f32
    %243 = vector.broadcast %cst_195 : f32 to vector<1x128xf32>
    %244 = arith.divf %242, %243 : vector<1x128xf32>
    %245 = vector.broadcast %244 : vector<1x128xf32> to vector<22x128xf32>
    %246 = arith.subf %236, %245 : vector<22x128xf32>
    %247 = arith.mulf %246, %246 : vector<22x128xf32>
    %cst_196 = arith.constant dense<0.000000e+00> : vector<128xf32>
    %248 = vector.multi_reduction <add>, %247, %cst_196 [0] : vector<22x128xf32> to vector<128xf32>
    %249 = vector.shape_cast %248 : vector<128xf32> to vector<1x128xf32>
    %cst_197 = arith.constant 2.200000e+01 : f32
    %250 = vector.broadcast %cst_197 : f32 to vector<1x128xf32>
    %251 = arith.divf %249, %250 : vector<1x128xf32>
    %cst_198 = arith.constant 9.99999974E-6 : f32
    %252 = vector.broadcast %cst_198 : f32 to vector<1x128xf32>
    %253 = arith.addf %251, %252 : vector<1x128xf32>
    %254 = math.rsqrt %253 : vector<1x128xf32>
    %255 = vector.broadcast %254 : vector<1x128xf32> to vector<22x128xf32>
    %256 = arith.mulf %246, %255 : vector<22x128xf32>
    %257 = vector.broadcast %238 : vector<1x128xf32> to vector<22x128xf32>
    %258 = arith.mulf %256, %257 : vector<22x128xf32>
    %259 = vector.broadcast %240 : vector<1x128xf32> to vector<22x128xf32>
    %260 = arith.addf %258, %259 : vector<22x128xf32>
    %cst_199 = arith.constant 0.000000e+00 : f32
    %261 = vector.broadcast %cst_199 : f32 to vector<22x128xf32>
    %262 = arith.maximumf %260, %261 : vector<22x128xf32>
    %cst_200 = arith.constant dense<0.000000e+00> : vector<10x128xf32>
    %263 = tpu.matmul %6, %194, %cst_200 {dimension_numbers = #tpu.dot_dimension_numbers<[1], [0], [0], [1], [0, 0, 1, 1], [], []>} : vector<10x22xbf16>, vector<22x128xbf16>, vector<10x128xf32> -> vector<10x128xf32>
    %cst_201 = arith.constant dense<0.000000e+00> : vector<10x128xf32>
    %264 = tpu.matmul %6, %195, %cst_201 {dimension_numbers = #tpu.dot_dimension_numbers<[1], [0], [0], [1], [0, 0, 1, 1], [], []>} : vector<10x22xbf16>, vector<22x128xbf16>, vector<10x128xf32> -> vector<10x128xf32>
    %cst_202 = arith.constant dense<0.000000e+00> : vector<10x128xf32>
    %265 = tpu.matmul %6, %196, %cst_202 {dimension_numbers = #tpu.dot_dimension_numbers<[1], [0], [0], [1], [0, 0, 1, 1], [], []>} : vector<10x22xbf16>, vector<22x128xbf16>, vector<10x128xf32> -> vector<10x128xf32>
    %c0_203 = arith.constant 0 : index
    %c0_204 = arith.constant 0 : index
    %c0_205 = arith.constant 0 : index
    %266 = vector.load %arg13[%c0_203, %c0_204, %c0_205] : memref<1x512x128xbf16, #tpu.memory_space<vmem>>, vector<1x512x128xbf16>
    %267 = vector.shape_cast %266 : vector<1x512x128xbf16> to vector<512x128xbf16>
    %268 = arith.truncf %186 : vector<10x128xf32> to vector<10x128xbf16>
    %269 = vector.extract_strided_slice %267 {offsets = [0, 0], sizes = [128, 128], strides = [1, 1]} : vector<512x128xbf16> to vector<128x128xbf16>
    %cst_206 = arith.constant dense<0.000000e+00> : vector<10x128xf32>
    %270 = tpu.matmul %268, %269, %cst_206 {dimension_numbers = #tpu.dot_dimension_numbers<[1], [0], [0], [1], [0, 0, 1, 1], [], []>} : vector<10x128xbf16>, vector<128x128xbf16>, vector<10x128xf32> -> vector<10x128xf32>
    %271 = arith.truncf %263 : vector<10x128xf32> to vector<10x128xbf16>
    %272 = vector.extract_strided_slice %267 {offsets = [128, 0], sizes = [128, 128], strides = [1, 1]} : vector<512x128xbf16> to vector<128x128xbf16>
    %cst_207 = arith.constant dense<0.000000e+00> : vector<10x128xf32>
    %273 = tpu.matmul %271, %272, %cst_207 {dimension_numbers = #tpu.dot_dimension_numbers<[1], [0], [0], [1], [0, 0, 1, 1], [], []>} : vector<10x128xbf16>, vector<128x128xbf16>, vector<10x128xf32> -> vector<10x128xf32>
    %274 = arith.addf %270, %273 : vector<10x128xf32>
    %275 = arith.truncf %264 : vector<10x128xf32> to vector<10x128xbf16>
    %276 = vector.extract_strided_slice %267 {offsets = [256, 0], sizes = [128, 128], strides = [1, 1]} : vector<512x128xbf16> to vector<128x128xbf16>
    %cst_208 = arith.constant dense<0.000000e+00> : vector<10x128xf32>
    %277 = tpu.matmul %275, %276, %cst_208 {dimension_numbers = #tpu.dot_dimension_numbers<[1], [0], [0], [1], [0, 0, 1, 1], [], []>} : vector<10x128xbf16>, vector<128x128xbf16>, vector<10x128xf32> -> vector<10x128xf32>
    %278 = arith.addf %274, %277 : vector<10x128xf32>
    %279 = arith.truncf %265 : vector<10x128xf32> to vector<10x128xbf16>
    %280 = vector.extract_strided_slice %267 {offsets = [384, 0], sizes = [128, 128], strides = [1, 1]} : vector<512x128xbf16> to vector<128x128xbf16>
    %cst_209 = arith.constant dense<0.000000e+00> : vector<10x128xf32>
    %281 = tpu.matmul %279, %280, %cst_209 {dimension_numbers = #tpu.dot_dimension_numbers<[1], [0], [0], [1], [0, 0, 1, 1], [], []>} : vector<10x128xbf16>, vector<128x128xbf16>, vector<10x128xf32> -> vector<10x128xf32>
    %282 = arith.addf %278, %281 : vector<10x128xf32>
    %c0_210 = arith.constant 0 : index
    %c0_211 = arith.constant 0 : index
    %c0_212 = arith.constant 0 : index
    %283 = vector.load %arg14[%c0_210, %c0_211, %c0_212] : memref<1x1x128xf32, #tpu.memory_space<vmem>>, vector<1x1x128xf32>
    %284 = vector.shape_cast %283 : vector<1x1x128xf32> to vector<1x128xf32>
    %c0_213 = arith.constant 0 : index
    %c0_214 = arith.constant 0 : index
    %c0_215 = arith.constant 0 : index
    %285 = vector.load %arg15[%c0_213, %c0_214, %c0_215] : memref<1x1x128xf32, #tpu.memory_space<vmem>>, vector<1x1x128xf32>
    %286 = vector.shape_cast %285 : vector<1x1x128xf32> to vector<1x128xf32>
    %cst_216 = arith.constant dense<0.000000e+00> : vector<128xf32>
    %287 = vector.multi_reduction <add>, %282, %cst_216 [0] : vector<10x128xf32> to vector<128xf32>
    %288 = vector.shape_cast %287 : vector<128xf32> to vector<1x128xf32>
    %cst_217 = arith.constant 1.000000e+01 : f32
    %289 = vector.broadcast %cst_217 : f32 to vector<1x128xf32>
    %290 = arith.divf %288, %289 : vector<1x128xf32>
    %291 = vector.broadcast %290 : vector<1x128xf32> to vector<10x128xf32>
    %292 = arith.subf %282, %291 : vector<10x128xf32>
    %293 = arith.mulf %292, %292 : vector<10x128xf32>
    %cst_218 = arith.constant dense<0.000000e+00> : vector<128xf32>
    %294 = vector.multi_reduction <add>, %293, %cst_218 [0] : vector<10x128xf32> to vector<128xf32>
    %295 = vector.shape_cast %294 : vector<128xf32> to vector<1x128xf32>
    %cst_219 = arith.constant 1.000000e+01 : f32
    %296 = vector.broadcast %cst_219 : f32 to vector<1x128xf32>
    %297 = arith.divf %295, %296 : vector<1x128xf32>
    %cst_220 = arith.constant 9.99999974E-6 : f32
    %298 = vector.broadcast %cst_220 : f32 to vector<1x128xf32>
    %299 = arith.addf %297, %298 : vector<1x128xf32>
    %300 = math.rsqrt %299 : vector<1x128xf32>
    %301 = vector.broadcast %300 : vector<1x128xf32> to vector<10x128xf32>
    %302 = arith.mulf %292, %301 : vector<10x128xf32>
    %303 = vector.broadcast %284 : vector<1x128xf32> to vector<10x128xf32>
    %304 = arith.mulf %302, %303 : vector<10x128xf32>
    %305 = vector.broadcast %286 : vector<1x128xf32> to vector<10x128xf32>
    %306 = arith.addf %304, %305 : vector<10x128xf32>
    %cst_221 = arith.constant 0.000000e+00 : f32
    %307 = vector.broadcast %cst_221 : f32 to vector<10x128xf32>
    %308 = arith.maximumf %306, %307 : vector<10x128xf32>
    %309 = arith.truncf %308 : vector<10x128xf32> to vector<10x128xbf16>
    %c0_222 = arith.constant 0 : index
    %c0_223 = arith.constant 0 : index
    %c0_224 = arith.constant 0 : index
    %310 = vector.load %arg16[%c0_222, %c0_223, %c0_224] : memref<1x128x128xbf16, #tpu.memory_space<vmem>>, vector<1x128x128xbf16>
    %311 = vector.shape_cast %310 : vector<1x128x128xbf16> to vector<128x128xbf16>
    %cst_225 = arith.constant dense<0.000000e+00> : vector<10x128xf32>
    %312 = tpu.matmul %309, %311, %cst_225 {dimension_numbers = #tpu.dot_dimension_numbers<[1], [0], [0], [1], [0, 0, 1, 1], [], []>} : vector<10x128xbf16>, vector<128x128xbf16>, vector<10x128xf32> -> vector<10x128xf32>
    %c0_226 = arith.constant 0 : index
    %c0_227 = arith.constant 0 : index
    %c0_228 = arith.constant 0 : index
    %313 = vector.load %arg17[%c0_226, %c0_227, %c0_228] : memref<1x1x128xf32, #tpu.memory_space<vmem>>, vector<1x1x128xf32>
    %314 = vector.shape_cast %313 : vector<1x1x128xf32> to vector<1x128xf32>
    %c0_229 = arith.constant 0 : index
    %c0_230 = arith.constant 0 : index
    %c0_231 = arith.constant 0 : index
    %315 = vector.load %arg18[%c0_229, %c0_230, %c0_231] : memref<1x1x128xf32, #tpu.memory_space<vmem>>, vector<1x1x128xf32>
    %316 = vector.shape_cast %315 : vector<1x1x128xf32> to vector<1x128xf32>
    %cst_232 = arith.constant dense<0.000000e+00> : vector<128xf32>
    %317 = vector.multi_reduction <add>, %312, %cst_232 [0] : vector<10x128xf32> to vector<128xf32>
    %318 = vector.shape_cast %317 : vector<128xf32> to vector<1x128xf32>
    %cst_233 = arith.constant 1.000000e+01 : f32
    %319 = vector.broadcast %cst_233 : f32 to vector<1x128xf32>
    %320 = arith.divf %318, %319 : vector<1x128xf32>
    %321 = vector.broadcast %320 : vector<1x128xf32> to vector<10x128xf32>
    %322 = arith.subf %312, %321 : vector<10x128xf32>
    %323 = arith.mulf %322, %322 : vector<10x128xf32>
    %cst_234 = arith.constant dense<0.000000e+00> : vector<128xf32>
    %324 = vector.multi_reduction <add>, %323, %cst_234 [0] : vector<10x128xf32> to vector<128xf32>
    %325 = vector.shape_cast %324 : vector<128xf32> to vector<1x128xf32>
    %cst_235 = arith.constant 1.000000e+01 : f32
    %326 = vector.broadcast %cst_235 : f32 to vector<1x128xf32>
    %327 = arith.divf %325, %326 : vector<1x128xf32>
    %cst_236 = arith.constant 9.99999974E-6 : f32
    %328 = vector.broadcast %cst_236 : f32 to vector<1x128xf32>
    %329 = arith.addf %327, %328 : vector<1x128xf32>
    %330 = math.rsqrt %329 : vector<1x128xf32>
    %331 = vector.broadcast %330 : vector<1x128xf32> to vector<10x128xf32>
    %332 = arith.mulf %322, %331 : vector<10x128xf32>
    %333 = vector.broadcast %314 : vector<1x128xf32> to vector<10x128xf32>
    %334 = arith.mulf %332, %333 : vector<10x128xf32>
    %335 = vector.broadcast %316 : vector<1x128xf32> to vector<10x128xf32>
    %336 = arith.addf %334, %335 : vector<10x128xf32>
    %cst_237 = arith.constant 0.000000e+00 : f32
    %337 = vector.broadcast %cst_237 : f32 to vector<10x128xf32>
    %338 = arith.maximumf %336, %337 : vector<10x128xf32>
    %c0_238 = arith.constant 0 : index
    %c0_239 = arith.constant 0 : index
    %339 = vector.load %arg21[%c0_238, %c0_239] : memref<10x128xf32, #tpu.memory_space<vmem>>, vector<10x128xf32>
    tpu.vector_store %arg21[%c0_238, %c0_239], %338 {strides = array<i32>} : memref<10x128xf32, #tpu.memory_space<vmem>>, vector<10x128xf32>,
    %c0_240 = arith.constant 0 : index
    %c0_241 = arith.constant 0 : index
    %340 = vector.load %arg22[%c0_240, %c0_241] : memref<22x128xf32, #tpu.memory_space<vmem>>, vector<22x128xf32>
    tpu.vector_store %arg22[%c0_240, %c0_241], %262 {strides = array<i32>} : memref<22x128xf32, #tpu.memory_space<vmem>>, vector<22x128xf32>,
    %c1_i32 = arith.constant 1 : i32
    %341 = arith.cmpi eq, %arg0, %c1_i32 : i32
    %342 = arith.extui %341 : i1 to i32
    %c0_i32_242 = arith.constant 0 : i32
    %343 = arith.cmpi ne, %342, %c0_i32_242 : i32
    scf.if %343 {
      %344 = arith.truncf %338 : vector<10x128xf32> to vector<10x128xbf16>
      %c0_243 = arith.constant 0 : index
      %c0_244 = arith.constant 0 : index
      %345 = vector.load %arg19[%c0_243, %c0_244] : memref<10x128xbf16, #tpu.memory_space<vmem>>, vector<10x128xbf16>
      tpu.vector_store %arg19[%c0_243, %c0_244], %344 {strides = array<i32>} : memref<10x128xbf16, #tpu.memory_space<vmem>>, vector<10x128xbf16>,
      %346 = arith.truncf %262 : vector<22x128xf32> to vector<22x128xbf16>
      %c0_245 = arith.constant 0 : index
      %c0_246 = arith.constant 0 : index
      %347 = vector.load %arg20[%c0_245, %c0_246] : memref<22x128xbf16, #tpu.memory_space<vmem>>, vector<22x128xbf16>
      tpu.vector_store %arg20[%c0_245, %c0_246], %346 {strides = array<i32>} : memref<22x128xbf16, #tpu.memory_space<vmem>>, vector<22x128xbf16>,
    } else {
    }
    return
  }
  func.func @transform_0(%arg0: i32, %arg1: memref<22xi32, #tpu.memory_space<smem>>, %arg2: memref<22xi32, #tpu.memory_space<smem>>) -> (i32, i32) {
    %c0_i32 = arith.constant 0 : i32
    %c0_i32_0 = arith.constant 0 : i32
    %c0_i32_1 = arith.constant 0 : i32
    return %c0_i32, %c0_i32_0 : i32, i32
  }
  func.func @transform_1(%arg0: i32, %arg1: memref<22xi32, #tpu.memory_space<smem>>, %arg2: memref<22xi32, #tpu.memory_space<smem>>) -> (i32, i32) {
    %c0_i32 = arith.constant 0 : i32
    %c0_i32_0 = arith.constant 0 : i32
    %c0_i32_1 = arith.constant 0 : i32
    return %c0_i32, %c0_i32_0 : i32, i32
  }
  func.func @transform_2(%arg0: i32, %arg1: memref<22xi32, #tpu.memory_space<smem>>, %arg2: memref<22xi32, #tpu.memory_space<smem>>) -> (i32, i32) {
    %c0_i32 = arith.constant 0 : i32
    %c0_i32_0 = arith.constant 0 : i32
    %c0_i32_1 = arith.constant 0 : i32
    return %c0_i32, %c0_i32_0 : i32, i32
  }
  func.func @transform_3(%arg0: i32, %arg1: memref<22xi32, #tpu.memory_space<smem>>, %arg2: memref<22xi32, #tpu.memory_space<smem>>) -> (i32, i32) {
    %c0_i32 = arith.constant 0 : i32
    %c0_i32_0 = arith.constant 0 : i32
    %c0_i32_1 = arith.constant 0 : i32
    return %c0_i32, %c0_i32_0 : i32, i32
  }
  func.func @transform_4(%arg0: i32, %arg1: memref<22xi32, #tpu.memory_space<smem>>, %arg2: memref<22xi32, #tpu.memory_space<smem>>) -> (i32, i32, i32) {
    %c0_i32 = arith.constant 0 : i32
    %c0_i32_0 = arith.constant 0 : i32
    %c0_i32_1 = arith.constant 0 : i32
    return %arg0, %c0_i32, %c0_i32_0 : i32, i32, i32
  }
  func.func @transform_5(%arg0: i32, %arg1: memref<22xi32, #tpu.memory_space<smem>>, %arg2: memref<22xi32, #tpu.memory_space<smem>>) -> (i32, i32, i32) {
    %c0_i32 = arith.constant 0 : i32
    %c0_i32_0 = arith.constant 0 : i32
    %c0_i32_1 = arith.constant 0 : i32
    return %arg0, %c0_i32, %c0_i32_0 : i32, i32, i32
  }
  func.func @transform_6(%arg0: i32, %arg1: memref<22xi32, #tpu.memory_space<smem>>, %arg2: memref<22xi32, #tpu.memory_space<smem>>) -> (i32, i32, i32) {
    %c0_i32 = arith.constant 0 : i32
    %c0_i32_0 = arith.constant 0 : i32
    %c0_i32_1 = arith.constant 0 : i32
    return %arg0, %c0_i32, %c0_i32_0 : i32, i32, i32
  }
  func.func @transform_7(%arg0: i32, %arg1: memref<22xi32, #tpu.memory_space<smem>>, %arg2: memref<22xi32, #tpu.memory_space<smem>>) -> (i32, i32, i32) {
    %c0_i32 = arith.constant 0 : i32
    %c0_i32_0 = arith.constant 0 : i32
    %c0_i32_1 = arith.constant 0 : i32
    return %arg0, %c0_i32, %c0_i32_0 : i32, i32, i32
  }
  func.func @transform_8(%arg0: i32, %arg1: memref<22xi32, #tpu.memory_space<smem>>, %arg2: memref<22xi32, #tpu.memory_space<smem>>) -> (i32, i32, i32) {
    %c0_i32 = arith.constant 0 : i32
    %c0_i32_0 = arith.constant 0 : i32
    %c0_i32_1 = arith.constant 0 : i32
    return %arg0, %c0_i32, %c0_i32_0 : i32, i32, i32
  }
  func.func @transform_9(%arg0: i32, %arg1: memref<22xi32, #tpu.memory_space<smem>>, %arg2: memref<22xi32, #tpu.memory_space<smem>>) -> (i32, i32, i32) {
    %c0_i32 = arith.constant 0 : i32
    %c0_i32_0 = arith.constant 0 : i32
    %c0_i32_1 = arith.constant 0 : i32
    return %arg0, %c0_i32, %c0_i32_0 : i32, i32, i32
  }
  func.func @transform_10(%arg0: i32, %arg1: memref<22xi32, #tpu.memory_space<smem>>, %arg2: memref<22xi32, #tpu.memory_space<smem>>) -> (i32, i32, i32) {
    %c0_i32 = arith.constant 0 : i32
    %c0_i32_0 = arith.constant 0 : i32
    %c0_i32_1 = arith.constant 0 : i32
    return %arg0, %c0_i32, %c0_i32_0 : i32, i32, i32
  }
  func.func @transform_11(%arg0: i32, %arg1: memref<22xi32, #tpu.memory_space<smem>>, %arg2: memref<22xi32, #tpu.memory_space<smem>>) -> (i32, i32, i32) {
    %c0_i32 = arith.constant 0 : i32
    %c0_i32_0 = arith.constant 0 : i32
    %c0_i32_1 = arith.constant 0 : i32
    return %arg0, %c0_i32, %c0_i32_0 : i32, i32, i32
  }
  func.func @transform_12(%arg0: i32, %arg1: memref<22xi32, #tpu.memory_space<smem>>, %arg2: memref<22xi32, #tpu.memory_space<smem>>) -> (i32, i32, i32) {
    %c0_i32 = arith.constant 0 : i32
    %c0_i32_0 = arith.constant 0 : i32
    %c0_i32_1 = arith.constant 0 : i32
    return %arg0, %c0_i32, %c0_i32_0 : i32, i32, i32
  }
  func.func @transform_13(%arg0: i32, %arg1: memref<22xi32, #tpu.memory_space<smem>>, %arg2: memref<22xi32, #tpu.memory_space<smem>>) -> (i32, i32, i32) {
    %c0_i32 = arith.constant 0 : i32
    %c0_i32_0 = arith.constant 0 : i32
    %c0_i32_1 = arith.constant 0 : i32
    return %arg0, %c0_i32, %c0_i32_0 : i32, i32, i32
  }
  func.func @transform_14(%arg0: i32, %arg1: memref<22xi32, #tpu.memory_space<smem>>, %arg2: memref<22xi32, #tpu.memory_space<smem>>) -> (i32, i32, i32) {
    %c0_i32 = arith.constant 0 : i32
    %c0_i32_0 = arith.constant 0 : i32
    %c0_i32_1 = arith.constant 0 : i32
    return %arg0, %c0_i32, %c0_i32_0 : i32, i32, i32
  }
  func.func @transform_15(%arg0: i32, %arg1: memref<22xi32, #tpu.memory_space<smem>>, %arg2: memref<22xi32, #tpu.memory_space<smem>>) -> (i32, i32, i32) {
    %c0_i32 = arith.constant 0 : i32
    %c0_i32_0 = arith.constant 0 : i32
    %c0_i32_1 = arith.constant 0 : i32
    return %arg0, %c0_i32, %c0_i32_0 : i32, i32, i32
  }
  func.func @transform_16(%arg0: i32, %arg1: memref<22xi32, #tpu.memory_space<smem>>, %arg2: memref<22xi32, #tpu.memory_space<smem>>) -> (i32, i32) {
    %c0_i32 = arith.constant 0 : i32
    %c0_i32_0 = arith.constant 0 : i32
    %c0_i32_1 = arith.constant 0 : i32
    return %c0_i32, %c0_i32_0 : i32, i32
  }
  func.func @transform_17(%arg0: i32, %arg1: memref<22xi32, #tpu.memory_space<smem>>, %arg2: memref<22xi32, #tpu.memory_space<smem>>) -> (i32, i32) {
    %c0_i32 = arith.constant 0 : i32
    %c0_i32_0 = arith.constant 0 : i32
    %c0_i32_1 = arith.constant 0 : i32
    return %c0_i32, %c0_i32_0 : i32, i32
  }
}

</mosaic_0001>

<llo_original>
// kernel: forward.3
$region0: #{forward.3}
  #allocation0 [shape = 'u32[]', space=smem, size = 0x4, offset = 0x4, fixed_abs, tag = 'smem constant byte address 0x4 - core index']
  #allocation1 [shape = 'u32[144,128]{1,0:T(1,128)}', space=vmem, size = 0x12000, scoped, tag = 'internal scratch']
  %s0 = inlined_call_operand.vmem [shape: bf16[10,128], index: 0, kind: input, shape index: {}]
  %s1 = inlined_call_operand.vmem [shape: bf16[22,128], index: 1, kind: input, shape index: {}]
  %s2 = inlined_call_operand.vmem [shape: s32[1,22], index: 2, kind: input, shape index: {}]
  %s3 = inlined_call_operand.vmem [shape: f32[2,10], index: 3, kind: input, shape index: {}]
  %s4 = inlined_call_operand.vmem [shape: bf16[256,128], index: 4, kind: input, shape index: {}]
  %s5 = inlined_call_operand.vmem [shape: f32[1,128], index: 5, kind: input, shape index: {}]
  %s6 = inlined_call_operand.vmem [shape: f32[1,128], index: 6, kind: input, shape index: {}]
  %s7 = inlined_call_operand.vmem [shape: f32[1,128], index: 7, kind: input, shape index: {}]
  %s8 = inlined_call_operand.vmem [shape: bf16[128,128], index: 8, kind: input, shape index: {}]
  %s9 = inlined_call_operand.vmem [shape: f32[1,128], index: 9, kind: input, shape index: {}]
  %s10 = inlined_call_operand.vmem [shape: f32[1,128], index: 10, kind: input, shape index: {}]
  %s11 = inlined_call_operand.vmem [shape: f32[1,128], index: 11, kind: input, shape index: {}]
  %s12 = inlined_call_operand.vmem [shape: bf16[128,2], index: 12, kind: input, shape index: {}]
  %s13 = inlined_call_operand.vmem [shape: f32[1,2], index: 13, kind: input, shape index: {}]
  %s14 = inlined_call_operand.hbm [shape: f32[2,2], index: 14, kind: output, shape index: {}]
  %s15 = sld [smem:[#allocation0]]
  $region66: #{forward.3} parent=0
    _
  %s17 = ssub.s32 1, %s15
  %s18 = scalar_select 0, %s17, %s15
  $region1: #{forward.3} parent=0
    #allocation2 [shape = 'u8[1024]{0}', space=vmem, size = 0x400, scoped, tag = 'output window, operand 0, single buffered']
    #allocation3 [shape = 's32[1]{0}', space=sflag, size = 0x4, scoped, tag = 'scoped memory for forward.3']
    %19 = vsyncpa [#allocation3], 0
    // Predicated region
    $region2: #{forward.3} parent=1 // pred_check
      _
    $region3: #{forward.3} parent=1 // pred_check_branch
      %21 = sbr.rel (0) target = $region5
    $region4: #{forward.3} parent=1 // pred_region
      _
    $region5: #{forward.3} parent=1 // pred_fallthru
      _
    // Predicated region
    $region6: #{forward.3} parent=1 // pred_check
      _
    $region7: #{forward.3} parent=1 // pred_check_branch
      %23 = sbr.rel (0) target = $region9
    $region8: #{forward.3} parent=1 // pred_region
      _
    $region9: #{forward.3} parent=1 // pred_fallthru
      _
    // Predicated region
    $region10: #{forward.3} parent=1 // pred_check
      _
    $region11: #{forward.3} parent=1 // pred_check_branch
      %25 = sbr.rel (0) target = $region13
    $region12: #{forward.3} parent=1 // pred_region
      _
    $region13: #{forward.3} parent=1 // pred_fallthru
      _
    // Predicated region
    $region14: #{forward.3} parent=1 // pred_check
      _
    $region15: #{forward.3} parent=1 // pred_check_branch
      %27 = sbr.rel (0) target = $region17
    $region16: #{forward.3} parent=1 // pred_region
      _
    $region17: #{forward.3} parent=1 // pred_fallthru
      _
    // Predicated region
    $region18: #{forward.3} parent=1 // pred_check
      _
    $region19: #{forward.3} parent=1 // pred_check_branch
      %29 = sbr.rel (0) target = $region21
    $region20: #{forward.3} parent=1 // pred_region
      _
    $region21: #{forward.3} parent=1 // pred_fallthru
      _
    // Predicated region
    $region22: #{forward.3} parent=1 // pred_check
      _
    $region23: #{forward.3} parent=1 // pred_check_branch
      %31 = sbr.rel (0) target = $region25
    $region24: #{forward.3} parent=1 // pred_region
      _
    $region25: #{forward.3} parent=1 // pred_fallthru
      _
    // Predicated region
    $region26: #{forward.3} parent=1 // pred_check
      _
    $region27: #{forward.3} parent=1 // pred_check_branch
      %33 = sbr.rel (0) target = $region29
    $region28: #{forward.3} parent=1 // pred_region
      _
    $region29: #{forward.3} parent=1 // pred_fallthru
      _
    // Predicated region
    $region30: #{forward.3} parent=1 // pred_check
      _
    $region31: #{forward.3} parent=1 // pred_check_branch
      %35 = sbr.rel (0) target = $region33
    $region32: #{forward.3} parent=1 // pred_region
      _
    $region33: #{forward.3} parent=1 // pred_fallthru
      _
    // Predicated region
    $region34: #{forward.3} parent=1 // pred_check
      _
    $region35: #{forward.3} parent=1 // pred_check_branch
      %37 = sbr.rel (0) target = $region37
    $region36: #{forward.3} parent=1 // pred_region
      _
    $region37: #{forward.3} parent=1 // pred_fallthru
      _
    // Predicated region
    $region38: #{forward.3} parent=1 // pred_check
      _
    $region39: #{forward.3} parent=1 // pred_check_branch
      %39 = sbr.rel (0) target = $region41
    $region40: #{forward.3} parent=1 // pred_region
      _
    $region41: #{forward.3} parent=1 // pred_fallthru
      _
    // Predicated region
    $region42: #{forward.3} parent=1 // pred_check
      _
    $region43: #{forward.3} parent=1 // pred_check_branch
      %41 = sbr.rel (0) target = $region45
    $region44: #{forward.3} parent=1 // pred_region
      _
    $region45: #{forward.3} parent=1 // pred_fallthru
      _
    // Predicated region
    $region46: #{forward.3} parent=1 // pred_check
      _
    $region47: #{forward.3} parent=1 // pred_check_branch
      %43 = sbr.rel (0) target = $region49
    $region48: #{forward.3} parent=1 // pred_region
      _
    $region49: #{forward.3} parent=1 // pred_fallthru
      _
    // Predicated region
    $region50: #{forward.3} parent=1 // pred_check
      _
    $region51: #{forward.3} parent=1 // pred_check_branch
      %45 = sbr.rel (0) target = $region53
    $region52: #{forward.3} parent=1 // pred_region
      _
    $region53: #{forward.3} parent=1 // pred_fallthru
      _
    // Predicated region
    $region54: #{forward.3} parent=1 // pred_check
      _
    $region55: #{forward.3} parent=1 // pred_check_branch
      %47 = sbr.rel (0) target = $region57
    $region56: #{forward.3} parent=1 // pred_region
      _
    $region57: #{forward.3} parent=1 // pred_fallthru
      _
    %v49 = vld [vmem:[%s0] sm:$0xf]
    %v50 = vld [vmem:[%s0 + $0x4] sm:$0x1]
    %v51 = vld [vmem:[%s1] sm:$0xf]
    %v52 = vld [vmem:[%s1 + $0x4] sm:$0xf]
    %v53 = vld [vmem:[%s1 + $0x8] sm:$0x7]
    %v54 = vld [vmem:[%s2] sm:$0x1]
    %v55 = vlaneseq
    %v56 = vshrl.u32 %v55, 7
    %v57 = vadd.s32 %v56, 8
    %v58 = vlaneseq
    %v59 = vshrl.u32 %v58, 7
    %v60 = vsub.s32 0, %v59
    %v61 = vrot.slane %v54, %v60
    %vm62 = vcmp.eq.s32.totalorder %v56, %v61
    %vm63 = vcmp.eq.s32.totalorder %v57, %v61
    %v64 = vsel %vm62, 1, 0
    %v65 = vsel %vm63, 1, 0
    %v66 = vcvt.s32.f32 %v64
    %v67 = vcvt.s32.f32 %v65
    %v68 = vpack.c.bf16 %v67, %v66
    %v72 = vunpack.c.l.b16 %v51
    %v73 = vunpack.c.l.b16 %v52
    %v74 = vunpack.c.l.b16 %v53
    %v75 = vpack.c.b16 %v73, %v72
    %v76 = vpack.c.b16 %v74, %v74
    %vm78 = vcmask 179200
    %v80 = vsel %vm78, %v68, 0
    %vm82 = vcmask 1042432
    %v84 = vsel %vm82, %v76, 0
    %86 = vmatprep.subr.bf16.mxu0 0
    %87 = vmatpush1.bf16.msra.mxu0 0
    %88 = vmatprep.subr.bf16.mxu0 0
    %89 = vmatpush1.bf16.msra.mxu0 0
    %90 = vmatprep.subr.bf16.mxu0 0
    %91 = vmatpush1.bf16.msra.mxu0 0
    %92 = vmatprep.subr.bf16.mxu0 0
    %93 = vmatpush1.bf16.msra.mxu0 0
    %94 = vmatprep.subr.bf16.mxu0 0
    %95 = vmatpush1.bf16.msra.mxu0 0
    %96 = vmatprep.subr.bf16.mxu0 0
    %97 = vmatpush1.bf16.msra.mxu0 0
    %98 = vmatprep.subr.bf16.mxu0 0
    %99 = vmatpush1.bf16.msra.mxu0 %v84
    %100 = vmatprep.subr.bf16.mxu0 0
    %101 = vmatpush1.bf16.msra.mxu0 %v75
    %102 = vmatprep.subr.bf16.mxu0 0
    %103 = vmatpush2.bf16.msra.mxu0 0
    %104 = vmatprep.subr.bf16.mxu0 0
    %105 = vmatpush2.bf16.msra.mxu0 0
    %106 = vmatprep.subr.bf16.mxu0 0
    %107 = vmatpush2.bf16.msra.mxu0 0
    %108 = vmatprep.subr.bf16.mxu0 0
    %109 = vmatpush2.bf16.msra.mxu0 0
    %110 = vmatprep.subr.bf16.mxu0 0
    %111 = vmatpush2.bf16.msra.mxu0 0
    %112 = vmatprep.subr.bf16.mxu0 0
    %113 = vmatpush2.bf16.msra.mxu0 0
    %114 = vmatprep.subr.bf16.mxu0 0
    %115 = vmatpush2.bf16.msra.mxu0 0
    %116 = vmatprep.subr.bf16.mxu0 0
    %117 = vmatpush2.bf16.msra.mxu0 0
    %118 = vmatprep.mubr.bf16.mxu0 0
    %119 = vmatmul.mubr.bf16.gmra.mxu0 %v80
    %v120 = vpop.f32.mrf.mxu0
    %v121 = vadd.f32 0.0, %v120
    %v122 = vpop.f32.mrf.mxu0
    %v123 = vpop.f32.mrf.mxu0
    %v124 = vadd.f32 0.0, %v123
    %v125 = vpop.f32.mrf.mxu0
    %126 = vdwg.mxu0
    %v127 = vld [vmem:[%s3] sm:$0x3]
    %v128 = vpack.c.bf16 %v127, %v127
    %v131 = vunpack.c.l.b16 %v49
    %v132 = vunpack.c.l.b16 %v50
    %v133 = vpack.c.b16 %v132, %v131
    %vm134 = vcmask 80896
    %v136 = vsel %vm134, %v128, 0
    %vm138 = vcmask 1044480
    %v140 = vsel %vm138, %v133, 0
    %142 = vmatprep.subr.bf16.mxu0 0
    %143 = vmatpush1.bf16.msra.mxu0 0
    %144 = vmatprep.subr.bf16.mxu0 0
    %145 = vmatpush1.bf16.msra.mxu0 0
    %146 = vmatprep.subr.bf16.mxu0 0
    %147 = vmatpush1.bf16.msra.mxu0 0
    %148 = vmatprep.subr.bf16.mxu0 0
    %149 = vmatpush1.bf16.msra.mxu0 0
    %150 = vmatprep.subr.bf16.mxu0 0
    %151 = vmatpush1.bf16.msra.mxu0 0
    %152 = vmatprep.subr.bf16.mxu0 0
    %153 = vmatpush1.bf16.msra.mxu0 0
    %154 = vmatprep.subr.bf16.mxu0 0
    %155 = vmatpush1.bf16.msra.mxu0 0
    %156 = vmatprep.subr.bf16.mxu0 0
    %157 = vmatpush1.bf16.msra.mxu0 %v140
    %158 = vmatprep.subr.bf16.mxu0 0
    %159 = vmatpush2.bf16.msra.mxu0 0
    %160 = vmatprep.subr.bf16.mxu0 0
    %161 = vmatpush2.bf16.msra.mxu0 0
    %162 = vmatprep.subr.bf16.mxu0 0
    %163 = vmatpush2.bf16.msra.mxu0 0
    %164 = vmatprep.subr.bf16.mxu0 0
    %165 = vmatpush2.bf16.msra.mxu0 0
    %166 = vmatprep.subr.bf16.mxu0 0
    %167 = vmatpush2.bf16.msra.mxu0 0
    %168 = vmatprep.subr.bf16.mxu0 0
    %169 = vmatpush2.bf16.msra.mxu0 0
    %170 = vmatprep.subr.bf16.mxu0 0
    %171 = vmatpush2.bf16.msra.mxu0 0
    %172 = vmatprep.subr.bf16.mxu0 0
    %173 = vmatpush2.bf16.msra.mxu0 0
    %174 = vmatprep.mubr.bf16.mxu0 0
    %175 = vmatmul.mubr.bf16.gmra.mxu0 %v136
    %v176 = vpop.f32.mrf.mxu0
    %v177 = vadd.f32 0.0, %v176
    %v178 = vpop.f32.mrf.mxu0
    %v179 = vpop.f32.mrf.mxu0
    %v180 = vpop.f32.mrf.mxu0
    %181 = vdwg.mxu0
    %v182 = vpack.c.bf16 %v124, %v121
    %v184 = vsel %vm138, %v182, 0
    %186 = vmatprep.subr.bf16.mxu0 0
    %187 = vmatpush1.bf16.msra.mxu0 0
    %188 = vmatprep.subr.bf16.mxu0 0
    %189 = vmatpush1.bf16.msra.mxu0 0
    %190 = vmatprep.subr.bf16.mxu0 0
    %191 = vmatpush1.bf16.msra.mxu0 0
    %192 = vmatprep.subr.bf16.mxu0 0
    %193 = vmatpush1.bf16.msra.mxu0 0
    %194 = vmatprep.subr.bf16.mxu0 0
    %195 = vmatpush1.bf16.msra.mxu0 0
    %196 = vmatprep.subr.bf16.mxu0 0
    %197 = vmatpush1.bf16.msra.mxu0 0
    %198 = vmatprep.subr.bf16.mxu0 0
    %199 = vmatpush1.bf16.msra.mxu0 0
    %200 = vmatprep.subr.bf16.mxu0 0
    %201 = vmatpush1.bf16.msra.mxu0 %v184
    %202 = vmatprep.subr.bf16.mxu0 0
    %203 = vmatpush2.bf16.msra.mxu0 0
    %204 = vmatprep.subr.bf16.mxu0 0
    %205 = vmatpush2.bf16.msra.mxu0 0
    %206 = vmatprep.subr.bf16.mxu0 0
    %207 = vmatpush2.bf16.msra.mxu0 0
    %208 = vmatprep.subr.bf16.mxu0 0
    %209 = vmatpush2.bf16.msra.mxu0 0
    %210 = vmatprep.subr.bf16.mxu0 0
    %211 = vmatpush2.bf16.msra.mxu0 0
    %212 = vmatprep.subr.bf16.mxu0 0
    %213 = vmatpush2.bf16.msra.mxu0 0
    %214 = vmatprep.subr.bf16.mxu0 0
    %215 = vmatpush2.bf16.msra.mxu0 0
    %216 = vmatprep.subr.bf16.mxu0 0
    %217 = vmatpush2.bf16.msra.mxu0 0
    %218 = vmatprep.mubr.bf16.mxu0 0
    %219 = vmatmul.mubr.bf16.gmra.mxu0 %v136
    %v220 = vpop.f32.mrf.mxu0
    %v221 = vadd.f32 0.0, %v220
    %v222 = vpop.f32.mrf.mxu0
    %v223 = vpop.f32.mrf.mxu0
    %v224 = vpop.f32.mrf.mxu0
    %225 = vdwg.mxu0
    %v226 = vld [vmem:[%s4] sm:$0xf]
    %v227 = vld [vmem:[%s4 + $0x4] sm:$0xf]
    %v228 = vld [vmem:[%s4 + $0x8] sm:$0xf]
    %v229 = vld [vmem:[%s4 + $0xc] sm:$0xf]
    %v230 = vld [vmem:[%s4 + $0x10] sm:$0xf]
    %v231 = vld [vmem:[%s4 + $0x14] sm:$0xf]
    %v232 = vld [vmem:[%s4 + $0x18] sm:$0xf]
    %v233 = vld [vmem:[%s4 + $0x1c] sm:$0xf]
    %v234 = vld [vmem:[%s4 + $0x20] sm:$0xf]
    %v235 = vld [vmem:[%s4 + $0x24] sm:$0xf]
    %v236 = vld [vmem:[%s4 + $0x28] sm:$0xf]
    %v237 = vld [vmem:[%s4 + $0x2c] sm:$0xf]
    %v238 = vld [vmem:[%s4 + $0x30] sm:$0xf]
    %v239 = vld [vmem:[%s4 + $0x34] sm:$0xf]
    %v240 = vld [vmem:[%s4 + $0x38] sm:$0xf]
    %v241 = vld [vmem:[%s4 + $0x3c] sm:$0xf]
    %v242 = vld [vmem:[%s4 + $0x40] sm:$0xf]
    %v243 = vld [vmem:[%s4 + $0x44] sm:$0xf]
    %v244 = vld [vmem:[%s4 + $0x48] sm:$0xf]
    %v245 = vld [vmem:[%s4 + $0x4c] sm:$0xf]
    %v246 = vld [vmem:[%s4 + $0x50] sm:$0xf]
    %v247 = vld [vmem:[%s4 + $0x54] sm:$0xf]
    %v248 = vld [vmem:[%s4 + $0x58] sm:$0xf]
    %v249 = vld [vmem:[%s4 + $0x5c] sm:$0xf]
    %v250 = vld [vmem:[%s4 + $0x60] sm:$0xf]
    %v251 = vld [vmem:[%s4 + $0x64] sm:$0xf]
    %v252 = vld [vmem:[%s4 + $0x68] sm:$0xf]
    %v253 = vld [vmem:[%s4 + $0x6c] sm:$0xf]
    %v254 = vld [vmem:[%s4 + $0x70] sm:$0xf]
    %v255 = vld [vmem:[%s4 + $0x74] sm:$0xf]
    %v256 = vld [vmem:[%s4 + $0x78] sm:$0xf]
    %v257 = vld [vmem:[%s4 + $0x7c] sm:$0xf]
    %v258 = vpack.c.bf16 %v177, %v177
    %v259 = vpack.c.bf16 %v221, %v221
    %v276 = vunpack.c.l.b16 %v242
    %v277 = vunpack.c.l.b16 %v243
    %v278 = vunpack.c.l.b16 %v244
    %v279 = vunpack.c.l.b16 %v245
    %v280 = vunpack.c.l.b16 %v246
    %v281 = vunpack.c.l.b16 %v247
    %v282 = vunpack.c.l.b16 %v248
    %v283 = vunpack.c.l.b16 %v249
    %v284 = vunpack.c.l.b16 %v250
    %v285 = vunpack.c.l.b16 %v251
    %v286 = vunpack.c.l.b16 %v252
    %v287 = vunpack.c.l.b16 %v253
    %v288 = vunpack.c.l.b16 %v254
    %v289 = vunpack.c.l.b16 %v255
    %v290 = vunpack.c.l.b16 %v256
    %v291 = vunpack.c.l.b16 %v257
    %v292 = vpack.c.b16 %v277, %v276
    %v293 = vpack.c.b16 %v279, %v278
    %v294 = vpack.c.b16 %v281, %v280
    %v295 = vpack.c.b16 %v283, %v282
    %v296 = vpack.c.b16 %v285, %v284
    %v297 = vpack.c.b16 %v287, %v286
    %v298 = vpack.c.b16 %v289, %v288
    %v299 = vpack.c.b16 %v291, %v290
    %308 = vmatprep.subr.bf16.mxu0 0
    %309 = vmatpush1.bf16.msra.mxu0 %v299
    %310 = vmatprep.subr.bf16.mxu0 0
    %311 = vmatpush1.bf16.msra.mxu0 %v298
    %312 = vmatprep.subr.bf16.mxu0 0
    %313 = vmatpush1.bf16.msra.mxu0 %v297
    %314 = vmatprep.subr.bf16.mxu0 0
    %315 = vmatpush1.bf16.msra.mxu0 %v296
    %316 = vmatprep.subr.bf16.mxu0 0
    %317 = vmatpush1.bf16.msra.mxu0 %v295
    %318 = vmatprep.subr.bf16.mxu0 0
    %319 = vmatpush1.bf16.msra.mxu0 %v294
    %320 = vmatprep.subr.bf16.mxu0 0
    %321 = vmatpush1.bf16.msra.mxu0 %v293
    %322 = vmatprep.subr.bf16.mxu0 0
    %323 = vmatpush1.bf16.msra.mxu0 %v292
    %324 = vmatprep.subr.bf16.mxu0 0
    %325 = vmatpush2.bf16.msra.mxu0 0
    %326 = vmatprep.subr.bf16.mxu0 0
    %327 = vmatpush2.bf16.msra.mxu0 0
    %328 = vmatprep.subr.bf16.mxu0 0
    %329 = vmatpush2.bf16.msra.mxu0 0
    %330 = vmatprep.subr.bf16.mxu0 0
    %331 = vmatpush2.bf16.msra.mxu0 0
    %332 = vmatprep.subr.bf16.mxu0 0
    %333 = vmatpush2.bf16.msra.mxu0 0
    %334 = vmatprep.subr.bf16.mxu0 0
    %335 = vmatpush2.bf16.msra.mxu0 0
    %336 = vmatprep.subr.bf16.mxu0 0
    %337 = vmatpush2.bf16.msra.mxu0 0
    %338 = vmatprep.subr.bf16.mxu0 0
    %339 = vmatpush2.bf16.msra.mxu0 0
    %340 = vmatprep.mubr.bf16.mxu0 0
    %341 = vmatmul.mubr.bf16.gmra.mxu0 %v259
    %v342 = vpop.f32.mrf.mxu0
    %v343 = vadd.f32 0.0, %v342
    %v344 = vpop.f32.mrf.mxu0
    %v345 = vpop.f32.mrf.mxu0
    %v346 = vpop.f32.mrf.mxu0
    %347 = vdwg.mxu0
    %v364 = vunpack.c.l.b16 %v226
    %v365 = vunpack.c.l.b16 %v227
    %v366 = vunpack.c.l.b16 %v228
    %v367 = vunpack.c.l.b16 %v229
    %v368 = vunpack.c.l.b16 %v230
    %v369 = vunpack.c.l.b16 %v231
    %v370 = vunpack.c.l.b16 %v232
    %v371 = vunpack.c.l.b16 %v233
    %v372 = vunpack.c.l.b16 %v234
    %v373 = vunpack.c.l.b16 %v235
    %v374 = vunpack.c.l.b16 %v236
    %v375 = vunpack.c.l.b16 %v237
    %v376 = vunpack.c.l.b16 %v238
    %v377 = vunpack.c.l.b16 %v239
    %v378 = vunpack.c.l.b16 %v240
    %v379 = vunpack.c.l.b16 %v241
    %v380 = vpack.c.b16 %v365, %v364
    %v381 = vpack.c.b16 %v367, %v366
    %v382 = vpack.c.b16 %v369, %v368
    %v383 = vpack.c.b16 %v371, %v370
    %v384 = vpack.c.b16 %v373, %v372
    %v385 = vpack.c.b16 %v375, %v374
    %v386 = vpack.c.b16 %v377, %v376
    %v387 = vpack.c.b16 %v379, %v378
    %396 = vmatprep.subr.bf16.mxu0 0
    %397 = vmatpush1.bf16.msra.mxu0 %v387
    %398 = vmatprep.subr.bf16.mxu0 0
    %399 = vmatpush1.bf16.msra.mxu0 %v386
    %400 = vmatprep.subr.bf16.mxu0 0
    %401 = vmatpush1.bf16.msra.mxu0 %v385
    %402 = vmatprep.subr.bf16.mxu0 0
    %403 = vmatpush1.bf16.msra.mxu0 %v384
    %404 = vmatprep.subr.bf16.mxu0 0
    %405 = vmatpush1.bf16.msra.mxu0 %v383
    %406 = vmatprep.subr.bf16.mxu0 0
    %407 = vmatpush1.bf16.msra.mxu0 %v382
    %408 = vmatprep.subr.bf16.mxu0 0
    %409 = vmatpush1.bf16.msra.mxu0 %v381
    %410 = vmatprep.subr.bf16.mxu0 0
    %411 = vmatpush1.bf16.msra.mxu0 %v380
    %412 = vmatprep.subr.bf16.mxu0 0
    %413 = vmatpush2.bf16.msra.mxu0 0
    %414 = vmatprep.subr.bf16.mxu0 0
    %415 = vmatpush2.bf16.msra.mxu0 0
    %416 = vmatprep.subr.bf16.mxu0 0
    %417 = vmatpush2.bf16.msra.mxu0 0
    %418 = vmatprep.subr.bf16.mxu0 0
    %419 = vmatpush2.bf16.msra.mxu0 0
    %420 = vmatprep.subr.bf16.mxu0 0
    %421 = vmatpush2.bf16.msra.mxu0 0
    %422 = vmatprep.subr.bf16.mxu0 0
    %423 = vmatpush2.bf16.msra.mxu0 0
    %424 = vmatprep.subr.bf16.mxu0 0
    %425 = vmatpush2.bf16.msra.mxu0 0
    %426 = vmatprep.subr.bf16.mxu0 0
    %427 = vmatpush2.bf16.msra.mxu0 0
    %428 = vmatprep.mubr.bf16.mxu0 0
    %429 = vmatmul.mubr.bf16.gmra.mxu0 %v258
    %v430 = vpop.f32.mrf.mxu0
    %v431 = vadd.f32 %v343, %v430
    %v432 = vpop.f32.mrf.mxu0
    %v433 = vpop.f32.mrf.mxu0
    %v434 = vpop.f32.mrf.mxu0
    %435 = vdwg.mxu0
    %v436 = vld [vmem:[%s5] sm:$0x1]
    %v438 = vlaneseq
    %v439 = vshrl.u32 %v438, 7
    %v440 = vsub.s32 0, %v439
    %v441 = vrot.slane %v436, %v440
    %v443 = vadd.f32 %v431, %v441
    %v444 = vld [vmem:[%s6] sm:$0x1]
    %v445 = vld [vmem:[%s7] sm:$0x1]
    %vm446 = vcmask 1041408
    %v447 = vsel %vm446, %v443, 0.0
    %v448 = vrot.slane %v447, 4
    %v449 = vadd.f32 %v447, %v448
    %v450 = vrot.slane %v449, 2
    %v451 = vadd.f32 %v449, %v450
    %v452 = vrot.slane %v451, 1
    %v453 = vadd.f32 %v451, %v452
    %v454 = vrcp.pop 2.0
    %v455 = vmul.f32 %v453, %v454
    %v456 = vsub.f32 %v443, %v455
    %v457 = vmul.f32 %v456, %v456
    %v458 = vsel %vm446, %v457, 0.0
    %v459 = vrot.slane %v458, 4
    %v460 = vadd.f32 %v458, %v459
    %v461 = vrot.slane %v460, 2
    %v462 = vadd.f32 %v460, %v461
    %v463 = vrot.slane %v462, 1
    %v464 = vadd.f32 %v462, %v463
    %v465 = vmul.f32 %v464, %v454
    %v466 = vadd.f32 %v465, 1e-05
    %v467 = vrsqrt.pop %v466
    %v468 = vmul.f32 %v456, %v467
    %v470 = vlaneseq
    %v471 = vshrl.u32 %v470, 7
    %v472 = vsub.s32 0, %v471
    %v473 = vrot.slane %v444, %v472
    %v475 = vmul.f32 %v468, %v473
    %v477 = vlaneseq
    %v478 = vshrl.u32 %v477, 7
    %v479 = vsub.s32 0, %v478
    %v480 = vrot.slane %v445, %v479
    %v482 = vadd.f32 %v475, %v480
    %v483 = vmax.f32 %v482, 0.0
    %v484 = vpack.c.bf16 %v483, %v483
    %v485 = vld [vmem:[%s8] sm:$0xf]
    %v486 = vld [vmem:[%s8 + $0x4] sm:$0xf]
    %v487 = vld [vmem:[%s8 + $0x8] sm:$0xf]
    %v488 = vld [vmem:[%s8 + $0xc] sm:$0xf]
    %v489 = vld [vmem:[%s8 + $0x10] sm:$0xf]
    %v490 = vld [vmem:[%s8 + $0x14] sm:$0xf]
    %v491 = vld [vmem:[%s8 + $0x18] sm:$0xf]
    %v492 = vld [vmem:[%s8 + $0x1c] sm:$0xf]
    %v493 = vld [vmem:[%s8 + $0x20] sm:$0xf]
    %v494 = vld [vmem:[%s8 + $0x24] sm:$0xf]
    %v495 = vld [vmem:[%s8 + $0x28] sm:$0xf]
    %v496 = vld [vmem:[%s8 + $0x2c] sm:$0xf]
    %v497 = vld [vmem:[%s8 + $0x30] sm:$0xf]
    %v498 = vld [vmem:[%s8 + $0x34] sm:$0xf]
    %v499 = vld [vmem:[%s8 + $0x38] sm:$0xf]
    %v500 = vld [vmem:[%s8 + $0x3c] sm:$0xf]
    %v501 = vld [vmem:[%s9] sm:$0x1]
    %v503 = vlaneseq
    %v504 = vshrl.u32 %v503, 7
    %v505 = vsub.s32 0, %v504
    %v506 = vrot.slane %v501, %v505
    %v524 = vunpack.c.l.b16 %v485
    %v525 = vunpack.c.l.b16 %v486
    %v526 = vunpack.c.l.b16 %v487
    %v527 = vunpack.c.l.b16 %v488
    %v528 = vunpack.c.l.b16 %v489
    %v529 = vunpack.c.l.b16 %v490
    %v530 = vunpack.c.l.b16 %v491
    %v531 = vunpack.c.l.b16 %v492
    %v532 = vunpack.c.l.b16 %v493
    %v533 = vunpack.c.l.b16 %v494
    %v534 = vunpack.c.l.b16 %v495
    %v535 = vunpack.c.l.b16 %v496
    %v536 = vunpack.c.l.b16 %v497
    %v537 = vunpack.c.l.b16 %v498
    %v538 = vunpack.c.l.b16 %v499
    %v539 = vunpack.c.l.b16 %v500
    %v540 = vpack.c.b16 %v525, %v524
    %v541 = vpack.c.b16 %v527, %v526
    %v542 = vpack.c.b16 %v529, %v528
    %v543 = vpack.c.b16 %v531, %v530
    %v544 = vpack.c.b16 %v533, %v532
    %v545 = vpack.c.b16 %v535, %v534
    %v546 = vpack.c.b16 %v537, %v536
    %v547 = vpack.c.b16 %v539, %v538
    %556 = vmatprep.subr.bf16.mxu0 0
    %557 = vmatpush1.bf16.msra.mxu0 %v547
    %558 = vmatprep.subr.bf16.mxu0 0
    %559 = vmatpush1.bf16.msra.mxu0 %v546
    %560 = vmatprep.subr.bf16.mxu0 0
    %561 = vmatpush1.bf16.msra.mxu0 %v545
    %562 = vmatprep.subr.bf16.mxu0 0
    %563 = vmatpush1.bf16.msra.mxu0 %v544
    %564 = vmatprep.subr.bf16.mxu0 0
    %565 = vmatpush1.bf16.msra.mxu0 %v543
    %566 = vmatprep.subr.bf16.mxu0 0
    %567 = vmatpush1.bf16.msra.mxu0 %v542
    %568 = vmatprep.subr.bf16.mxu0 0
    %569 = vmatpush1.bf16.msra.mxu0 %v541
    %570 = vmatprep.subr.bf16.mxu0 0
    %571 = vmatpush1.bf16.msra.mxu0 %v540
    %572 = vmatprep.subr.bf16.mxu0 0
    %573 = vmatpush2.bf16.msra.mxu0 0
    %574 = vmatprep.subr.bf16.mxu0 0
    %575 = vmatpush2.bf16.msra.mxu0 0
    %576 = vmatprep.subr.bf16.mxu0 0
    %577 = vmatpush2.bf16.msra.mxu0 0
    %578 = vmatprep.subr.bf16.mxu0 0
    %579 = vmatpush2.bf16.msra.mxu0 0
    %580 = vmatprep.subr.bf16.mxu0 0
    %581 = vmatpush2.bf16.msra.mxu0 0
    %582 = vmatprep.subr.bf16.mxu0 0
    %583 = vmatpush2.bf16.msra.mxu0 0
    %584 = vmatprep.subr.bf16.mxu0 0
    %585 = vmatpush2.bf16.msra.mxu0 0
    %586 = vmatprep.subr.bf16.mxu0 0
    %587 = vmatpush2.bf16.msra.mxu0 0
    %588 = vmatprep.mubr.bf16.mxu0 0
    %589 = vmatmul.mubr.bf16.gmra.mxu0 %v484
    %v590 = vpop.f32.mrf.mxu0
    %v591 = vadd.f32 %v506, %v590
    %v592 = vpop.f32.mrf.mxu0
    %v593 = vpop.f32.mrf.mxu0
    %v594 = vpop.f32.mrf.mxu0
    %595 = vdwg.mxu0
    %v596 = vld [vmem:[%s10] sm:$0x1]
    %v597 = vld [vmem:[%s11] sm:$0x1]
    %v598 = vsel %vm446, %v591, 0.0
    %v599 = vrot.slane %v598, 4
    %v600 = vadd.f32 %v598, %v599
    %v601 = vrot.slane %v600, 2
    %v602 = vadd.f32 %v600, %v601
    %v603 = vrot.slane %v602, 1
    %v604 = vadd.f32 %v602, %v603
    %v605 = vmul.f32 %v604, %v454
    %v606 = vsub.f32 %v591, %v605
    %v607 = vmul.f32 %v606, %v606
    %v608 = vsel %vm446, %v607, 0.0
    %v609 = vrot.slane %v608, 4
    %v610 = vadd.f32 %v608, %v609
    %v611 = vrot.slane %v610, 2
    %v612 = vadd.f32 %v610, %v611
    %v613 = vrot.slane %v612, 1
    %v614 = vadd.f32 %v612, %v613
    %v615 = vmul.f32 %v614, %v454
    %v616 = vadd.f32 %v615, 1e-05
    %v617 = vrsqrt.pop %v616
    %v618 = vmul.f32 %v606, %v617
    %v620 = vlaneseq
    %v621 = vshrl.u32 %v620, 7
    %v622 = vsub.s32 0, %v621
    %v623 = vrot.slane %v596, %v622
    %v625 = vmul.f32 %v618, %v623
    %v627 = vlaneseq
    %v628 = vshrl.u32 %v627, 7
    %v629 = vsub.s32 0, %v628
    %v630 = vrot.slane %v597, %v629
    %v632 = vadd.f32 %v625, %v630
    %v633 = vmax.f32 %v632, 0.0
    %v634 = vpack.c.bf16 %v633, %v633
    %v635 = vld [vmem:[%s12] sm:$0xf]
    %v636 = vld [vmem:[%s12 + $0x4] sm:$0xf]
    %v637 = vld [vmem:[%s12 + $0x8] sm:$0xf]
    %v638 = vld [vmem:[%s12 + $0xc] sm:$0xf]
    %v639 = vld [vmem:[%s12 + $0x10] sm:$0xf]
    %v640 = vld [vmem:[%s12 + $0x14] sm:$0xf]
    %v641 = vld [vmem:[%s12 + $0x18] sm:$0xf]
    %v642 = vld [vmem:[%s12 + $0x1c] sm:$0xf]
    %v643 = vld [vmem:[%s12 + $0x20] sm:$0xf]
    %v644 = vld [vmem:[%s12 + $0x24] sm:$0xf]
    %v645 = vld [vmem:[%s12 + $0x28] sm:$0xf]
    %v646 = vld [vmem:[%s12 + $0x2c] sm:$0xf]
    %v647 = vld [vmem:[%s12 + $0x30] sm:$0xf]
    %v648 = vld [vmem:[%s12 + $0x34] sm:$0xf]
    %v649 = vld [vmem:[%s12 + $0x38] sm:$0xf]
    %v650 = vld [vmem:[%s12 + $0x3c] sm:$0xf]
    %v651 = vld [vmem:[%s13] sm:$0x1]
    %v653 = vlaneseq
    %v654 = vshrl.u32 %v653, 7
    %v655 = vsub.s32 0, %v654
    %v656 = vrot.slane %v651, %v655
    %v674 = vunpack.c.l.b16 %v635
    %v675 = vunpack.c.l.b16 %v636
    %v676 = vunpack.c.l.b16 %v637
    %v677 = vunpack.c.l.b16 %v638
    %v678 = vunpack.c.l.b16 %v639
    %v679 = vunpack.c.l.b16 %v640
    %v680 = vunpack.c.l.b16 %v641
    %v681 = vunpack.c.l.b16 %v642
    %v682 = vunpack.c.l.b16 %v643
    %v683 = vunpack.c.l.b16 %v644
    %v684 = vunpack.c.l.b16 %v645
    %v685 = vunpack.c.l.b16 %v646
    %v686 = vunpack.c.l.b16 %v647
    %v687 = vunpack.c.l.b16 %v648
    %v688 = vunpack.c.l.b16 %v649
    %v689 = vunpack.c.l.b16 %v650
    %v690 = vpack.c.b16 %v675, %v674
    %v691 = vpack.c.b16 %v677, %v676
    %v692 = vpack.c.b16 %v679, %v678
    %v693 = vpack.c.b16 %v681, %v680
    %v694 = vpack.c.b16 %v683, %v682
    %v695 = vpack.c.b16 %v685, %v684
    %v696 = vpack.c.b16 %v687, %v686
    %v697 = vpack.c.b16 %v689, %v688
    %706 = vmatprep.subr.bf16.mxu0 0
    %707 = vmatpush1.bf16.msra.mxu0 %v697
    %708 = vmatprep.subr.bf16.mxu0 0
    %709 = vmatpush1.bf16.msra.mxu0 %v696
    %710 = vmatprep.subr.bf16.mxu0 0
    %711 = vmatpush1.bf16.msra.mxu0 %v695
    %712 = vmatprep.subr.bf16.mxu0 0
    %713 = vmatpush1.bf16.msra.mxu0 %v694
    %714 = vmatprep.subr.bf16.mxu0 0
    %715 = vmatpush1.bf16.msra.mxu0 %v693
    %716 = vmatprep.subr.bf16.mxu0 0
    %717 = vmatpush1.bf16.msra.mxu0 %v692
    %718 = vmatprep.subr.bf16.mxu0 0
    %719 = vmatpush1.bf16.msra.mxu0 %v691
    %720 = vmatprep.subr.bf16.mxu0 0
    %721 = vmatpush1.bf16.msra.mxu0 %v690
    %722 = vmatprep.subr.bf16.mxu0 0
    %723 = vmatpush2.bf16.msra.mxu0 0
    %724 = vmatprep.subr.bf16.mxu0 0
    %725 = vmatpush2.bf16.msra.mxu0 0
    %726 = vmatprep.subr.bf16.mxu0 0
    %727 = vmatpush2.bf16.msra.mxu0 0
    %728 = vmatprep.subr.bf16.mxu0 0
    %729 = vmatpush2.bf16.msra.mxu0 0
    %730 = vmatprep.subr.bf16.mxu0 0
    %731 = vmatpush2.bf16.msra.mxu0 0
    %732 = vmatprep.subr.bf16.mxu0 0
    %733 = vmatpush2.bf16.msra.mxu0 0
    %734 = vmatprep.subr.bf16.mxu0 0
    %735 = vmatpush2.bf16.msra.mxu0 0
    %736 = vmatprep.subr.bf16.mxu0 0
    %737 = vmatpush2.bf16.msra.mxu0 0
    %738 = vmatprep.mubr.bf16.mxu0 0
    %739 = vmatmul.mubr.bf16.gmra.mxu0 %v634
    %v740 = vpop.f32.mrf.mxu0
    %v741 = vadd.f32 %v656, %v740
    %v742 = vpop.f32.mrf.mxu0
    %v743 = vpop.f32.mrf.mxu0
    %v744 = vpop.f32.mrf.mxu0
    %745 = vdwg.mxu0
    %vm746 = vcmask 9216
    %747 = vst.msk [vmem:[#allocation2] sm:$0x3] %vm746, %v741
    // Predicated region
    $region58: #{forward.3} parent=1 // pred_check
      _
    $region59: #{forward.3} parent=1 // pred_check_branch
      %749 = sbr.rel (0) target = $region61
    $region60: #{forward.3} parent=1 // pred_region
      %s751 = ssub.s32 32, 32
      %752 = vsyncadd [#allocation3], %s751
      %s754 = sshll.u32 [#allocation2], 4
      %s755 = int_to_ptr.vmem [resolvable:$true] %s754
      %757 = dma.vmem_to_hbm [thread:$0]  %s755, 32, %s14, [#allocation3]
    $region61: #{forward.3} parent=1 // pred_fallthru
      _
    // Predicated region
    $region62: #{forward.3} parent=1 // pred_check
      _
    $region63: #{forward.3} parent=1 // pred_check_branch
      %759 = sbr.rel (0) target = $region65
    $region64: #{forward.3} parent=1 // pred_region
      %760 = dma.done [#allocation3], 32
    $region65: #{forward.3} parent=1 // pred_fallthru
      _
    %761 = vsyncpa [#allocation3], 1

// kernel: forward.2
$region0: #{forward.2}
  #allocation0 [shape = 'u32[]', space=smem, size = 0x4, offset = 0x4, fixed_abs, tag = 'smem constant byte address 0x4 - core index']
  #allocation1 [shape = 'u32[144,128]{1,0:T(1,128)}', space=vmem, size = 0x12000, scoped, tag = 'internal scratch']
  #allocation2 [shape = 'f32[10,128]{1,0:T(8,128)}', space=vmem, size = 0x2000, scoped, tag = 'scratch operand']
  #allocation3 [shape = 'f32[22,128]{1,0:T(8,128)}', space=vmem, size = 0x3000, scoped, tag = 'scratch operand']
  #allocation4 [shape = 'f32[22,128]{1,0:T(8,128)}', space=vmem, size = 0x3000, scoped, tag = 'scratch operand']
  #allocation5 [shape = 'f32[22,128]{1,0:T(8,128)}', space=vmem, size = 0x3000, scoped, tag = 'scratch operand']
  #allocation6 [shape = 'f32[10,128]{1,0:T(8,128)}', space=vmem, size = 0x2000, scoped, tag = 'scratch operand']
  #allocation7 [shape = 's32[1]{0}', space=sflag, size = 0x4, scoped, tag = 'scoped memory for forward.2']
  #allocation8 [shape = 'u8[512]{0}', space=smem, size = 0x200, scoped, tag = 'prefetched SMEM operand 0']
  #allocation9 [shape = 'u8[512]{0}', space=smem, size = 0x200, scoped, tag = 'prefetched SMEM operand 1']
  %s0 = inlined_call_operand.vmem [shape: s32[22], index: 0, kind: input, shape index: {}]
  %s1 = inlined_call_operand.vmem [shape: s32[22], index: 1, kind: input, shape index: {}]
  %s2 = inlined_call_operand.vmem [shape: f32[10,128], index: 2, kind: input, shape index: {}]
  %s3 = inlined_call_operand.vmem [shape: f32[22,128], index: 3, kind: input, shape index: {}]
  %s4 = inlined_call_operand.vmem [shape: s32[1,22], index: 4, kind: input, shape index: {}]
  %s5 = inlined_call_operand.vmem [shape: f32[22,1], index: 5, kind: input, shape index: {}]
  %s6 = inlined_call_operand.hbm [shape: bf16[2,384,128], index: 6, kind: input, shape index: {}]
  %s7 = inlined_call_operand.vmem [shape: f32[2,1,128], index: 7, kind: input, shape index: {}]
  %s8 = inlined_call_operand.vmem [shape: f32[2,1,128], index: 8, kind: input, shape index: {}]
  %s9 = inlined_call_operand.hbm [shape: bf16[2,128,128], index: 9, kind: input, shape index: {}]
  %s10 = inlined_call_operand.vmem [shape: f32[2,1,128], index: 10, kind: input, shape index: {}]
  %s11 = inlined_call_operand.vmem [shape: f32[2,1,128], index: 11, kind: input, shape index: {}]
  %s12 = inlined_call_operand.vmem [shape: bf16[2,512,128], index: 12, kind: input, shape index: {}]
  %s13 = inlined_call_operand.vmem [shape: f32[2,1,128], index: 13, kind: input, shape index: {}]
  %s14 = inlined_call_operand.vmem [shape: f32[2,1,128], index: 14, kind: input, shape index: {}]
  %s15 = inlined_call_operand.hbm [shape: bf16[2,128,128], index: 15, kind: input, shape index: {}]
  %s16 = inlined_call_operand.vmem [shape: f32[2,1,128], index: 16, kind: input, shape index: {}]
  %s17 = inlined_call_operand.vmem [shape: f32[2,1,128], index: 17, kind: input, shape index: {}]
  %s18 = inlined_call_operand.vmem [shape: bf16[10,128], index: 18, kind: output, shape index: {0}]
  %s19 = inlined_call_operand.vmem [shape: bf16[22,128], index: 19, kind: output, shape index: {1}]
  %20 = xla_tuple %s18, %s19
  %s21 = sld [smem:[#allocation0]]
  $region125: #{forward.2} parent=0
    _
  %s23 = ssub.s32 1, %s21
  %s24 = scalar_select 0, %s23, %s21
  %s25 = sshll.u32 %s0, 4
  %s26 = int_to_ptr.vmem [resolvable:$true] %s25
  %28 = dma.vmem_to_smem %s26, 16, [#allocation8], [#allocation7]
  %s29 = sshll.u32 %s1, 4
  %s30 = int_to_ptr.vmem [resolvable:$true] %s29
  %32 = dma.vmem_to_smem %s30, 16, [#allocation9], [#allocation7]
  %33 = dma.done [#allocation7], 32
  %34 = sfence
  $region1: #{forward.2} parent=0
    #allocation10 [shape = 'u8[196608]{0}', space=vmem, size = 0x30000, scoped, tag = 'input window, operand 6']
    #allocation11 [shape = 's32[2]{0}', space=sflag, size = 0x8, scoped, tag = 'scoped memory for forward.2']
    #allocation12 [shape = 'u8[65536]{0}', space=vmem, size = 0x10000, scoped, tag = 'input window, operand 9']
    #allocation13 [shape = 's32[2]{0}', space=sflag, size = 0x8, scoped, tag = 'scoped memory for forward.2']
    #allocation14 [shape = 'u8[65536]{0}', space=vmem, size = 0x10000, scoped, tag = 'input window, operand 15']
    %35 = vsyncpa [#allocation11], 0
    %s36 = scalar_lea.sflag [#allocation11], 1
    %37 = vsyncpa %s36, 0
    %38 = vsyncpa [#allocation13], 0
    %s39 = scalar_lea.sflag [#allocation13], 1
    %40 = vsyncpa %s39, 0
    loop: start=0, step=1, limit=4
    $region2: #{forward.2} parent=1 // loop_pre_header
      _
    $region3: #{forward.2} parent=1 // loop_header
      %s42 = sphi 0, %s46
      %p43 = scmp.ge.s32.totalorder %s42, 4
      %s50 = sphi 0, %s50
      %s52 = sphi 0, %s50
      %s53 = sphi 0, %s52
      %s67 = sphi 0, %s53
      %s71 = sphi 0, %s71
      %s73 = sphi 0, %s71
      %s74 = sphi 0, %s73
      %s88 = sphi 0, %s74
      %s92 = sphi 0, %s92
      %s94 = sphi 0, %s92
      %s95 = sphi 0, %s94
      %s109 = sphi 0, %s95
      %s113 = sphi 0, %s113
      %s115 = sphi 0, %s113
      %s116 = sphi 0, %s115
      %s130 = sphi 0, %s116
      %s136 = sphi 0, %s138
      %s139 = sphi 0, %s136
      %s140 = sphi 0, %s139
      %s156 = sphi 0, %s140
      %s162 = sphi 0, %s164
      %s165 = sphi 0, %s162
      %s166 = sphi 0, %s165
      %s182 = sphi 0, %s166
      %s188 = sphi 0, %s190
      %s191 = sphi 0, %s188
      %s192 = sphi 0, %s191
      %s208 = sphi 0, %s192
      %s214 = sphi 0, %s216
      %s217 = sphi 0, %s214
      %s218 = sphi 0, %s217
      %s234 = sphi 0, %s218
      %s240 = sphi 0, %s242
      %s243 = sphi 0, %s240
      %s244 = sphi 0, %s243
      %s260 = sphi 0, %s244
      %s266 = sphi 0, %s268
      %s269 = sphi 0, %s266
      %s270 = sphi 0, %s269
      %s286 = sphi 0, %s270
      %s292 = sphi 0, %s294
      %s295 = sphi 0, %s292
      %s296 = sphi 0, %s295
      %s312 = sphi 0, %s296
      %s318 = sphi 0, %s320
      %s321 = sphi 0, %s318
      %s322 = sphi 0, %s321
      %s338 = sphi 0, %s322
      %s344 = sphi 0, %s346
      %s347 = sphi 0, %s344
      %s348 = sphi 0, %s347
      %s364 = sphi 0, %s348
      %s370 = sphi 0, %s372
      %s373 = sphi 0, %s370
      %s374 = sphi 0, %s373
      %s390 = sphi 0, %s374
      %s396 = sphi 0, %s398
      %s399 = sphi 0, %s396
      %s400 = sphi 0, %s399
      %s416 = sphi 0, %s400
      %s422 = sphi 0, %s424
      %s425 = sphi 0, %s422
      %s426 = sphi 0, %s425
      %s442 = sphi 0, %s426
      %s446 = sphi 0, %s446
      %s448 = sphi 0, %s446
      %s449 = sphi 0, %s448
      %s463 = sphi 0, %s449
      %s467 = sphi 0, %s467
      %s469 = sphi 0, %s467
      %s470 = sphi 0, %s469
      %s484 = sphi 0, %s470
    $region4: #{forward.2} parent=1 // loop_header_branch
      %45 = sbr.rel (%p43) target = $region8
    $region5: #{forward.2} parent=1 // loop_body
      %s47 = ssub.s32 %s42, 1
      %s48 = ssub.s32 %s42, 2
      %s49 = sadd.s32 %s42, 1
      %s51 = sadd.s32 %s50, 1
      %p54 = scmp.eq.s32.totalorder %s42, 1
      %p55 = scmp.ne.s32.totalorder %s50, %s52
      %p56 = scmp.eq.s32.totalorder %s42, 0
      %p57 = por %p55, %p56
      %p58 = scmp.ne.s32.totalorder %s50, %s52
      %p59 = scmp.eq.s32.totalorder %s47, 1
      %p60 = por %p58, %p59
      %p61 = scmp.ne.s32.totalorder %s52, %s53
      %p62 = scmp.eq.s32.totalorder %s47, 0
      %p63 = por %p61, %p62
      %p64 = scmp.ne.s32.totalorder %s52, %s53
      %p65 = scmp.eq.s32.totalorder %s48, 1
      %p66 = por %p64, %p65
      %p68 = scmp.ne.s32.totalorder %s53, %s67
      %p69 = scmp.eq.s32.totalorder %s48, 0
      %p70 = por %p68, %p69
      %s72 = sadd.s32 %s71, 1
      %p75 = scmp.eq.s32.totalorder %s42, 1
      %p76 = scmp.ne.s32.totalorder %s71, %s73
      %p77 = scmp.eq.s32.totalorder %s42, 0
      %p78 = por %p76, %p77
      %p79 = scmp.ne.s32.totalorder %s71, %s73
      %p80 = scmp.eq.s32.totalorder %s47, 1
      %p81 = por %p79, %p80
      %p82 = scmp.ne.s32.totalorder %s73, %s74
      %p83 = scmp.eq.s32.totalorder %s47, 0
      %p84 = por %p82, %p83
      %p85 = scmp.ne.s32.totalorder %s73, %s74
      %p86 = scmp.eq.s32.totalorder %s48, 1
      %p87 = por %p85, %p86
      %p89 = scmp.ne.s32.totalorder %s74, %s88
      %p90 = scmp.eq.s32.totalorder %s48, 0
      %p91 = por %p89, %p90
      %s93 = sadd.s32 %s92, 1
      %p96 = scmp.eq.s32.totalorder %s42, 1
      %p97 = scmp.ne.s32.totalorder %s92, %s94
      %p98 = scmp.eq.s32.totalorder %s42, 0
      %p99 = por %p97, %p98
      %p100 = scmp.ne.s32.totalorder %s92, %s94
      %p101 = scmp.eq.s32.totalorder %s47, 1
      %p102 = por %p100, %p101
      %p103 = scmp.ne.s32.totalorder %s94, %s95
      %p104 = scmp.eq.s32.totalorder %s47, 0
      %p105 = por %p103, %p104
      %p106 = scmp.ne.s32.totalorder %s94, %s95
      %p107 = scmp.eq.s32.totalorder %s48, 1
      %p108 = por %p106, %p107
      %p110 = scmp.ne.s32.totalorder %s95, %s109
      %p111 = scmp.eq.s32.totalorder %s48, 0
      %p112 = por %p110, %p111
      %s114 = sadd.s32 %s113, 1
      %p117 = scmp.eq.s32.totalorder %s42, 1
      %p118 = scmp.ne.s32.totalorder %s113, %s115
      %p119 = scmp.eq.s32.totalorder %s42, 0
      %p120 = por %p118, %p119
      %p121 = scmp.ne.s32.totalorder %s113, %s115
      %p122 = scmp.eq.s32.totalorder %s47, 1
      %p123 = por %p121, %p122
      %p124 = scmp.ne.s32.totalorder %s115, %s116
      %p125 = scmp.eq.s32.totalorder %s47, 0
      %p126 = por %p124, %p125
      %p127 = scmp.ne.s32.totalorder %s115, %s116
      %p128 = scmp.eq.s32.totalorder %s48, 1
      %p129 = por %p127, %p128
      %p131 = scmp.ne.s32.totalorder %s116, %s130
      %p132 = scmp.eq.s32.totalorder %s48, 0
      %p133 = por %p131, %p132
      %s134 = ssub.s32 %s42, %s49
      %p135 = scmp.eq.s32.totalorder %s134, 0
      %s137 = sadd.s32 %s136, 1
      %s138 = scalar_select %p135, %s136, %s137
      %p141 = pneg %p135
      %p142 = scmp.eq.s32.totalorder %s42, 1
      %p143 = por %p141, %p142
      %p144 = scmp.ne.s32.totalorder %s136, %s139
      %p145 = scmp.eq.s32.totalorder %s42, 0
      %p146 = por %p144, %p145
      %p147 = scmp.ne.s32.totalorder %s136, %s139
      %p148 = scmp.eq.s32.totalorder %s47, 1
      %p149 = por %p147, %p148
      %p150 = scmp.ne.s32.totalorder %s139, %s140
      %p151 = scmp.eq.s32.totalorder %s47, 0
      %p152 = por %p150, %p151
      %p153 = scmp.ne.s32.totalorder %s139, %s140
      %p154 = scmp.eq.s32.totalorder %s48, 1
      %p155 = por %p153, %p154
      %p157 = scmp.ne.s32.totalorder %s140, %s156
      %p158 = scmp.eq.s32.totalorder %s48, 0
      %p159 = por %p157, %p158
      %s160 = ssub.s32 %s42, %s49
      %p161 = scmp.eq.s32.totalorder %s160, 0
      %s163 = sadd.s32 %s162, 1
      %s164 = scalar_select %p161, %s162, %s163
      %p167 = pneg %p161
      %p168 = scmp.eq.s32.totalorder %s42, 1
      %p169 = por %p167, %p168
      %p170 = scmp.ne.s32.totalorder %s162, %s165
      %p171 = scmp.eq.s32.totalorder %s42, 0
      %p172 = por %p170, %p171
      %p173 = scmp.ne.s32.totalorder %s162, %s165
      %p174 = scmp.eq.s32.totalorder %s47, 1
      %p175 = por %p173, %p174
      %p176 = scmp.ne.s32.totalorder %s165, %s166
      %p177 = scmp.eq.s32.totalorder %s47, 0
      %p178 = por %p176, %p177
      %p179 = scmp.ne.s32.totalorder %s165, %s166
      %p180 = scmp.eq.s32.totalorder %s48, 1
      %p181 = por %p179, %p180
      %p183 = scmp.ne.s32.totalorder %s166, %s182
      %p184 = scmp.eq.s32.totalorder %s48, 0
      %p185 = por %p183, %p184
      %s186 = ssub.s32 %s42, %s49
      %p187 = scmp.eq.s32.totalorder %s186, 0
      %s189 = sadd.s32 %s188, 1
      %s190 = scalar_select %p187, %s188, %s189
      %p193 = pneg %p187
      %p194 = scmp.eq.s32.totalorder %s42, 1
      %p195 = por %p193, %p194
      %p196 = scmp.ne.s32.totalorder %s188, %s191
      %p197 = scmp.eq.s32.totalorder %s42, 0
      %p198 = por %p196, %p197
      %p199 = scmp.ne.s32.totalorder %s188, %s191
      %p200 = scmp.eq.s32.totalorder %s47, 1
      %p201 = por %p199, %p200
      %p202 = scmp.ne.s32.totalorder %s191, %s192
      %p203 = scmp.eq.s32.totalorder %s47, 0
      %p204 = por %p202, %p203
      %p205 = scmp.ne.s32.totalorder %s191, %s192
      %p206 = scmp.eq.s32.totalorder %s48, 1
      %p207 = por %p205, %p206
      %p209 = scmp.ne.s32.totalorder %s192, %s208
      %p210 = scmp.eq.s32.totalorder %s48, 0
      %p211 = por %p209, %p210
      %s212 = ssub.s32 %s42, %s49
      %p213 = scmp.eq.s32.totalorder %s212, 0
      %s215 = sadd.s32 %s214, 1
      %s216 = scalar_select %p213, %s214, %s215
      %p219 = pneg %p213
      %p220 = scmp.eq.s32.totalorder %s42, 1
      %p221 = por %p219, %p220
      %p222 = scmp.ne.s32.totalorder %s214, %s217
      %p223 = scmp.eq.s32.totalorder %s42, 0
      %p224 = por %p222, %p223
      %p225 = scmp.ne.s32.totalorder %s214, %s217
      %p226 = scmp.eq.s32.totalorder %s47, 1
      %p227 = por %p225, %p226
      %p228 = scmp.ne.s32.totalorder %s217, %s218
      %p229 = scmp.eq.s32.totalorder %s47, 0
      %p230 = por %p228, %p229
      %p231 = scmp.ne.s32.totalorder %s217, %s218
      %p232 = scmp.eq.s32.totalorder %s48, 1
      %p233 = por %p231, %p232
      %p235 = scmp.ne.s32.totalorder %s218, %s234
      %p236 = scmp.eq.s32.totalorder %s48, 0
      %p237 = por %p235, %p236
      %s238 = ssub.s32 %s42, %s49
      %p239 = scmp.eq.s32.totalorder %s238, 0
      %s241 = sadd.s32 %s240, 1
      %s242 = scalar_select %p239, %s240, %s241
      %p245 = pneg %p239
      %p246 = scmp.eq.s32.totalorder %s42, 1
      %p247 = por %p245, %p246
      %p248 = scmp.ne.s32.totalorder %s240, %s243
      %p249 = scmp.eq.s32.totalorder %s42, 0
      %p250 = por %p248, %p249
      %p251 = scmp.ne.s32.totalorder %s240, %s243
      %p252 = scmp.eq.s32.totalorder %s47, 1
      %p253 = por %p251, %p252
      %p254 = scmp.ne.s32.totalorder %s243, %s244
      %p255 = scmp.eq.s32.totalorder %s47, 0
      %p256 = por %p254, %p255
      %p257 = scmp.ne.s32.totalorder %s243, %s244
      %p258 = scmp.eq.s32.totalorder %s48, 1
      %p259 = por %p257, %p258
      %p261 = scmp.ne.s32.totalorder %s244, %s260
      %p262 = scmp.eq.s32.totalorder %s48, 0
      %p263 = por %p261, %p262
      %s264 = ssub.s32 %s42, %s49
      %p265 = scmp.eq.s32.totalorder %s264, 0
      %s267 = sadd.s32 %s266, 1
      %s268 = scalar_select %p265, %s266, %s267
      %p271 = pneg %p265
      %p272 = scmp.eq.s32.totalorder %s42, 1
      %p273 = por %p271, %p272
      %p274 = scmp.ne.s32.totalorder %s266, %s269
      %p275 = scmp.eq.s32.totalorder %s42, 0
      %p276 = por %p274, %p275
      %p277 = scmp.ne.s32.totalorder %s266, %s269
      %p278 = scmp.eq.s32.totalorder %s47, 1
      %p279 = por %p277, %p278
      %p280 = scmp.ne.s32.totalorder %s269, %s270
      %p281 = scmp.eq.s32.totalorder %s47, 0
      %p282 = por %p280, %p281
      %p283 = scmp.ne.s32.totalorder %s269, %s270
      %p284 = scmp.eq.s32.totalorder %s48, 1
      %p285 = por %p283, %p284
      %p287 = scmp.ne.s32.totalorder %s270, %s286
      %p288 = scmp.eq.s32.totalorder %s48, 0
      %p289 = por %p287, %p288
      %s290 = ssub.s32 %s42, %s49
      %p291 = scmp.eq.s32.totalorder %s290, 0
      %s293 = sadd.s32 %s292, 1
      %s294 = scalar_select %p291, %s292, %s293
      %p297 = pneg %p291
      %p298 = scmp.eq.s32.totalorder %s42, 1
      %p299 = por %p297, %p298
      %p300 = scmp.ne.s32.totalorder %s292, %s295
      %p301 = scmp.eq.s32.totalorder %s42, 0
      %p302 = por %p300, %p301
      %p303 = scmp.ne.s32.totalorder %s292, %s295
      %p304 = scmp.eq.s32.totalorder %s47, 1
      %p305 = por %p303, %p304
      %p306 = scmp.ne.s32.totalorder %s295, %s296
      %p307 = scmp.eq.s32.totalorder %s47, 0
      %p308 = por %p306, %p307
      %p309 = scmp.ne.s32.totalorder %s295, %s296
      %p310 = scmp.eq.s32.totalorder %s48, 1
      %p311 = por %p309, %p310
      %p313 = scmp.ne.s32.totalorder %s296, %s312
      %p314 = scmp.eq.s32.totalorder %s48, 0
      %p315 = por %p313, %p314
      %s316 = ssub.s32 %s42, %s49
      %p317 = scmp.eq.s32.totalorder %s316, 0
      %s319 = sadd.s32 %s318, 1
      %s320 = scalar_select %p317, %s318, %s319
      %p323 = pneg %p317
      %p324 = scmp.eq.s32.totalorder %s42, 1
      %p325 = por %p323, %p324
      %p326 = scmp.ne.s32.totalorder %s318, %s321
      %p327 = scmp.eq.s32.totalorder %s42, 0
      %p328 = por %p326, %p327
      %p329 = scmp.ne.s32.totalorder %s318, %s321
      %p330 = scmp.eq.s32.totalorder %s47, 1
      %p331 = por %p329, %p330
      %p332 = scmp.ne.s32.totalorder %s321, %s322
      %p333 = scmp.eq.s32.totalorder %s47, 0
      %p334 = por %p332, %p333
      %p335 = scmp.ne.s32.totalorder %s321, %s322
      %p336 = scmp.eq.s32.totalorder %s48, 1
      %p337 = por %p335, %p336
      %p339 = scmp.ne.s32.totalorder %s322, %s338
      %p340 = scmp.eq.s32.totalorder %s48, 0
      %p341 = por %p339, %p340
      %s342 = ssub.s32 %s42, %s49
      %p343 = scmp.eq.s32.totalorder %s342, 0
      %s345 = sadd.s32 %s344, 1
      %s346 = scalar_select %p343, %s344, %s345
      %p349 = pneg %p343
      %p350 = scmp.eq.s32.totalorder %s42, 1
      %p351 = por %p349, %p350
      %p352 = scmp.ne.s32.totalorder %s344, %s347
      %p353 = scmp.eq.s32.totalorder %s42, 0
      %p354 = por %p352, %p353
      %p355 = scmp.ne.s32.totalorder %s344, %s347
      %p356 = scmp.eq.s32.totalorder %s47, 1
      %p357 = por %p355, %p356
      %p358 = scmp.ne.s32.totalorder %s347, %s348
      %p359 = scmp.eq.s32.totalorder %s47, 0
      %p360 = por %p358, %p359
      %p361 = scmp.ne.s32.totalorder %s347, %s348
      %p362 = scmp.eq.s32.totalorder %s48, 1
      %p363 = por %p361, %p362
      %p365 = scmp.ne.s32.totalorder %s348, %s364
      %p366 = scmp.eq.s32.totalorder %s48, 0
      %p367 = por %p365, %p366
      %s368 = ssub.s32 %s42, %s49
      %p369 = scmp.eq.s32.totalorder %s368, 0
      %s371 = sadd.s32 %s370, 1
      %s372 = scalar_select %p369, %s370, %s371
      %p375 = pneg %p369
      %p376 = scmp.eq.s32.totalorder %s42, 1
      %p377 = por %p375, %p376
      %p378 = scmp.ne.s32.totalorder %s370, %s373
      %p379 = scmp.eq.s32.totalorder %s42, 0
      %p380 = por %p378, %p379
      %p381 = scmp.ne.s32.totalorder %s370, %s373
      %p382 = scmp.eq.s32.totalorder %s47, 1
      %p383 = por %p381, %p382
      %p384 = scmp.ne.s32.totalorder %s373, %s374
      %p385 = scmp.eq.s32.totalorder %s47, 0
      %p386 = por %p384, %p385
      %p387 = scmp.ne.s32.totalorder %s373, %s374
      %p388 = scmp.eq.s32.totalorder %s48, 1
      %p389 = por %p387, %p388
      %p391 = scmp.ne.s32.totalorder %s374, %s390
      %p392 = scmp.eq.s32.totalorder %s48, 0
      %p393 = por %p391, %p392
      %s394 = ssub.s32 %s42, %s49
      %p395 = scmp.eq.s32.totalorder %s394, 0
      %s397 = sadd.s32 %s396, 1
      %s398 = scalar_select %p395, %s396, %s397
      %p401 = pneg %p395
      %p402 = scmp.eq.s32.totalorder %s42, 1
      %p403 = por %p401, %p402
      %p404 = scmp.ne.s32.totalorder %s396, %s399
      %p405 = scmp.eq.s32.totalorder %s42, 0
      %p406 = por %p404, %p405
      %p407 = scmp.ne.s32.totalorder %s396, %s399
      %p408 = scmp.eq.s32.totalorder %s47, 1
      %p409 = por %p407, %p408
      %p410 = scmp.ne.s32.totalorder %s399, %s400
      %p411 = scmp.eq.s32.totalorder %s47, 0
      %p412 = por %p410, %p411
      %p413 = scmp.ne.s32.totalorder %s399, %s400
      %p414 = scmp.eq.s32.totalorder %s48, 1
      %p415 = por %p413, %p414
      %p417 = scmp.ne.s32.totalorder %s400, %s416
      %p418 = scmp.eq.s32.totalorder %s48, 0
      %p419 = por %p417, %p418
      %s420 = ssub.s32 %s42, %s49
      %p421 = scmp.eq.s32.totalorder %s420, 0
      %s423 = sadd.s32 %s422, 1
      %s424 = scalar_select %p421, %s422, %s423
      %p427 = pneg %p421
      %p428 = scmp.eq.s32.totalorder %s42, 1
      %p429 = por %p427, %p428
      %p430 = scmp.ne.s32.totalorder %s422, %s425
      %p431 = scmp.eq.s32.totalorder %s42, 0
      %p432 = por %p430, %p431
      %p433 = scmp.ne.s32.totalorder %s422, %s425
      %p434 = scmp.eq.s32.totalorder %s47, 1
      %p435 = por %p433, %p434
      %p436 = scmp.ne.s32.totalorder %s425, %s426
      %p437 = scmp.eq.s32.totalorder %s47, 0
      %p438 = por %p436, %p437
      %p439 = scmp.ne.s32.totalorder %s425, %s426
      %p440 = scmp.eq.s32.totalorder %s48, 1
      %p441 = por %p439, %p440
      %p443 = scmp.ne.s32.totalorder %s426, %s442
      %p444 = scmp.eq.s32.totalorder %s48, 0
      %p445 = por %p443, %p444
      %s447 = sadd.s32 %s446, 1
      %p450 = scmp.eq.s32.totalorder %s42, 1
      %p451 = scmp.ne.s32.totalorder %s446, %s448
      %p452 = scmp.eq.s32.totalorder %s42, 0
      %p453 = por %p451, %p452
      %p454 = scmp.ne.s32.totalorder %s446, %s448
      %p455 = scmp.eq.s32.totalorder %s47, 1
      %p456 = por %p454, %p455
      %p457 = scmp.ne.s32.totalorder %s448, %s449
      %p458 = scmp.eq.s32.totalorder %s47, 0
      %p459 = por %p457, %p458
      %p460 = scmp.ne.s32.totalorder %s448, %s449
      %p461 = scmp.eq.s32.totalorder %s48, 1
      %p462 = por %p460, %p461
      %p464 = scmp.ne.s32.totalorder %s449, %s463
      %p465 = scmp.eq.s32.totalorder %s48, 0
      %p466 = por %p464, %p465
      %s468 = sadd.s32 %s467, 1
      %p471 = scmp.eq.s32.totalorder %s42, 1
      %p472 = scmp.ne.s32.totalorder %s467, %s469
      %p473 = scmp.eq.s32.totalorder %s42, 0
      %p474 = por %p472, %p473
      %p475 = scmp.ne.s32.totalorder %s467, %s469
      %p476 = scmp.eq.s32.totalorder %s47, 1
      %p477 = por %p475, %p476
      %p478 = scmp.ne.s32.totalorder %s469, %s470
      %p479 = scmp.eq.s32.totalorder %s47, 0
      %p480 = por %p478, %p479
      %p481 = scmp.ne.s32.totalorder %s469, %s470
      %p482 = scmp.eq.s32.totalorder %s48, 1
      %p483 = por %p481, %p482
      %p485 = scmp.ne.s32.totalorder %s470, %s484
      %p486 = scmp.eq.s32.totalorder %s48, 0
      %p487 = por %p485, %p486
      %p488 = scmp.le.s32.totalorder 1, %s42
      %p489 = scmp.lt.s32.totalorder %s42, 3
      %p490 = pnand %p488, %p489
      %p491 = pneg %p490
      // Predicated region
      $region9: #{forward.2} parent=5 // pred_check
        _
      $region10: #{forward.2} parent=5 // pred_check_branch
        %493 = sbr.rel (%p490) target = $region12
      $region11: #{forward.2} parent=5 // pred_region
        %s494 = ssub.s32 %s42, 1
        // Predicated region
        $region13: #{forward.2} parent=11 // pred_check
          %p495 = pneg %p63
        $region14: #{forward.2} parent=11 // pred_check_branch
          %497 = sbr.rel (%p495) target = $region16
        $region15: #{forward.2} parent=11 // pred_region
          _
        $region16: #{forward.2} parent=11 // pred_fallthru
          _
        // Predicated region
        $region17: #{forward.2} parent=11 // pred_check
          %p498 = pneg %p84
        $region18: #{forward.2} parent=11 // pred_check_branch
          %500 = sbr.rel (%p498) target = $region20
        $region19: #{forward.2} parent=11 // pred_region
          _
        $region20: #{forward.2} parent=11 // pred_fallthru
          _
        // Predicated region
        $region21: #{forward.2} parent=11 // pred_check
          %p501 = pneg %p105
        $region22: #{forward.2} parent=11 // pred_check_branch
          %503 = sbr.rel (%p501) target = $region24
        $region23: #{forward.2} parent=11 // pred_region
          _
        $region24: #{forward.2} parent=11 // pred_fallthru
          _
        // Predicated region
        $region25: #{forward.2} parent=11 // pred_check
          %p504 = pneg %p126
        $region26: #{forward.2} parent=11 // pred_check_branch
          %506 = sbr.rel (%p504) target = $region28
        $region27: #{forward.2} parent=11 // pred_region
          _
        $region28: #{forward.2} parent=11 // pred_fallthru
          _
      $region12: #{forward.2} parent=5 // pred_fallthru
        _
      %p507 = scmp.lt.s32.totalorder %s42, 2
      // Predicated region
      $region29: #{forward.2} parent=5 // pred_check
        %p508 = pneg %p507
      $region30: #{forward.2} parent=5 // pred_check_branch
        %510 = sbr.rel (%p508) target = $region32
      $region31: #{forward.2} parent=5 // pred_region
        // Predicated region
        $region33: #{forward.2} parent=31 // pred_check
          %p511 = pneg %p146
        $region34: #{forward.2} parent=31 // pred_check_branch
          %513 = sbr.rel (%p511) target = $region36
        $region35: #{forward.2} parent=31 // pred_region
          %s514 = sand.u32 %s136, 1
          %s515 = scalar_lea.sflag [#allocation11], %s514
          %s516 = sand.u32 %s136, 1
          %s517 = smul.addr %s516, 192
          %s518 = scalar_lea.vmem [#allocation10], %s517
          %s520 = ssub.s32 3072, 3072
          %521 = vsyncadd %s515, %s520
          %s522 = smul.addr %s42, 48
          %s523 = smul.addr %s522, 64
          %s524 = scalar_lea.hbm %s6, %s523
          %s525 = sshll.u32 %s518, 4
          %s526 = int_to_ptr.vmem [resolvable:$true] %s525
          %531 = dma.hbm_to_vmem [thread:$0]  %s524, 3072, %s526, %s515, 64, 64, 4
        $region36: #{forward.2} parent=31 // pred_fallthru
          _
        // Predicated region
        $region37: #{forward.2} parent=31 // pred_check
          %p532 = pneg %p172
        $region38: #{forward.2} parent=31 // pred_check_branch
          %534 = sbr.rel (%p532) target = $region40
        $region39: #{forward.2} parent=31 // pred_region
          %p535 = scmp.lt.s32.totalorder %s42, 1
          %s536 = scalar_select %p535, %s42, 1
          %s537 = scalar_lea.vmem %s7, %s536
        $region40: #{forward.2} parent=31 // pred_fallthru
          _
        // Predicated region
        $region41: #{forward.2} parent=31 // pred_check
          %p538 = pneg %p198
        $region42: #{forward.2} parent=31 // pred_check_branch
          %540 = sbr.rel (%p538) target = $region44
        $region43: #{forward.2} parent=31 // pred_region
          %p541 = scmp.lt.s32.totalorder %s42, 1
          %s542 = scalar_select %p541, %s42, 1
          %s543 = scalar_lea.vmem %s8, %s542
        $region44: #{forward.2} parent=31 // pred_fallthru
          _
        // Predicated region
        $region45: #{forward.2} parent=31 // pred_check
          %p544 = pneg %p224
        $region46: #{forward.2} parent=31 // pred_check_branch
          %546 = sbr.rel (%p544) target = $region48
        $region47: #{forward.2} parent=31 // pred_region
          %s547 = sand.u32 %s42, 1
          %s548 = scalar_lea.sflag [#allocation13], %s547
          %s549 = sand.u32 %s214, 1
          %s550 = smul.addr %s549, 64
          %s551 = scalar_lea.vmem [#allocation12], %s550
          %s553 = ssub.s32 1024, 1024
          %554 = vsyncadd %s548, %s553
          %s555 = smul.addr %s42, 16
          %s556 = smul.addr %s555, 64
          %s557 = scalar_lea.hbm %s9, %s556
          %s558 = sshll.u32 %s551, 4
          %s559 = int_to_ptr.vmem [resolvable:$true] %s558
          %564 = dma.hbm_to_vmem [thread:$0]  %s557, 1024, %s559, %s548, 64, 64, 4
        $region48: #{forward.2} parent=31 // pred_fallthru
          _
        // Predicated region
        $region49: #{forward.2} parent=31 // pred_check
          %p565 = pneg %p250
        $region50: #{forward.2} parent=31 // pred_check_branch
          %567 = sbr.rel (%p565) target = $region52
        $region51: #{forward.2} parent=31 // pred_region
          %p568 = scmp.lt.s32.totalorder %s42, 1
          %s569 = scalar_select %p568, %s42, 1
          %s570 = scalar_lea.vmem %s10, %s569
        $region52: #{forward.2} parent=31 // pred_fallthru
          _
        // Predicated region
        $region53: #{forward.2} parent=31 // pred_check
          %p571 = pneg %p276
        $region54: #{forward.2} parent=31 // pred_check_branch
          %573 = sbr.rel (%p571) target = $region56
        $region55: #{forward.2} parent=31 // pred_region
          %p574 = scmp.lt.s32.totalorder %s42, 1
          %s575 = scalar_select %p574, %s42, 1
          %s576 = scalar_lea.vmem %s11, %s575
        $region56: #{forward.2} parent=31 // pred_fallthru
          _
        // Predicated region
        $region57: #{forward.2} parent=31 // pred_check
          %p577 = pneg %p302
        $region58: #{forward.2} parent=31 // pred_check_branch
          %579 = sbr.rel (%p577) target = $region60
        $region59: #{forward.2} parent=31 // pred_region
          %p580 = scmp.lt.s32.totalorder %s42, 1
          %s581 = scalar_select %p580, %s42, 1
          %s582 = smul.addr %s581, 64
          %s583 = smul.addr %s582, 4
          %s584 = scalar_lea.vmem %s12, %s583
        $region60: #{forward.2} parent=31 // pred_fallthru
          _
        // Predicated region
        $region61: #{forward.2} parent=31 // pred_check
          %p585 = pneg %p328
        $region62: #{forward.2} parent=31 // pred_check_branch
          %587 = sbr.rel (%p585) target = $region64
        $region63: #{forward.2} parent=31 // pred_region
          %p588 = scmp.lt.s32.totalorder %s42, 1
          %s589 = scalar_select %p588, %s42, 1
          %s590 = scalar_lea.vmem %s13, %s589
        $region64: #{forward.2} parent=31 // pred_fallthru
          _
        // Predicated region
        $region65: #{forward.2} parent=31 // pred_check
          %p591 = pneg %p354
        $region66: #{forward.2} parent=31 // pred_check_branch
          %593 = sbr.rel (%p591) target = $region68
        $region67: #{forward.2} parent=31 // pred_region
          %p594 = scmp.lt.s32.totalorder %s42, 1
          %s595 = scalar_select %p594, %s42, 1
          %s596 = scalar_lea.vmem %s14, %s595
        $region68: #{forward.2} parent=31 // pred_fallthru
          _
        // Predicated region
        $region69: #{forward.2} parent=31 // pred_check
          %p597 = pneg %p380
        $region70: #{forward.2} parent=31 // pred_check_branch
          %599 = sbr.rel (%p597) target = $region72
        $region71: #{forward.2} parent=31 // pred_region
          %s600 = sand.u32 %s42, 1
          %s601 = scalar_lea.sflag [#allocation13], %s600
          %s602 = sand.u32 %s370, 1
          %s603 = smul.addr %s602, 64
          %s604 = scalar_lea.vmem [#allocation14], %s603
          %s606 = ssub.s32 1024, 1024
          %607 = vsyncadd %s601, %s606
          %s608 = smul.addr %s42, 16
          %s609 = smul.addr %s608, 64
          %s610 = scalar_lea.hbm %s15, %s609
          %s611 = sshll.u32 %s604, 4
          %s612 = int_to_ptr.vmem [resolvable:$true] %s611
          %617 = dma.hbm_to_vmem [thread:$0]  %s610, 1024, %s612, %s601, 64, 64, 4
        $region72: #{forward.2} parent=31 // pred_fallthru
          _
        // Predicated region
        $region73: #{forward.2} parent=31 // pred_check
          %p618 = pneg %p406
        $region74: #{forward.2} parent=31 // pred_check_branch
          %620 = sbr.rel (%p618) target = $region76
        $region75: #{forward.2} parent=31 // pred_region
          %p621 = scmp.lt.s32.totalorder %s42, 1
          %s622 = scalar_select %p621, %s42, 1
          %s623 = scalar_lea.vmem %s16, %s622
        $region76: #{forward.2} parent=31 // pred_fallthru
          _
        // Predicated region
        $region77: #{forward.2} parent=31 // pred_check
          %p624 = pneg %p432
        $region78: #{forward.2} parent=31 // pred_check_branch
          %626 = sbr.rel (%p624) target = $region80
        $region79: #{forward.2} parent=31 // pred_region
          %p627 = scmp.lt.s32.totalorder %s42, 1
          %s628 = scalar_select %p627, %s42, 1
          %s629 = scalar_lea.vmem %s17, %s628
        $region80: #{forward.2} parent=31 // pred_fallthru
          _
      $region32: #{forward.2} parent=5 // pred_fallthru
        _
      %p630 = scmp.le.s32.totalorder 1, %s42
      %p631 = scmp.lt.s32.totalorder %s42, 3
      %p632 = pnand %p630, %p631
      %p633 = pneg %p632
      // Predicated region
      $region81: #{forward.2} parent=5 // pred_check
        _
      $region82: #{forward.2} parent=5 // pred_check_branch
        %635 = sbr.rel (%p632) target = $region84
      $region83: #{forward.2} parent=5 // pred_region
        %s636 = ssub.s32 %s42, 1
        %s637 = sand.u32 %s139, 1
        %s638 = scalar_lea.sflag [#allocation11], %s637
        %s639 = sand.u32 %s139, 1
        %s640 = smul.addr %s639, 192
        %s641 = scalar_lea.vmem [#allocation10], %s640
        // Predicated region
        $region85: #{forward.2} parent=83 // pred_check
          %p642 = pneg %p152
        $region86: #{forward.2} parent=83 // pred_check_branch
          %644 = sbr.rel (%p642) target = $region88
        $region87: #{forward.2} parent=83 // pred_region
          %645 = dma.done %s638, 3072
        $region88: #{forward.2} parent=83 // pred_fallthru
          _
        %s646 = sand.u32 %s47, 1
        %s647 = scalar_lea.sflag [#allocation13], %s646
        %s648 = sand.u32 %s217, 1
        %s649 = smul.addr %s648, 64
        %s650 = scalar_lea.vmem [#allocation12], %s649
        // Predicated region
        $region89: #{forward.2} parent=83 // pred_check
          %p651 = pneg %p230
        $region90: #{forward.2} parent=83 // pred_check_branch
          %653 = sbr.rel (%p651) target = $region92
        $region91: #{forward.2} parent=83 // pred_region
          %654 = dma.done %s647, 1024
        $region92: #{forward.2} parent=83 // pred_fallthru
          _
        %s655 = sand.u32 %s47, 1
        %s656 = scalar_lea.sflag [#allocation13], %s655
        %s657 = sand.u32 %s373, 1
        %s658 = smul.addr %s657, 64
        %s659 = scalar_lea.vmem [#allocation14], %s658
        // Predicated region
        $region93: #{forward.2} parent=83 // pred_check
          %p660 = pneg %p386
        $region94: #{forward.2} parent=83 // pred_check_branch
          %662 = sbr.rel (%p660) target = $region96
        $region95: #{forward.2} parent=83 // pred_region
          %663 = dma.done %s656, 1024
        $region96: #{forward.2} parent=83 // pred_fallthru
          _
        %p664 = pneg %p63
        %p665 = pneg %p60
        %p666 = pneg %p84
        %p667 = pneg %p81
        %p668 = pneg %p105
        %p669 = pneg %p102
        %p670 = pneg %p126
        %p671 = pneg %p123
        %s672 = sand.u32 %s139, 1
        %s673 = scalar_lea.sflag [#allocation11], %s672
        %s674 = sand.u32 %s139, 1
        %s675 = smul.addr %s674, 192
        %s676 = scalar_lea.vmem [#allocation10], %s675
        %p677 = pneg %p152
        %p678 = pneg %p149
        %p679 = scmp.lt.s32.totalorder %s47, 1
        %s680 = scalar_select %p679, %s47, 1
        %s681 = scalar_lea.vmem %s7, %s680
        %p682 = pneg %p178
        %p683 = pneg %p175
        %p684 = scmp.lt.s32.totalorder %s47, 1
        %s685 = scalar_select %p684, %s47, 1
        %s686 = scalar_lea.vmem %s8, %s685
        %p687 = pneg %p204
        %p688 = pneg %p201
        %s689 = sand.u32 %s47, 1
        %s690 = scalar_lea.sflag [#allocation13], %s689
        %s691 = sand.u32 %s217, 1
        %s692 = smul.addr %s691, 64
        %s693 = scalar_lea.vmem [#allocation12], %s692
        %p694 = pneg %p230
        %p695 = pneg %p227
        %p696 = scmp.lt.s32.totalorder %s47, 1
        %s697 = scalar_select %p696, %s47, 1
        %s698 = scalar_lea.vmem %s10, %s697
        %p699 = pneg %p256
        %p700 = pneg %p253
        %p701 = scmp.lt.s32.totalorder %s47, 1
        %s702 = scalar_select %p701, %s47, 1
        %s703 = scalar_lea.vmem %s11, %s702
        %p704 = pneg %p282
        %p705 = pneg %p279
        %p706 = scmp.lt.s32.totalorder %s47, 1
        %s707 = scalar_select %p706, %s47, 1
        %s708 = smul.addr %s707, 64
        %s709 = smul.addr %s708, 4
        %s710 = scalar_lea.vmem %s12, %s709
        %p711 = pneg %p308
        %p712 = pneg %p305
        %p713 = scmp.lt.s32.totalorder %s47, 1
        %s714 = scalar_select %p713, %s47, 1
        %s715 = scalar_lea.vmem %s13, %s714
        %p716 = pneg %p334
        %p717 = pneg %p331
        %p718 = scmp.lt.s32.totalorder %s47, 1
        %s719 = scalar_select %p718, %s47, 1
        %s720 = scalar_lea.vmem %s14, %s719
        %p721 = pneg %p360
        %p722 = pneg %p357
        %s723 = sand.u32 %s47, 1
        %s724 = scalar_lea.sflag [#allocation13], %s723
        %s725 = sand.u32 %s373, 1
        %s726 = smul.addr %s725, 64
        %s727 = scalar_lea.vmem [#allocation14], %s726
        %p728 = pneg %p386
        %p729 = pneg %p383
        %p730 = scmp.lt.s32.totalorder %s47, 1
        %s731 = scalar_select %p730, %s47, 1
        %s732 = scalar_lea.vmem %s16, %s731
        %p733 = pneg %p412
        %p734 = pneg %p409
        %p735 = scmp.lt.s32.totalorder %s47, 1
        %s736 = scalar_select %p735, %s47, 1
        %s737 = scalar_lea.vmem %s17, %s736
        %p738 = pneg %p438
        %p739 = pneg %p435
        %p740 = pneg %p459
        %p741 = pneg %p456
        %p742 = pneg %p480
        %p743 = pneg %p477
        %p744 = scmp.lt.s32.totalorder %s47, 1
        %s745 = scalar_select %p744, %s47, 1
        %s746 = scalar_lea.vmem %s7, %s745
        %p747 = scmp.lt.s32.totalorder %s47, 1
        %s748 = scalar_select %p747, %s47, 1
        %s749 = scalar_lea.vmem %s8, %s748
        %p750 = scmp.lt.s32.totalorder %s47, 1
        %s751 = scalar_select %p750, %s47, 1
        %s752 = scalar_lea.vmem %s10, %s751
        %p753 = scmp.lt.s32.totalorder %s47, 1
        %s754 = scalar_select %p753, %s47, 1
        %s755 = scalar_lea.vmem %s11, %s754
        %p756 = scmp.lt.s32.totalorder %s47, 1
        %s757 = scalar_select %p756, %s47, 1
        %s758 = smul.addr %s757, 64
        %s759 = smul.addr %s758, 4
        %s760 = scalar_lea.vmem %s12, %s759
        %p761 = scmp.lt.s32.totalorder %s47, 1
        %s762 = scalar_select %p761, %s47, 1
        %s763 = scalar_lea.vmem %s13, %s762
        %p764 = scmp.lt.s32.totalorder %s47, 1
        %s765 = scalar_select %p764, %s47, 1
        %s766 = scalar_lea.vmem %s14, %s765
        %p767 = scmp.lt.s32.totalorder %s47, 1
        %s768 = scalar_select %p767, %s47, 1
        %s769 = scalar_lea.vmem %s16, %s768
        %p770 = scmp.lt.s32.totalorder %s47, 1
        %s771 = scalar_select %p770, %s47, 1
        %s772 = scalar_lea.vmem %s17, %s771
        %v774 = vld [vmem:[%s4] sm:$0x1]
        %v775 = vlaneseq
        %v776 = vshrl.u32 %v775, 7
        %v777 = vadd.s32 %v776, 8
        %v778 = vlaneseq
        %v779 = vshrl.u32 %v778, 7
        %v780 = vsub.s32 0, %v779
        %v781 = vrot.slane %v774, %v780
        %vm782 = vcmp.eq.s32.totalorder %v776, %v781
        %vm783 = vcmp.eq.s32.totalorder %v777, %v781
        %v784 = vsel %vm782, 1, 0
        %v785 = vsel %vm783, 1, 0
        %v786 = vcvt.s32.f32 %v784
        %v787 = vcvt.s32.f32 %v785
        %v788 = vpack.c.bf16 %v787, %v786
        %p789 = scmp.eq.s32.totalorder %s47, 0
        // Predicated region
        $region97: #{forward.2} parent=83 // pred_check
          %p790 = pneg %p789
        $region98: #{forward.2} parent=83 // pred_check_branch
          %792 = sbr.rel (%p790) target = $region100
        $region99: #{forward.2} parent=83 // pred_region
          %v793 = vld [vmem:[%s2] sm:$0xff]
          %v794 = vld [vmem:[%s2 + $0x8] sm:$0x3]
          %795 = vst [vmem:[#allocation2] sm:$0xff] %v793
          %796 = vst [vmem:[#allocation2 + $0x8] sm:$0x3] %v794
          %v797 = vld [vmem:[%s3] sm:$0xff]
          %v798 = vld [vmem:[%s3 + $0x8] sm:$0xff]
          %v799 = vld [vmem:[%s3 + $0x10] sm:$0x3f]
          %v800 = vpack.c.bf16 %v798, %v797
          %v801 = vpack.c.bf16 %v799, %v799
          %vm802 = vcmask 179200
          %v804 = vsel %vm802, %v788, 0
          %vm806 = vcmask 1042432
          %v808 = vsel %vm806, %v801, 0
          %810 = vmatprep.subr.bf16.mxu0 0
          %811 = vmatpush1.bf16.msra.mxu0 0
          %812 = vmatprep.subr.bf16.mxu0 0
          %813 = vmatpush1.bf16.msra.mxu0 0
          %814 = vmatprep.subr.bf16.mxu0 0
          %815 = vmatpush1.bf16.msra.mxu0 0
          %816 = vmatprep.subr.bf16.mxu0 0
          %817 = vmatpush1.bf16.msra.mxu0 0
          %818 = vmatprep.subr.bf16.mxu0 0
          %819 = vmatpush1.bf16.msra.mxu0 0
          %820 = vmatprep.subr.bf16.mxu0 0
          %821 = vmatpush1.bf16.msra.mxu0 0
          %822 = vmatprep.subr.bf16.mxu0 0
          %823 = vmatpush1.bf16.msra.mxu0 %v808
          %824 = vmatprep.subr.bf16.mxu0 0
          %825 = vmatpush1.bf16.msra.mxu0 %v800
          %826 = vmatprep.subr.bf16.mxu0 0
          %827 = vmatpush2.bf16.msra.mxu0 0
          %828 = vmatprep.subr.bf16.mxu0 0
          %829 = vmatpush2.bf16.msra.mxu0 0
          %830 = vmatprep.subr.bf16.mxu0 0
          %831 = vmatpush2.bf16.msra.mxu0 0
          %832 = vmatprep.subr.bf16.mxu0 0
          %833 = vmatpush2.bf16.msra.mxu0 0
          %834 = vmatprep.subr.bf16.mxu0 0
          %835 = vmatpush2.bf16.msra.mxu0 0
          %836 = vmatprep.subr.bf16.mxu0 0
          %837 = vmatpush2.bf16.msra.mxu0 0
          %838 = vmatprep.subr.bf16.mxu0 0
          %839 = vmatpush2.bf16.msra.mxu0 0
          %840 = vmatprep.subr.bf16.mxu0 0
          %841 = vmatpush2.bf16.msra.mxu0 0
          %842 = vmatprep.mubr.bf16.mxu0 0
          %843 = vmatmul.mubr.bf16.gmra.mxu0 %v804
          %v844 = vpop.f32.mrf.mxu0
          %v845 = vadd.f32 0.0, %v844
          %v846 = vpop.f32.mrf.mxu0
          %v847 = vpop.f32.mrf.mxu0
          %v848 = vadd.f32 0.0, %v847
          %v849 = vpop.f32.mrf.mxu0
          %850 = vdwg.mxu0
          %851 = vst [vmem:[#allocation6] sm:$0xff] %v845
          %852 = vst [vmem:[#allocation6 + $0x8] sm:$0x3] %v848
          %s853 = sld [smem:[#allocation8]]
          %s854 = scalar_lea.vmem [#allocation6], %s853
          %v855 = vld [vmem:[%s854] sm:$0x1]
          %856 = vst [vmem:[#allocation3] sm:$0x1] %v855
          %s857 = sld [smem:[#allocation8 + $0x1]]
          %s858 = scalar_lea.vmem [#allocation6], %s857
          %v859 = vld [vmem:[%s858] sm:$0x1]
          %860 = vst [vmem:[#allocation3 + $0x1] sm:$0x1] %v859
          %s861 = sld [smem:[#allocation8 + $0x2]]
          %s862 = scalar_lea.vmem [#allocation6], %s861
          %v863 = vld [vmem:[%s862] sm:$0x1]
          %864 = vst [vmem:[#allocation3 + $0x2] sm:$0x1] %v863
          %s865 = sld [smem:[#allocation8 + $0x3]]
          %s866 = scalar_lea.vmem [#allocation6], %s865
          %v867 = vld [vmem:[%s866] sm:$0x1]
          %868 = vst [vmem:[#allocation3 + $0x3] sm:$0x1] %v867
          %s869 = sld [smem:[#allocation8 + $0x4]]
          %s870 = scalar_lea.vmem [#allocation6], %s869
          %v871 = vld [vmem:[%s870] sm:$0x1]
          %872 = vst [vmem:[#allocation3 + $0x4] sm:$0x1] %v871
          %s873 = sld [smem:[#allocation8 + $0x5]]
          %s874 = scalar_lea.vmem [#allocation6], %s873
          %v875 = vld [vmem:[%s874] sm:$0x1]
          %876 = vst [vmem:[#allocation3 + $0x5] sm:$0x1] %v875
          %s877 = sld [smem:[#allocation8 + $0x6]]
          %s878 = scalar_lea.vmem [#allocation6], %s877
          %v879 = vld [vmem:[%s878] sm:$0x1]
          %880 = vst [vmem:[#allocation3 + $0x6] sm:$0x1] %v879
          %s881 = sld [smem:[#allocation8 + $0x7]]
          %s882 = scalar_lea.vmem [#allocation6], %s881
          %v883 = vld [vmem:[%s882] sm:$0x1]
          %884 = vst [vmem:[#allocation3 + $0x7] sm:$0x1] %v883
          %s885 = sld [smem:[#allocation8 + $0x8]]
          %s886 = scalar_lea.vmem [#allocation6], %s885
          %v887 = vld [vmem:[%s886] sm:$0x1]
          %888 = vst [vmem:[#allocation3 + $0x8] sm:$0x1] %v887
          %s889 = sld [smem:[#allocation8 + $0x9]]
          %s890 = scalar_lea.vmem [#allocation6], %s889
          %v891 = vld [vmem:[%s890] sm:$0x1]
          %892 = vst [vmem:[#allocation3 + $0x9] sm:$0x1] %v891
          %s893 = sld [smem:[#allocation8 + $0xa]]
          %s894 = scalar_lea.vmem [#allocation6], %s893
          %v895 = vld [vmem:[%s894] sm:$0x1]
          %896 = vst [vmem:[#allocation3 + $0xa] sm:$0x1] %v895
          %s897 = sld [smem:[#allocation8 + $0xb]]
          %s898 = scalar_lea.vmem [#allocation6], %s897
          %v899 = vld [vmem:[%s898] sm:$0x1]
          %900 = vst [vmem:[#allocation3 + $0xb] sm:$0x1] %v899
          %s901 = sld [smem:[#allocation8 + $0xc]]
          %s902 = scalar_lea.vmem [#allocation6], %s901
          %v903 = vld [vmem:[%s902] sm:$0x1]
          %904 = vst [vmem:[#allocation3 + $0xc] sm:$0x1] %v903
          %s905 = sld [smem:[#allocation8 + $0xd]]
          %s906 = scalar_lea.vmem [#allocation6], %s905
          %v907 = vld [vmem:[%s906] sm:$0x1]
          %908 = vst [vmem:[#allocation3 + $0xd] sm:$0x1] %v907
          %s909 = sld [smem:[#allocation8 + $0xe]]
          %s910 = scalar_lea.vmem [#allocation6], %s909
          %v911 = vld [vmem:[%s910] sm:$0x1]
          %912 = vst [vmem:[#allocation3 + $0xe] sm:$0x1] %v911
          %s913 = sld [smem:[#allocation8 + $0xf]]
          %s914 = scalar_lea.vmem [#allocation6], %s913
          %v915 = vld [vmem:[%s914] sm:$0x1]
          %916 = vst [vmem:[#allocation3 + $0xf] sm:$0x1] %v915
          %s917 = sld [smem:[#allocation8 + $0x10]]
          %s918 = scalar_lea.vmem [#allocation6], %s917
          %v919 = vld [vmem:[%s918] sm:$0x1]
          %920 = vst [vmem:[#allocation3 + $0x10] sm:$0x1] %v919
          %s921 = sld [smem:[#allocation8 + $0x11]]
          %s922 = scalar_lea.vmem [#allocation6], %s921
          %v923 = vld [vmem:[%s922] sm:$0x1]
          %924 = vst [vmem:[#allocation3 + $0x11] sm:$0x1] %v923
          %s925 = sld [smem:[#allocation8 + $0x12]]
          %s926 = scalar_lea.vmem [#allocation6], %s925
          %v927 = vld [vmem:[%s926] sm:$0x1]
          %928 = vst [vmem:[#allocation3 + $0x12] sm:$0x1] %v927
          %s929 = sld [smem:[#allocation8 + $0x13]]
          %s930 = scalar_lea.vmem [#allocation6], %s929
          %v931 = vld [vmem:[%s930] sm:$0x1]
          %932 = vst [vmem:[#allocation3 + $0x13] sm:$0x1] %v931
          %s933 = sld [smem:[#allocation8 + $0x14]]
          %s934 = scalar_lea.vmem [#allocation6], %s933
          %v935 = vld [vmem:[%s934] sm:$0x1]
          %936 = vst [vmem:[#allocation3 + $0x14] sm:$0x1] %v935
          %s937 = sld [smem:[#allocation8 + $0x15]]
          %s938 = scalar_lea.vmem [#allocation6], %s937
          %v939 = vld [vmem:[%s938] sm:$0x1]
          %940 = vst [vmem:[#allocation3 + $0x15] sm:$0x1] %v939
        $region100: #{forward.2} parent=83 // pred_fallthru
          _
        %s941 = sld [smem:[#allocation8]]
        %s942 = scalar_lea.vmem [#allocation2], %s941
        %v943 = vld [vmem:[%s942] sm:$0x1]
        %944 = vst [vmem:[#allocation4] sm:$0x1] %v943
        %s945 = sld [smem:[#allocation9]]
        %s946 = scalar_lea.vmem [#allocation2], %s945
        %v947 = vld [vmem:[%s946] sm:$0x1]
        %948 = vst [vmem:[#allocation5] sm:$0x1] %v947
        %s949 = sld [smem:[#allocation8 + $0x1]]
        %s950 = scalar_lea.vmem [#allocation2], %s949
        %v951 = vld [vmem:[%s950] sm:$0x1]
        %952 = vst [vmem:[#allocation4 + $0x1] sm:$0x1] %v951
        %s953 = sld [smem:[#allocation9 + $0x1]]
        %s954 = scalar_lea.vmem [#allocation2], %s953
        %v955 = vld [vmem:[%s954] sm:$0x1]
        %956 = vst [vmem:[#allocation5 + $0x1] sm:$0x1] %v955
        %s957 = sld [smem:[#allocation8 + $0x2]]
        %s958 = scalar_lea.vmem [#allocation2], %s957
        %v959 = vld [vmem:[%s958] sm:$0x1]
        %960 = vst [vmem:[#allocation4 + $0x2] sm:$0x1] %v959
        %s961 = sld [smem:[#allocation9 + $0x2]]
        %s962 = scalar_lea.vmem [#allocation2], %s961
        %v963 = vld [vmem:[%s962] sm:$0x1]
        %964 = vst [vmem:[#allocation5 + $0x2] sm:$0x1] %v963
        %s965 = sld [smem:[#allocation8 + $0x3]]
        %s966 = scalar_lea.vmem [#allocation2], %s965
        %v967 = vld [vmem:[%s966] sm:$0x1]
        %968 = vst [vmem:[#allocation4 + $0x3] sm:$0x1] %v967
        %s969 = sld [smem:[#allocation9 + $0x3]]
        %s970 = scalar_lea.vmem [#allocation2], %s969
        %v971 = vld [vmem:[%s970] sm:$0x1]
        %972 = vst [vmem:[#allocation5 + $0x3] sm:$0x1] %v971
        %s973 = sld [smem:[#allocation8 + $0x4]]
        %s974 = scalar_lea.vmem [#allocation2], %s973
        %v975 = vld [vmem:[%s974] sm:$0x1]
        %976 = vst [vmem:[#allocation4 + $0x4] sm:$0x1] %v975
        %s977 = sld [smem:[#allocation9 + $0x4]]
        %s978 = scalar_lea.vmem [#allocation2], %s977
        %v979 = vld [vmem:[%s978] sm:$0x1]
        %980 = vst [vmem:[#allocation5 + $0x4] sm:$0x1] %v979
        %s981 = sld [smem:[#allocation8 + $0x5]]
        %s982 = scalar_lea.vmem [#allocation2], %s981
        %v983 = vld [vmem:[%s982] sm:$0x1]
        %984 = vst [vmem:[#allocation4 + $0x5] sm:$0x1] %v983
        %s985 = sld [smem:[#allocation9 + $0x5]]
        %s986 = scalar_lea.vmem [#allocation2], %s985
        %v987 = vld [vmem:[%s986] sm:$0x1]
        %988 = vst [vmem:[#allocation5 + $0x5] sm:$0x1] %v987
        %s989 = sld [smem:[#allocation8 + $0x6]]
        %s990 = scalar_lea.vmem [#allocation2], %s989
        %v991 = vld [vmem:[%s990] sm:$0x1]
        %992 = vst [vmem:[#allocation4 + $0x6] sm:$0x1] %v991
        %s993 = sld [smem:[#allocation9 + $0x6]]
        %s994 = scalar_lea.vmem [#allocation2], %s993
        %v995 = vld [vmem:[%s994] sm:$0x1]
        %996 = vst [vmem:[#allocation5 + $0x6] sm:$0x1] %v995
        %s997 = sld [smem:[#allocation8 + $0x7]]
        %s998 = scalar_lea.vmem [#allocation2], %s997
        %v999 = vld [vmem:[%s998] sm:$0x1]
        %1000 = vst [vmem:[#allocation4 + $0x7] sm:$0x1] %v999
        %s1001 = sld [smem:[#allocation9 + $0x7]]
        %s1002 = scalar_lea.vmem [#allocation2], %s1001
        %v1003 = vld [vmem:[%s1002] sm:$0x1]
        %1004 = vst [vmem:[#allocation5 + $0x7] sm:$0x1] %v1003
        %s1005 = sld [smem:[#allocation8 + $0x8]]
        %s1006 = scalar_lea.vmem [#allocation2], %s1005
        %v1007 = vld [vmem:[%s1006] sm:$0x1]
        %1008 = vst [vmem:[#allocation4 + $0x8] sm:$0x1] %v1007
        %s1009 = sld [smem:[#allocation9 + $0x8]]
        %s1010 = scalar_lea.vmem [#allocation2], %s1009
        %v1011 = vld [vmem:[%s1010] sm:$0x1]
        %1012 = vst [vmem:[#allocation5 + $0x8] sm:$0x1] %v1011
        %s1013 = sld [smem:[#allocation8 + $0x9]]
        %s1014 = scalar_lea.vmem [#allocation2], %s1013
        %v1015 = vld [vmem:[%s1014] sm:$0x1]
        %1016 = vst [vmem:[#allocation4 + $0x9] sm:$0x1] %v1015
        %s1017 = sld [smem:[#allocation9 + $0x9]]
        %s1018 = scalar_lea.vmem [#allocation2], %s1017
        %v1019 = vld [vmem:[%s1018] sm:$0x1]
        %1020 = vst [vmem:[#allocation5 + $0x9] sm:$0x1] %v1019
        %s1021 = sld [smem:[#allocation8 + $0xa]]
        %s1022 = scalar_lea.vmem [#allocation2], %s1021
        %v1023 = vld [vmem:[%s1022] sm:$0x1]
        %1024 = vst [vmem:[#allocation4 + $0xa] sm:$0x1] %v1023
        %s1025 = sld [smem:[#allocation9 + $0xa]]
        %s1026 = scalar_lea.vmem [#allocation2], %s1025
        %v1027 = vld [vmem:[%s1026] sm:$0x1]
        %1028 = vst [vmem:[#allocation5 + $0xa] sm:$0x1] %v1027
        %s1029 = sld [smem:[#allocation8 + $0xb]]
        %s1030 = scalar_lea.vmem [#allocation2], %s1029
        %v1031 = vld [vmem:[%s1030] sm:$0x1]
        %1032 = vst [vmem:[#allocation4 + $0xb] sm:$0x1] %v1031
        %s1033 = sld [smem:[#allocation9 + $0xb]]
        %s1034 = scalar_lea.vmem [#allocation2], %s1033
        %v1035 = vld [vmem:[%s1034] sm:$0x1]
        %1036 = vst [vmem:[#allocation5 + $0xb] sm:$0x1] %v1035
        %s1037 = sld [smem:[#allocation8 + $0xc]]
        %s1038 = scalar_lea.vmem [#allocation2], %s1037
        %v1039 = vld [vmem:[%s1038] sm:$0x1]
        %1040 = vst [vmem:[#allocation4 + $0xc] sm:$0x1] %v1039
        %s1041 = sld [smem:[#allocation9 + $0xc]]
        %s1042 = scalar_lea.vmem [#allocation2], %s1041
        %v1043 = vld [vmem:[%s1042] sm:$0x1]
        %1044 = vst [vmem:[#allocation5 + $0xc] sm:$0x1] %v1043
        %s1045 = sld [smem:[#allocation8 + $0xd]]
        %s1046 = scalar_lea.vmem [#allocation2], %s1045
        %v1047 = vld [vmem:[%s1046] sm:$0x1]
        %1048 = vst [vmem:[#allocation4 + $0xd] sm:$0x1] %v1047
        %s1049 = sld [smem:[#allocation9 + $0xd]]
        %s1050 = scalar_lea.vmem [#allocation2], %s1049
        %v1051 = vld [vmem:[%s1050] sm:$0x1]
        %1052 = vst [vmem:[#allocation5 + $0xd] sm:$0x1] %v1051
        %s1053 = sld [smem:[#allocation8 + $0xe]]
        %s1054 = scalar_lea.vmem [#allocation2], %s1053
        %v1055 = vld [vmem:[%s1054] sm:$0x1]
        %1056 = vst [vmem:[#allocation4 + $0xe] sm:$0x1] %v1055
        %s1057 = sld [smem:[#allocation9 + $0xe]]
        %s1058 = scalar_lea.vmem [#allocation2], %s1057
        %v1059 = vld [vmem:[%s1058] sm:$0x1]
        %1060 = vst [vmem:[#allocation5 + $0xe] sm:$0x1] %v1059
        %s1061 = sld [smem:[#allocation8 + $0xf]]
        %s1062 = scalar_lea.vmem [#allocation2], %s1061
        %v1063 = vld [vmem:[%s1062] sm:$0x1]
        %1064 = vst [vmem:[#allocation4 + $0xf] sm:$0x1] %v1063
        %s1065 = sld [smem:[#allocation9 + $0xf]]
        %s1066 = scalar_lea.vmem [#allocation2], %s1065
        %v1067 = vld [vmem:[%s1066] sm:$0x1]
        %1068 = vst [vmem:[#allocation5 + $0xf] sm:$0x1] %v1067
        %s1069 = sld [smem:[#allocation8 + $0x10]]
        %s1070 = scalar_lea.vmem [#allocation2], %s1069
        %v1071 = vld [vmem:[%s1070] sm:$0x1]
        %1072 = vst [vmem:[#allocation4 + $0x10] sm:$0x1] %v1071
        %s1073 = sld [smem:[#allocation9 + $0x10]]
        %s1074 = scalar_lea.vmem [#allocation2], %s1073
        %v1075 = vld [vmem:[%s1074] sm:$0x1]
        %1076 = vst [vmem:[#allocation5 + $0x10] sm:$0x1] %v1075
        %s1077 = sld [smem:[#allocation8 + $0x11]]
        %s1078 = scalar_lea.vmem [#allocation2], %s1077
        %v1079 = vld [vmem:[%s1078] sm:$0x1]
        %1080 = vst [vmem:[#allocation4 + $0x11] sm:$0x1] %v1079
        %s1081 = sld [smem:[#allocation9 + $0x11]]
        %s1082 = scalar_lea.vmem [#allocation2], %s1081
        %v1083 = vld [vmem:[%s1082] sm:$0x1]
        %1084 = vst [vmem:[#allocation5 + $0x11] sm:$0x1] %v1083
        %s1085 = sld [smem:[#allocation8 + $0x12]]
        %s1086 = scalar_lea.vmem [#allocation2], %s1085
        %v1087 = vld [vmem:[%s1086] sm:$0x1]
        %1088 = vst [vmem:[#allocation4 + $0x12] sm:$0x1] %v1087
        %s1089 = sld [smem:[#allocation9 + $0x12]]
        %s1090 = scalar_lea.vmem [#allocation2], %s1089
        %v1091 = vld [vmem:[%s1090] sm:$0x1]
        %1092 = vst [vmem:[#allocation5 + $0x12] sm:$0x1] %v1091
        %s1093 = sld [smem:[#allocation8 + $0x13]]
        %s1094 = scalar_lea.vmem [#allocation2], %s1093
        %v1095 = vld [vmem:[%s1094] sm:$0x1]
        %1096 = vst [vmem:[#allocation4 + $0x13] sm:$0x1] %v1095
        %s1097 = sld [smem:[#allocation9 + $0x13]]
        %s1098 = scalar_lea.vmem [#allocation2], %s1097
        %v1099 = vld [vmem:[%s1098] sm:$0x1]
        %1100 = vst [vmem:[#allocation5 + $0x13] sm:$0x1] %v1099
        %s1101 = sld [smem:[#allocation8 + $0x14]]
        %s1102 = scalar_lea.vmem [#allocation2], %s1101
        %v1103 = vld [vmem:[%s1102] sm:$0x1]
        %1104 = vst [vmem:[#allocation4 + $0x14] sm:$0x1] %v1103
        %s1105 = sld [smem:[#allocation9 + $0x14]]
        %s1106 = scalar_lea.vmem [#allocation2], %s1105
        %v1107 = vld [vmem:[%s1106] sm:$0x1]
        %1108 = vst [vmem:[#allocation5 + $0x14] sm:$0x1] %v1107
        %s1109 = sld [smem:[#allocation8 + $0x15]]
        %s1110 = scalar_lea.vmem [#allocation2], %s1109
        %v1111 = vld [vmem:[%s1110] sm:$0x1]
        %1112 = vst [vmem:[#allocation4 + $0x15] sm:$0x1] %v1111
        %s1113 = sld [smem:[#allocation9 + $0x15]]
        %s1114 = scalar_lea.vmem [#allocation2], %s1113
        %v1115 = vld [vmem:[%s1114] sm:$0x1]
        %1116 = vst [vmem:[#allocation5 + $0x15] sm:$0x1] %v1115
        %v1117 = vld [vmem:[#allocation2] sm:$0xff]
        %v1118 = vld [vmem:[#allocation2 + $0x8] sm:$0x3]
        %v1119 = vld [vmem:[#allocation3] sm:$0xff]
        %v1120 = vld [vmem:[#allocation3 + $0x8] sm:$0xff]
        %v1121 = vld [vmem:[#allocation3 + $0x10] sm:$0x3f]
        %v1122 = vld [vmem:[%s5] sm:$0xff]
        %v1123 = vld [vmem:[%s5 + $0x8] sm:$0xff]
        %v1124 = vld [vmem:[%s5 + $0x10] sm:$0x3f]
        %v1125 = vld [vmem:[#allocation4] sm:$0xff]
        %v1126 = vld [vmem:[#allocation4 + $0x8] sm:$0xff]
        %v1127 = vld [vmem:[#allocation4 + $0x10] sm:$0x3f]
        %1129 = vset.pattern.permute.xlu0 0
        %1130 = vperm.xlu0 %1129, %v1122
        %v1131 = vpop.permute.xlu0 %1130
        %1134 = vset.pattern.permute.xlu0 0
        %1135 = vperm.xlu0 %1134, %v1123
        %v1136 = vpop.permute.xlu0 %1135
        %1139 = vset.pattern.permute.xlu0 0
        %1140 = vperm.xlu0 %1139, %v1124
        %v1141 = vpop.permute.xlu0 %1140
        %v1143 = vmul.f32 %v1131, %v1125
        %v1144 = vmul.f32 %v1136, %v1126
        %v1145 = vmul.f32 %v1141, %v1127
        %v1146 = vld [vmem:[#allocation5] sm:$0xff]
        %v1147 = vld [vmem:[#allocation5 + $0x8] sm:$0xff]
        %v1148 = vld [vmem:[#allocation5 + $0x10] sm:$0x3f]
        %v1149 = vadd.f32 %v1143, %v1146
        %v1150 = vadd.f32 %v1144, %v1147
        %v1151 = vadd.f32 %v1145, %v1148
        %v1152 = vpack.c.bf16 %v1120, %v1119
        %v1153 = vpack.c.bf16 %v1121, %v1121
        %v1154 = vpack.c.bf16 %v1150, %v1149
        %v1155 = vpack.c.bf16 %v1151, %v1151
        %v1156 = vpack.c.bf16 %v1144, %v1143
        %v1157 = vpack.c.bf16 %v1145, %v1145
        %v1158 = vld [vmem:[%s641] sm:$0xf]
        %v1159 = vld [vmem:[%s641 + $0x4] sm:$0xf]
        %v1160 = vld [vmem:[%s641 + $0x8] sm:$0xf]
        %v1161 = vld [vmem:[%s641 + $0xc] sm:$0xf]
        %v1162 = vld [vmem:[%s641 + $0x10] sm:$0xf]
        %v1163 = vld [vmem:[%s641 + $0x14] sm:$0xf]
        %v1164 = vld [vmem:[%s641 + $0x18] sm:$0xf]
        %v1165 = vld [vmem:[%s641 + $0x1c] sm:$0xf]
        %v1166 = vld [vmem:[%s641 + $0x20] sm:$0xf]
        %v1167 = vld [vmem:[%s641 + $0x24] sm:$0xf]
        %v1168 = vld [vmem:[%s641 + $0x28] sm:$0xf]
        %v1169 = vld [vmem:[%s641 + $0x2c] sm:$0xf]
        %v1170 = vld [vmem:[%s641 + $0x30] sm:$0xf]
        %v1171 = vld [vmem:[%s641 + $0x34] sm:$0xf]
        %v1172 = vld [vmem:[%s641 + $0x38] sm:$0xf]
        %v1173 = vld [vmem:[%s641 + $0x3c] sm:$0xf]
        %v1174 = vld [vmem:[%s641 + $0x40] sm:$0xf]
        %v1175 = vld [vmem:[%s641 + $0x44] sm:$0xf]
        %v1176 = vld [vmem:[%s641 + $0x48] sm:$0xf]
        %v1177 = vld [vmem:[%s641 + $0x4c] sm:$0xf]
        %v1178 = vld [vmem:[%s641 + $0x50] sm:$0xf]
        %v1179 = vld [vmem:[%s641 + $0x54] sm:$0xf]
        %v1180 = vld [vmem:[%s641 + $0x58] sm:$0xf]
        %v1181 = vld [vmem:[%s641 + $0x5c] sm:$0xf]
        %v1182 = vld [vmem:[%s641 + $0x60] sm:$0xf]
        %v1183 = vld [vmem:[%s641 + $0x64] sm:$0xf]
        %v1184 = vld [vmem:[%s641 + $0x68] sm:$0xf]
        %v1185 = vld [vmem:[%s641 + $0x6c] sm:$0xf]
        %v1186 = vld [vmem:[%s641 + $0x70] sm:$0xf]
        %v1187 = vld [vmem:[%s641 + $0x74] sm:$0xf]
        %v1188 = vld [vmem:[%s641 + $0x78] sm:$0xf]
        %v1189 = vld [vmem:[%s641 + $0x7c] sm:$0xf]
        %v1190 = vld [vmem:[%s641 + $0x80] sm:$0xf]
        %v1191 = vld [vmem:[%s641 + $0x84] sm:$0xf]
        %v1192 = vld [vmem:[%s641 + $0x88] sm:$0xf]
        %v1193 = vld [vmem:[%s641 + $0x8c] sm:$0xf]
        %v1194 = vld [vmem:[%s641 + $0x90] sm:$0xf]
        %v1195 = vld [vmem:[%s641 + $0x94] sm:$0xf]
        %v1196 = vld [vmem:[%s641 + $0x98] sm:$0xf]
        %v1197 = vld [vmem:[%s641 + $0x9c] sm:$0xf]
        %v1198 = vld [vmem:[%s641 + $0xa0] sm:$0xf]
        %v1199 = vld [vmem:[%s641 + $0xa4] sm:$0xf]
        %v1200 = vld [vmem:[%s641 + $0xa8] sm:$0xf]
        %v1201 = vld [vmem:[%s641 + $0xac] sm:$0xf]
        %v1202 = vld [vmem:[%s641 + $0xb0] sm:$0xf]
        %v1203 = vld [vmem:[%s641 + $0xb4] sm:$0xf]
        %v1204 = vld [vmem:[%s641 + $0xb8] sm:$0xf]
        %v1205 = vld [vmem:[%s641 + $0xbc] sm:$0xf]
        %v1222 = vunpack.c.l.b16 %v1174
        %v1223 = vunpack.c.l.b16 %v1175
        %v1224 = vunpack.c.l.b16 %v1176
        %v1225 = vunpack.c.l.b16 %v1177
        %v1226 = vunpack.c.l.b16 %v1178
        %v1227 = vunpack.c.l.b16 %v1179
        %v1228 = vunpack.c.l.b16 %v1180
        %v1229 = vunpack.c.l.b16 %v1181
        %v1230 = vunpack.c.l.b16 %v1182
        %v1231 = vunpack.c.l.b16 %v1183
        %v1232 = vunpack.c.l.b16 %v1184
        %v1233 = vunpack.c.l.b16 %v1185
        %v1234 = vunpack.c.l.b16 %v1186
        %v1235 = vunpack.c.l.b16 %v1187
        %v1236 = vunpack.c.l.b16 %v1188
        %v1237 = vunpack.c.l.b16 %v1189
        %v1238 = vpack.c.b16 %v1223, %v1222
        %v1239 = vpack.c.b16 %v1225, %v1224
        %v1240 = vpack.c.b16 %v1227, %v1226
        %v1241 = vpack.c.b16 %v1229, %v1228
        %v1242 = vpack.c.b16 %v1231, %v1230
        %v1243 = vpack.c.b16 %v1233, %v1232
        %v1244 = vpack.c.b16 %v1235, %v1234
        %v1245 = vpack.c.b16 %v1237, %v1236
        %1254 = vmatprep.subr.bf16.mxu0 0
        %1255 = vmatpush1.bf16.msra.mxu0 %v1245
        %1256 = vmatprep.subr.bf16.mxu0 0
        %1257 = vmatpush1.bf16.msra.mxu0 %v1244
        %1258 = vmatprep.subr.bf16.mxu0 0
        %1259 = vmatpush1.bf16.msra.mxu0 %v1243
        %1260 = vmatprep.subr.bf16.mxu0 0
        %1261 = vmatpush1.bf16.msra.mxu0 %v1242
        %1262 = vmatprep.subr.bf16.mxu0 0
        %1263 = vmatpush1.bf16.msra.mxu0 %v1241
        %1264 = vmatprep.subr.bf16.mxu0 0
        %1265 = vmatpush1.bf16.msra.mxu0 %v1240
        %1266 = vmatprep.subr.bf16.mxu0 0
        %1267 = vmatpush1.bf16.msra.mxu0 %v1239
        %1268 = vmatprep.subr.bf16.mxu0 0
        %1269 = vmatpush1.bf16.msra.mxu0 %v1238
        %1270 = vmatprep.subr.bf16.mxu0 0
        %1271 = vmatpush2.bf16.msra.mxu0 0
        %1272 = vmatprep.subr.bf16.mxu0 0
        %1273 = vmatpush2.bf16.msra.mxu0 0
        %1274 = vmatprep.subr.bf16.mxu0 0
        %1275 = vmatpush2.bf16.msra.mxu0 0
        %1276 = vmatprep.subr.bf16.mxu0 0
        %1277 = vmatpush2.bf16.msra.mxu0 0
        %1278 = vmatprep.subr.bf16.mxu0 0
        %1279 = vmatpush2.bf16.msra.mxu0 0
        %1280 = vmatprep.subr.bf16.mxu0 0
        %1281 = vmatpush2.bf16.msra.mxu0 0
        %1282 = vmatprep.subr.bf16.mxu0 0
        %1283 = vmatpush2.bf16.msra.mxu0 0
        %1284 = vmatprep.subr.bf16.mxu0 0
        %1285 = vmatpush2.bf16.msra.mxu0 0
        %1286 = vmatprep.mubr.bf16.mxu0 0
        %1287 = vmatmul.mubr.bf16.gmra.mxu0 %v1154
        %v1288 = vpop.f32.mrf.mxu0
        %v1289 = vadd.f32 0.0, %v1288
        %v1290 = vpop.f32.mrf.mxu0
        %v1291 = vpop.f32.mrf.mxu0
        %v1292 = vadd.f32 0.0, %v1291
        %v1293 = vpop.f32.mrf.mxu0
        %1294 = vmatprep.mubr.bf16.mxu0 0
        %1295 = vmatmul.mubr.bf16.gmra.mxu0 %v1155
        %v1296 = vpop.f32.mrf.mxu0
        %v1297 = vadd.f32 0.0, %v1296
        %v1298 = vpop.f32.mrf.mxu0
        %v1299 = vpop.f32.mrf.mxu0
        %v1300 = vpop.f32.mrf.mxu0
        %1301 = vdwg.mxu0
        %v1318 = vunpack.c.l.b16 %v1158
        %v1319 = vunpack.c.l.b16 %v1159
        %v1320 = vunpack.c.l.b16 %v1160
        %v1321 = vunpack.c.l.b16 %v1161
        %v1322 = vunpack.c.l.b16 %v1162
        %v1323 = vunpack.c.l.b16 %v1163
        %v1324 = vunpack.c.l.b16 %v1164
        %v1325 = vunpack.c.l.b16 %v1165
        %v1326 = vunpack.c.l.b16 %v1166
        %v1327 = vunpack.c.l.b16 %v1167
        %v1328 = vunpack.c.l.b16 %v1168
        %v1329 = vunpack.c.l.b16 %v1169
        %v1330 = vunpack.c.l.b16 %v1170
        %v1331 = vunpack.c.l.b16 %v1171
        %v1332 = vunpack.c.l.b16 %v1172
        %v1333 = vunpack.c.l.b16 %v1173
        %v1334 = vpack.c.b16 %v1319, %v1318
        %v1335 = vpack.c.b16 %v1321, %v1320
        %v1336 = vpack.c.b16 %v1323, %v1322
        %v1337 = vpack.c.b16 %v1325, %v1324
        %v1338 = vpack.c.b16 %v1327, %v1326
        %v1339 = vpack.c.b16 %v1329, %v1328
        %v1340 = vpack.c.b16 %v1331, %v1330
        %v1341 = vpack.c.b16 %v1333, %v1332
        %1350 = vmatprep.subr.bf16.mxu0 0
        %1351 = vmatpush1.bf16.msra.mxu0 %v1341
        %1352 = vmatprep.subr.bf16.mxu0 0
        %1353 = vmatpush1.bf16.msra.mxu0 %v1340
        %1354 = vmatprep.subr.bf16.mxu0 0
        %1355 = vmatpush1.bf16.msra.mxu0 %v1339
        %1356 = vmatprep.subr.bf16.mxu0 0
        %1357 = vmatpush1.bf16.msra.mxu0 %v1338
        %1358 = vmatprep.subr.bf16.mxu0 0
        %1359 = vmatpush1.bf16.msra.mxu0 %v1337
        %1360 = vmatprep.subr.bf16.mxu0 0
        %1361 = vmatpush1.bf16.msra.mxu0 %v1336
        %1362 = vmatprep.subr.bf16.mxu0 0
        %1363 = vmatpush1.bf16.msra.mxu0 %v1335
        %1364 = vmatprep.subr.bf16.mxu0 0
        %1365 = vmatpush1.bf16.msra.mxu0 %v1334
        %1366 = vmatprep.subr.bf16.mxu0 0
        %1367 = vmatpush2.bf16.msra.mxu0 0
        %1368 = vmatprep.subr.bf16.mxu0 0
        %1369 = vmatpush2.bf16.msra.mxu0 0
        %1370 = vmatprep.subr.bf16.mxu0 0
        %1371 = vmatpush2.bf16.msra.mxu0 0
        %1372 = vmatprep.subr.bf16.mxu0 0
        %1373 = vmatpush2.bf16.msra.mxu0 0
        %1374 = vmatprep.subr.bf16.mxu0 0
        %1375 = vmatpush2.bf16.msra.mxu0 0
        %1376 = vmatprep.subr.bf16.mxu0 0
        %1377 = vmatpush2.bf16.msra.mxu0 0
        %1378 = vmatprep.subr.bf16.mxu0 0
        %1379 = vmatpush2.bf16.msra.mxu0 0
        %1380 = vmatprep.subr.bf16.mxu0 0
        %1381 = vmatpush2.bf16.msra.mxu0 0
        %1382 = vmatprep.mubr.bf16.mxu0 0
        %1383 = vmatmul.mubr.bf16.gmra.mxu0 %v1152
        %v1384 = vpop.f32.mrf.mxu0
        %v1385 = vadd.f32 %v1289, %v1384
        %v1386 = vpop.f32.mrf.mxu0
        %v1387 = vpop.f32.mrf.mxu0
        %v1388 = vadd.f32 %v1292, %v1387
        %v1389 = vpop.f32.mrf.mxu0
        %1390 = vmatprep.mubr.bf16.mxu0 0
        %1391 = vmatmul.mubr.bf16.gmra.mxu0 %v1153
        %v1392 = vpop.f32.mrf.mxu0
        %v1393 = vadd.f32 %v1297, %v1392
        %v1394 = vpop.f32.mrf.mxu0
        %v1395 = vpop.f32.mrf.mxu0
        %v1396 = vpop.f32.mrf.mxu0
        %1397 = vdwg.mxu0
        %v1414 = vunpack.c.l.b16 %v1190
        %v1415 = vunpack.c.l.b16 %v1191
        %v1416 = vunpack.c.l.b16 %v1192
        %v1417 = vunpack.c.l.b16 %v1193
        %v1418 = vunpack.c.l.b16 %v1194
        %v1419 = vunpack.c.l.b16 %v1195
        %v1420 = vunpack.c.l.b16 %v1196
        %v1421 = vunpack.c.l.b16 %v1197
        %v1422 = vunpack.c.l.b16 %v1198
        %v1423 = vunpack.c.l.b16 %v1199
        %v1424 = vunpack.c.l.b16 %v1200
        %v1425 = vunpack.c.l.b16 %v1201
        %v1426 = vunpack.c.l.b16 %v1202
        %v1427 = vunpack.c.l.b16 %v1203
        %v1428 = vunpack.c.l.b16 %v1204
        %v1429 = vunpack.c.l.b16 %v1205
        %v1430 = vpack.c.b16 %v1415, %v1414
        %v1431 = vpack.c.b16 %v1417, %v1416
        %v1432 = vpack.c.b16 %v1419, %v1418
        %v1433 = vpack.c.b16 %v1421, %v1420
        %v1434 = vpack.c.b16 %v1423, %v1422
        %v1435 = vpack.c.b16 %v1425, %v1424
        %v1436 = vpack.c.b16 %v1427, %v1426
        %v1437 = vpack.c.b16 %v1429, %v1428
        %1446 = vmatprep.subr.bf16.mxu0 0
        %1447 = vmatpush1.bf16.msra.mxu0 %v1437
        %1448 = vmatprep.subr.bf16.mxu0 0
        %1449 = vmatpush1.bf16.msra.mxu0 %v1436
        %1450 = vmatprep.subr.bf16.mxu0 0
        %1451 = vmatpush1.bf16.msra.mxu0 %v1435
        %1452 = vmatprep.subr.bf16.mxu0 0
        %1453 = vmatpush1.bf16.msra.mxu0 %v1434
        %1454 = vmatprep.subr.bf16.mxu0 0
        %1455 = vmatpush1.bf16.msra.mxu0 %v1433
        %1456 = vmatprep.subr.bf16.mxu0 0
        %1457 = vmatpush1.bf16.msra.mxu0 %v1432
        %1458 = vmatprep.subr.bf16.mxu0 0
        %1459 = vmatpush1.bf16.msra.mxu0 %v1431
        %1460 = vmatprep.subr.bf16.mxu0 0
        %1461 = vmatpush1.bf16.msra.mxu0 %v1430
        %1462 = vmatprep.subr.bf16.mxu0 0
        %1463 = vmatpush2.bf16.msra.mxu0 0
        %1464 = vmatprep.subr.bf16.mxu0 0
        %1465 = vmatpush2.bf16.msra.mxu0 0
        %1466 = vmatprep.subr.bf16.mxu0 0
        %1467 = vmatpush2.bf16.msra.mxu0 0
        %1468 = vmatprep.subr.bf16.mxu0 0
        %1469 = vmatpush2.bf16.msra.mxu0 0
        %1470 = vmatprep.subr.bf16.mxu0 0
        %1471 = vmatpush2.bf16.msra.mxu0 0
        %1472 = vmatprep.subr.bf16.mxu0 0
        %1473 = vmatpush2.bf16.msra.mxu0 0
        %1474 = vmatprep.subr.bf16.mxu0 0
        %1475 = vmatpush2.bf16.msra.mxu0 0
        %1476 = vmatprep.subr.bf16.mxu0 0
        %1477 = vmatpush2.bf16.msra.mxu0 0
        %1478 = vmatprep.mubr.bf16.mxu0 0
        %1479 = vmatmul.mubr.bf16.gmra.mxu0 %v1156
        %v1480 = vpop.f32.mrf.mxu0
        %v1481 = vadd.f32 0.0, %v1480
        %v1482 = vpop.f32.mrf.mxu0
        %v1483 = vpop.f32.mrf.mxu0
        %v1484 = vadd.f32 0.0, %v1483
        %v1485 = vpop.f32.mrf.mxu0
        %1486 = vmatprep.mubr.bf16.mxu0 0
        %1487 = vmatmul.mubr.bf16.gmra.mxu0 %v1157
        %v1488 = vpop.f32.mrf.mxu0
        %v1489 = vadd.f32 0.0, %v1488
        %v1490 = vpop.f32.mrf.mxu0
        %v1491 = vpop.f32.mrf.mxu0
        %v1492 = vpop.f32.mrf.mxu0
        %1493 = vdwg.mxu0
        %v1494 = vadd.f32 %v1385, %v1481
        %v1495 = vadd.f32 %v1388, %v1484
        %v1496 = vadd.f32 %v1393, %v1489
        %v1497 = vld [vmem:[%s746] sm:$0x1]
        %v1498 = vld [vmem:[%s749] sm:$0x1]
        %v1499 = vadd.f32 %v1494, %v1495
        %vm1500 = vcmask 1045504
        %v1501 = vsel %vm1500, %v1496, 0.0
        %v1502 = vadd.f32 %v1499, %v1501
        %v1503 = vrot.slane %v1502, 4
        %v1504 = vadd.f32 %v1502, %v1503
        %v1505 = vrot.slane %v1504, 2
        %v1506 = vadd.f32 %v1504, %v1505
        %v1507 = vrot.slane %v1506, 1
        %v1508 = vadd.f32 %v1506, %v1507
        %v1509 = vrcp.pop 22.0
        %v1510 = vmul.f32 %v1508, %v1509
        %v1511 = vsub.f32 %v1494, %v1510
        %v1512 = vsub.f32 %v1495, %v1510
        %v1513 = vsub.f32 %v1496, %v1510
        %v1514 = vmul.f32 %v1511, %v1511
        %v1515 = vmul.f32 %v1512, %v1512
        %v1516 = vmul.f32 %v1513, %v1513
        %v1517 = vadd.f32 %v1514, %v1515
        %v1518 = vsel %vm1500, %v1516, 0.0
        %v1519 = vadd.f32 %v1517, %v1518
        %v1520 = vrot.slane %v1519, 4
        %v1521 = vadd.f32 %v1519, %v1520
        %v1522 = vrot.slane %v1521, 2
        %v1523 = vadd.f32 %v1521, %v1522
        %v1524 = vrot.slane %v1523, 1
        %v1525 = vadd.f32 %v1523, %v1524
        %v1526 = vmul.f32 %v1525, %v1509
        %v1527 = vadd.f32 %v1526, 1e-05
        %v1528 = vrsqrt.pop %v1527
        %v1529 = vmul.f32 %v1511, %v1528
        %v1530 = vmul.f32 %v1512, %v1528
        %v1531 = vmul.f32 %v1513, %v1528
        %v1533 = vlaneseq
        %v1534 = vshrl.u32 %v1533, 7
        %v1535 = vsub.s32 0, %v1534
        %v1536 = vrot.slane %v1497, %v1535
        %v1538 = vmul.f32 %v1529, %v1536
        %v1539 = vmul.f32 %v1530, %v1536
        %v1540 = vmul.f32 %v1531, %v1536
        %v1542 = vlaneseq
        %v1543 = vshrl.u32 %v1542, 7
        %v1544 = vsub.s32 0, %v1543
        %v1545 = vrot.slane %v1498, %v1544
        %v1547 = vadd.f32 %v1538, %v1545
        %v1548 = vadd.f32 %v1539, %v1545
        %v1549 = vadd.f32 %v1540, %v1545
        %v1550 = vmax.f32 %v1547, 0.0
        %v1551 = vmax.f32 %v1548, 0.0
        %v1552 = vmax.f32 %v1549, 0.0
        %v1553 = vpack.c.bf16 %v1551, %v1550
        %v1554 = vpack.c.bf16 %v1552, %v1552
        %v1555 = vld [vmem:[%s650] sm:$0xf]
        %v1556 = vld [vmem:[%s650 + $0x4] sm:$0xf]
        %v1557 = vld [vmem:[%s650 + $0x8] sm:$0xf]
        %v1558 = vld [vmem:[%s650 + $0xc] sm:$0xf]
        %v1559 = vld [vmem:[%s650 + $0x10] sm:$0xf]
        %v1560 = vld [vmem:[%s650 + $0x14] sm:$0xf]
        %v1561 = vld [vmem:[%s650 + $0x18] sm:$0xf]
        %v1562 = vld [vmem:[%s650 + $0x1c] sm:$0xf]
        %v1563 = vld [vmem:[%s650 + $0x20] sm:$0xf]
        %v1564 = vld [vmem:[%s650 + $0x24] sm:$0xf]
        %v1565 = vld [vmem:[%s650 + $0x28] sm:$0xf]
        %v1566 = vld [vmem:[%s650 + $0x2c] sm:$0xf]
        %v1567 = vld [vmem:[%s650 + $0x30] sm:$0xf]
        %v1568 = vld [vmem:[%s650 + $0x34] sm:$0xf]
        %v1569 = vld [vmem:[%s650 + $0x38] sm:$0xf]
        %v1570 = vld [vmem:[%s650 + $0x3c] sm:$0xf]
        %v1587 = vunpack.c.l.b16 %v1555
        %v1588 = vunpack.c.l.b16 %v1556
        %v1589 = vunpack.c.l.b16 %v1557
        %v1590 = vunpack.c.l.b16 %v1558
        %v1591 = vunpack.c.l.b16 %v1559
        %v1592 = vunpack.c.l.b16 %v1560
        %v1593 = vunpack.c.l.b16 %v1561
        %v1594 = vunpack.c.l.b16 %v1562
        %v1595 = vunpack.c.l.b16 %v1563
        %v1596 = vunpack.c.l.b16 %v1564
        %v1597 = vunpack.c.l.b16 %v1565
        %v1598 = vunpack.c.l.b16 %v1566
        %v1599 = vunpack.c.l.b16 %v1567
        %v1600 = vunpack.c.l.b16 %v1568
        %v1601 = vunpack.c.l.b16 %v1569
        %v1602 = vunpack.c.l.b16 %v1570
        %v1603 = vpack.c.b16 %v1588, %v1587
        %v1604 = vpack.c.b16 %v1590, %v1589
        %v1605 = vpack.c.b16 %v1592, %v1591
        %v1606 = vpack.c.b16 %v1594, %v1593
        %v1607 = vpack.c.b16 %v1596, %v1595
        %v1608 = vpack.c.b16 %v1598, %v1597
        %v1609 = vpack.c.b16 %v1600, %v1599
        %v1610 = vpack.c.b16 %v1602, %v1601
        %1619 = vmatprep.subr.bf16.mxu0 0
        %1620 = vmatpush1.bf16.msra.mxu0 %v1610
        %1621 = vmatprep.subr.bf16.mxu0 0
        %1622 = vmatpush1.bf16.msra.mxu0 %v1609
        %1623 = vmatprep.subr.bf16.mxu0 0
        %1624 = vmatpush1.bf16.msra.mxu0 %v1608
        %1625 = vmatprep.subr.bf16.mxu0 0
        %1626 = vmatpush1.bf16.msra.mxu0 %v1607
        %1627 = vmatprep.subr.bf16.mxu0 0
        %1628 = vmatpush1.bf16.msra.mxu0 %v1606
        %1629 = vmatprep.subr.bf16.mxu0 0
        %1630 = vmatpush1.bf16.msra.mxu0 %v1605
        %1631 = vmatprep.subr.bf16.mxu0 0
        %1632 = vmatpush1.bf16.msra.mxu0 %v1604
        %1633 = vmatprep.subr.bf16.mxu0 0
        %1634 = vmatpush1.bf16.msra.mxu0 %v1603
        %1635 = vmatprep.subr.bf16.mxu0 0
        %1636 = vmatpush2.bf16.msra.mxu0 0
        %1637 = vmatprep.subr.bf16.mxu0 0
        %1638 = vmatpush2.bf16.msra.mxu0 0
        %1639 = vmatprep.subr.bf16.mxu0 0
        %1640 = vmatpush2.bf16.msra.mxu0 0
        %1641 = vmatprep.subr.bf16.mxu0 0
        %1642 = vmatpush2.bf16.msra.mxu0 0
        %1643 = vmatprep.subr.bf16.mxu0 0
        %1644 = vmatpush2.bf16.msra.mxu0 0
        %1645 = vmatprep.subr.bf16.mxu0 0
        %1646 = vmatpush2.bf16.msra.mxu0 0
        %1647 = vmatprep.subr.bf16.mxu0 0
        %1648 = vmatpush2.bf16.msra.mxu0 0
        %1649 = vmatprep.subr.bf16.mxu0 0
        %1650 = vmatpush2.bf16.msra.mxu0 0
        %1651 = vmatprep.mubr.bf16.mxu0 0
        %1652 = vmatmul.mubr.bf16.gmra.mxu0 %v1553
        %v1653 = vpop.f32.mrf.mxu0
        %v1654 = vadd.f32 0.0, %v1653
        %v1655 = vpop.f32.mrf.mxu0
        %v1656 = vpop.f32.mrf.mxu0
        %v1657 = vadd.f32 0.0, %v1656
        %v1658 = vpop.f32.mrf.mxu0
        %1659 = vmatprep.mubr.bf16.mxu0 0
        %1660 = vmatmul.mubr.bf16.gmra.mxu0 %v1554
        %v1661 = vpop.f32.mrf.mxu0
        %v1662 = vadd.f32 0.0, %v1661
        %v1663 = vpop.f32.mrf.mxu0
        %v1664 = vpop.f32.mrf.mxu0
        %v1665 = vpop.f32.mrf.mxu0
        %1666 = vdwg.mxu0
        %v1667 = vld [vmem:[%s752] sm:$0x1]
        %v1668 = vld [vmem:[%s755] sm:$0x1]
        %v1669 = vadd.f32 %v1654, %v1657
        %v1670 = vsel %vm1500, %v1662, 0.0
        %v1671 = vadd.f32 %v1669, %v1670
        %v1672 = vrot.slane %v1671, 4
        %v1673 = vadd.f32 %v1671, %v1672
        %v1674 = vrot.slane %v1673, 2
        %v1675 = vadd.f32 %v1673, %v1674
        %v1676 = vrot.slane %v1675, 1
        %v1677 = vadd.f32 %v1675, %v1676
        %v1678 = vmul.f32 %v1677, %v1509
        %v1679 = vsub.f32 %v1654, %v1678
        %v1680 = vsub.f32 %v1657, %v1678
        %v1681 = vsub.f32 %v1662, %v1678
        %v1682 = vmul.f32 %v1679, %v1679
        %v1683 = vmul.f32 %v1680, %v1680
        %v1684 = vmul.f32 %v1681, %v1681
        %v1685 = vadd.f32 %v1682, %v1683
        %v1686 = vsel %vm1500, %v1684, 0.0
        %v1687 = vadd.f32 %v1685, %v1686
        %v1688 = vrot.slane %v1687, 4
        %v1689 = vadd.f32 %v1687, %v1688
        %v1690 = vrot.slane %v1689, 2
        %v1691 = vadd.f32 %v1689, %v1690
        %v1692 = vrot.slane %v1691, 1
        %v1693 = vadd.f32 %v1691, %v1692
        %v1694 = vmul.f32 %v1693, %v1509
        %v1695 = vadd.f32 %v1694, 1e-05
        %v1696 = vrsqrt.pop %v1695
        %v1697 = vmul.f32 %v1679, %v1696
        %v1698 = vmul.f32 %v1680, %v1696
        %v1699 = vmul.f32 %v1681, %v1696
        %v1701 = vlaneseq
        %v1702 = vshrl.u32 %v1701, 7
        %v1703 = vsub.s32 0, %v1702
        %v1704 = vrot.slane %v1667, %v1703
        %v1706 = vmul.f32 %v1697, %v1704
        %v1707 = vmul.f32 %v1698, %v1704
        %v1708 = vmul.f32 %v1699, %v1704
        %v1710 = vlaneseq
        %v1711 = vshrl.u32 %v1710, 7
        %v1712 = vsub.s32 0, %v1711
        %v1713 = vrot.slane %v1668, %v1712
        %v1715 = vadd.f32 %v1706, %v1713
        %v1716 = vadd.f32 %v1707, %v1713
        %v1717 = vadd.f32 %v1708, %v1713
        %v1718 = vmax.f32 %v1715, 0.0
        %v1719 = vmax.f32 %v1716, 0.0
        %v1720 = vmax.f32 %v1717, 0.0
        %vm1721 = vcmask 179200
        %v1723 = vsel %vm1721, %v788, 0
        %vm1725 = vcmask 1042432
        %v1727 = vsel %vm1725, %v1153, 0
        %1729 = vmatprep.subr.bf16.mxu0 0
        %1730 = vmatpush1.bf16.msra.mxu0 0
        %1731 = vmatprep.subr.bf16.mxu0 0
        %1732 = vmatpush1.bf16.msra.mxu0 0
        %1733 = vmatprep.subr.bf16.mxu0 0
        %1734 = vmatpush1.bf16.msra.mxu0 0
        %1735 = vmatprep.subr.bf16.mxu0 0
        %1736 = vmatpush1.bf16.msra.mxu0 0
        %1737 = vmatprep.subr.bf16.mxu0 0
        %1738 = vmatpush1.bf16.msra.mxu0 0
        %1739 = vmatprep.subr.bf16.mxu0 0
        %1740 = vmatpush1.bf16.msra.mxu0 0
        %1741 = vmatprep.subr.bf16.mxu0 0
        %1742 = vmatpush1.bf16.msra.mxu0 %v1727
        %1743 = vmatprep.subr.bf16.mxu0 0
        %1744 = vmatpush1.bf16.msra.mxu0 %v1152
        %1745 = vmatprep.subr.bf16.mxu0 0
        %1746 = vmatpush2.bf16.msra.mxu0 0
        %1747 = vmatprep.subr.bf16.mxu0 0
        %1748 = vmatpush2.bf16.msra.mxu0 0
        %1749 = vmatprep.subr.bf16.mxu0 0
        %1750 = vmatpush2.bf16.msra.mxu0 0
        %1751 = vmatprep.subr.bf16.mxu0 0
        %1752 = vmatpush2.bf16.msra.mxu0 0
        %1753 = vmatprep.subr.bf16.mxu0 0
        %1754 = vmatpush2.bf16.msra.mxu0 0
        %1755 = vmatprep.subr.bf16.mxu0 0
        %1756 = vmatpush2.bf16.msra.mxu0 0
        %1757 = vmatprep.subr.bf16.mxu0 0
        %1758 = vmatpush2.bf16.msra.mxu0 0
        %1759 = vmatprep.subr.bf16.mxu0 0
        %1760 = vmatpush2.bf16.msra.mxu0 0
        %1761 = vmatprep.mubr.bf16.mxu0 0
        %1762 = vmatmul.mubr.bf16.gmra.mxu0 %v1723
        %v1763 = vpop.f32.mrf.mxu0
        %v1764 = vadd.f32 0.0, %v1763
        %v1765 = vpop.f32.mrf.mxu0
        %v1766 = vpop.f32.mrf.mxu0
        %v1767 = vadd.f32 0.0, %v1766
        %v1768 = vpop.f32.mrf.mxu0
        %1769 = vdwg.mxu0
        %v1771 = vsel %vm1725, %v1155, 0
        %1773 = vmatprep.subr.bf16.mxu0 0
        %1774 = vmatpush1.bf16.msra.mxu0 0
        %1775 = vmatprep.subr.bf16.mxu0 0
        %1776 = vmatpush1.bf16.msra.mxu0 0
        %1777 = vmatprep.subr.bf16.mxu0 0
        %1778 = vmatpush1.bf16.msra.mxu0 0
        %1779 = vmatprep.subr.bf16.mxu0 0
        %1780 = vmatpush1.bf16.msra.mxu0 0
        %1781 = vmatprep.subr.bf16.mxu0 0
        %1782 = vmatpush1.bf16.msra.mxu0 0
        %1783 = vmatprep.subr.bf16.mxu0 0
        %1784 = vmatpush1.bf16.msra.mxu0 0
        %1785 = vmatprep.subr.bf16.mxu0 0
        %1786 = vmatpush1.bf16.msra.mxu0 %v1771
        %1787 = vmatprep.subr.bf16.mxu0 0
        %1788 = vmatpush1.bf16.msra.mxu0 %v1154
        %1789 = vmatprep.subr.bf16.mxu0 0
        %1790 = vmatpush2.bf16.msra.mxu0 0
        %1791 = vmatprep.subr.bf16.mxu0 0
        %1792 = vmatpush2.bf16.msra.mxu0 0
        %1793 = vmatprep.subr.bf16.mxu0 0
        %1794 = vmatpush2.bf16.msra.mxu0 0
        %1795 = vmatprep.subr.bf16.mxu0 0
        %1796 = vmatpush2.bf16.msra.mxu0 0
        %1797 = vmatprep.subr.bf16.mxu0 0
        %1798 = vmatpush2.bf16.msra.mxu0 0
        %1799 = vmatprep.subr.bf16.mxu0 0
        %1800 = vmatpush2.bf16.msra.mxu0 0
        %1801 = vmatprep.subr.bf16.mxu0 0
        %1802 = vmatpush2.bf16.msra.mxu0 0
        %1803 = vmatprep.subr.bf16.mxu0 0
        %1804 = vmatpush2.bf16.msra.mxu0 0
        %1805 = vmatprep.mubr.bf16.mxu0 0
        %1806 = vmatmul.mubr.bf16.gmra.mxu0 %v1723
        %v1807 = vpop.f32.mrf.mxu0
        %v1808 = vadd.f32 0.0, %v1807
        %v1809 = vpop.f32.mrf.mxu0
        %v1810 = vpop.f32.mrf.mxu0
        %v1811 = vadd.f32 0.0, %v1810
        %v1812 = vpop.f32.mrf.mxu0
        %1813 = vdwg.mxu0
        %v1815 = vsel %vm1725, %v1157, 0
        %1817 = vmatprep.subr.bf16.mxu0 0
        %1818 = vmatpush1.bf16.msra.mxu0 0
        %1819 = vmatprep.subr.bf16.mxu0 0
        %1820 = vmatpush1.bf16.msra.mxu0 0
        %1821 = vmatprep.subr.bf16.mxu0 0
        %1822 = vmatpush1.bf16.msra.mxu0 0
        %1823 = vmatprep.subr.bf16.mxu0 0
        %1824 = vmatpush1.bf16.msra.mxu0 0
        %1825 = vmatprep.subr.bf16.mxu0 0
        %1826 = vmatpush1.bf16.msra.mxu0 0
        %1827 = vmatprep.subr.bf16.mxu0 0
        %1828 = vmatpush1.bf16.msra.mxu0 0
        %1829 = vmatprep.subr.bf16.mxu0 0
        %1830 = vmatpush1.bf16.msra.mxu0 %v1815
        %1831 = vmatprep.subr.bf16.mxu0 0
        %1832 = vmatpush1.bf16.msra.mxu0 %v1156
        %1833 = vmatprep.subr.bf16.mxu0 0
        %1834 = vmatpush2.bf16.msra.mxu0 0
        %1835 = vmatprep.subr.bf16.mxu0 0
        %1836 = vmatpush2.bf16.msra.mxu0 0
        %1837 = vmatprep.subr.bf16.mxu0 0
        %1838 = vmatpush2.bf16.msra.mxu0 0
        %1839 = vmatprep.subr.bf16.mxu0 0
        %1840 = vmatpush2.bf16.msra.mxu0 0
        %1841 = vmatprep.subr.bf16.mxu0 0
        %1842 = vmatpush2.bf16.msra.mxu0 0
        %1843 = vmatprep.subr.bf16.mxu0 0
        %1844 = vmatpush2.bf16.msra.mxu0 0
        %1845 = vmatprep.subr.bf16.mxu0 0
        %1846 = vmatpush2.bf16.msra.mxu0 0
        %1847 = vmatprep.subr.bf16.mxu0 0
        %1848 = vmatpush2.bf16.msra.mxu0 0
        %1849 = vmatprep.mubr.bf16.mxu0 0
        %1850 = vmatmul.mubr.bf16.gmra.mxu0 %v1723
        %v1851 = vpop.f32.mrf.mxu0
        %v1852 = vadd.f32 0.0, %v1851
        %v1853 = vpop.f32.mrf.mxu0
        %v1854 = vpop.f32.mrf.mxu0
        %v1855 = vadd.f32 0.0, %v1854
        %v1856 = vpop.f32.mrf.mxu0
        %1857 = vdwg.mxu0
        %v1858 = vld [vmem:[%s760] sm:$0xf]
        %v1859 = vld [vmem:[%s760 + $0x4] sm:$0xf]
        %v1860 = vld [vmem:[%s760 + $0x8] sm:$0xf]
        %v1861 = vld [vmem:[%s760 + $0xc] sm:$0xf]
        %v1862 = vld [vmem:[%s760 + $0x10] sm:$0xf]
        %v1863 = vld [vmem:[%s760 + $0x14] sm:$0xf]
        %v1864 = vld [vmem:[%s760 + $0x18] sm:$0xf]
        %v1865 = vld [vmem:[%s760 + $0x1c] sm:$0xf]
        %v1866 = vld [vmem:[%s760 + $0x20] sm:$0xf]
        %v1867 = vld [vmem:[%s760 + $0x24] sm:$0xf]
        %v1868 = vld [vmem:[%s760 + $0x28] sm:$0xf]
        %v1869 = vld [vmem:[%s760 + $0x2c] sm:$0xf]
        %v1870 = vld [vmem:[%s760 + $0x30] sm:$0xf]
        %v1871 = vld [vmem:[%s760 + $0x34] sm:$0xf]
        %v1872 = vld [vmem:[%s760 + $0x38] sm:$0xf]
        %v1873 = vld [vmem:[%s760 + $0x3c] sm:$0xf]
        %v1874 = vld [vmem:[%s760 + $0x40] sm:$0xf]
        %v1875 = vld [vmem:[%s760 + $0x44] sm:$0xf]
        %v1876 = vld [vmem:[%s760 + $0x48] sm:$0xf]
        %v1877 = vld [vmem:[%s760 + $0x4c] sm:$0xf]
        %v1878 = vld [vmem:[%s760 + $0x50] sm:$0xf]
        %v1879 = vld [vmem:[%s760 + $0x54] sm:$0xf]
        %v1880 = vld [vmem:[%s760 + $0x58] sm:$0xf]
        %v1881 = vld [vmem:[%s760 + $0x5c] sm:$0xf]
        %v1882 = vld [vmem:[%s760 + $0x60] sm:$0xf]
        %v1883 = vld [vmem:[%s760 + $0x64] sm:$0xf]
        %v1884 = vld [vmem:[%s760 + $0x68] sm:$0xf]
        %v1885 = vld [vmem:[%s760 + $0x6c] sm:$0xf]
        %v1886 = vld [vmem:[%s760 + $0x70] sm:$0xf]
        %v1887 = vld [vmem:[%s760 + $0x74] sm:$0xf]
        %v1888 = vld [vmem:[%s760 + $0x78] sm:$0xf]
        %v1889 = vld [vmem:[%s760 + $0x7c] sm:$0xf]
        %v1890 = vld [vmem:[%s760 + $0x80] sm:$0xf]
        %v1891 = vld [vmem:[%s760 + $0x84] sm:$0xf]
        %v1892 = vld [vmem:[%s760 + $0x88] sm:$0xf]
        %v1893 = vld [vmem:[%s760 + $0x8c] sm:$0xf]
        %v1894 = vld [vmem:[%s760 + $0x90] sm:$0xf]
        %v1895 = vld [vmem:[%s760 + $0x94] sm:$0xf]
        %v1896 = vld [vmem:[%s760 + $0x98] sm:$0xf]
        %v1897 = vld [vmem:[%s760 + $0x9c] sm:$0xf]
        %v1898 = vld [vmem:[%s760 + $0xa0] sm:$0xf]
        %v1899 = vld [vmem:[%s760 + $0xa4] sm:$0xf]
        %v1900 = vld [vmem:[%s760 + $0xa8] sm:$0xf]
        %v1901 = vld [vmem:[%s760 + $0xac] sm:$0xf]
        %v1902 = vld [vmem:[%s760 + $0xb0] sm:$0xf]
        %v1903 = vld [vmem:[%s760 + $0xb4] sm:$0xf]
        %v1904 = vld [vmem:[%s760 + $0xb8] sm:$0xf]
        %v1905 = vld [vmem:[%s760 + $0xbc] sm:$0xf]
        %v1906 = vld [vmem:[%s760 + $0xc0] sm:$0xf]
        %v1907 = vld [vmem:[%s760 + $0xc4] sm:$0xf]
        %v1908 = vld [vmem:[%s760 + $0xc8] sm:$0xf]
        %v1909 = vld [vmem:[%s760 + $0xcc] sm:$0xf]
        %v1910 = vld [vmem:[%s760 + $0xd0] sm:$0xf]
        %v1911 = vld [vmem:[%s760 + $0xd4] sm:$0xf]
        %v1912 = vld [vmem:[%s760 + $0xd8] sm:$0xf]
        %v1913 = vld [vmem:[%s760 + $0xdc] sm:$0xf]
        %v1914 = vld [vmem:[%s760 + $0xe0] sm:$0xf]
        %v1915 = vld [vmem:[%s760 + $0xe4] sm:$0xf]
        %v1916 = vld [vmem:[%s760 + $0xe8] sm:$0xf]
        %v1917 = vld [vmem:[%s760 + $0xec] sm:$0xf]
        %v1918 = vld [vmem:[%s760 + $0xf0] sm:$0xf]
        %v1919 = vld [vmem:[%s760 + $0xf4] sm:$0xf]
        %v1920 = vld [vmem:[%s760 + $0xf8] sm:$0xf]
        %v1921 = vld [vmem:[%s760 + $0xfc] sm:$0xf]
        %v1922 = vpack.c.bf16 %v1118, %v1117
        %v1923 = vpack.c.bf16 %v1767, %v1764
        %v1940 = vunpack.c.l.b16 %v1874
        %v1941 = vunpack.c.l.b16 %v1875
        %v1942 = vunpack.c.l.b16 %v1876
        %v1943 = vunpack.c.l.b16 %v1877
        %v1944 = vunpack.c.l.b16 %v1878
        %v1945 = vunpack.c.l.b16 %v1879
        %v1946 = vunpack.c.l.b16 %v1880
        %v1947 = vunpack.c.l.b16 %v1881
        %v1948 = vunpack.c.l.b16 %v1882
        %v1949 = vunpack.c.l.b16 %v1883
        %v1950 = vunpack.c.l.b16 %v1884
        %v1951 = vunpack.c.l.b16 %v1885
        %v1952 = vunpack.c.l.b16 %v1886
        %v1953 = vunpack.c.l.b16 %v1887
        %v1954 = vunpack.c.l.b16 %v1888
        %v1955 = vunpack.c.l.b16 %v1889
        %v1956 = vpack.c.b16 %v1941, %v1940
        %v1957 = vpack.c.b16 %v1943, %v1942
        %v1958 = vpack.c.b16 %v1945, %v1944
        %v1959 = vpack.c.b16 %v1947, %v1946
        %v1960 = vpack.c.b16 %v1949, %v1948
        %v1961 = vpack.c.b16 %v1951, %v1950
        %v1962 = vpack.c.b16 %v1953, %v1952
        %v1963 = vpack.c.b16 %v1955, %v1954
        %1972 = vmatprep.subr.bf16.mxu0 0
        %1973 = vmatpush1.bf16.msra.mxu0 %v1963
        %1974 = vmatprep.subr.bf16.mxu0 0
        %1975 = vmatpush1.bf16.msra.mxu0 %v1962
        %1976 = vmatprep.subr.bf16.mxu0 0
        %1977 = vmatpush1.bf16.msra.mxu0 %v1961
        %1978 = vmatprep.subr.bf16.mxu0 0
        %1979 = vmatpush1.bf16.msra.mxu0 %v1960
        %1980 = vmatprep.subr.bf16.mxu0 0
        %1981 = vmatpush1.bf16.msra.mxu0 %v1959
        %1982 = vmatprep.subr.bf16.mxu0 0
        %1983 = vmatpush1.bf16.msra.mxu0 %v1958
        %1984 = vmatprep.subr.bf16.mxu0 0
        %1985 = vmatpush1.bf16.msra.mxu0 %v1957
        %1986 = vmatprep.subr.bf16.mxu0 0
        %1987 = vmatpush1.bf16.msra.mxu0 %v1956
        %1988 = vmatprep.subr.bf16.mxu0 0
        %1989 = vmatpush2.bf16.msra.mxu0 0
        %1990 = vmatprep.subr.bf16.mxu0 0
        %1991 = vmatpush2.bf16.msra.mxu0 0
        %1992 = vmatprep.subr.bf16.mxu0 0
        %1993 = vmatpush2.bf16.msra.mxu0 0
        %1994 = vmatprep.subr.bf16.mxu0 0
        %1995 = vmatpush2.bf16.msra.mxu0 0
        %1996 = vmatprep.subr.bf16.mxu0 0
        %1997 = vmatpush2.bf16.msra.mxu0 0
        %1998 = vmatprep.subr.bf16.mxu0 0
        %1999 = vmatpush2.bf16.msra.mxu0 0
        %2000 = vmatprep.subr.bf16.mxu0 0
        %2001 = vmatpush2.bf16.msra.mxu0 0
        %2002 = vmatprep.subr.bf16.mxu0 0
        %2003 = vmatpush2.bf16.msra.mxu0 0
        %2004 = vmatprep.mubr.bf16.mxu0 0
        %2005 = vmatmul.mubr.bf16.gmra.mxu0 %v1923
        %v2006 = vpop.f32.mrf.mxu0
        %v2007 = vadd.f32 0.0, %v2006
        %v2008 = vpop.f32.mrf.mxu0
        %v2009 = vpop.f32.mrf.mxu0
        %v2010 = vadd.f32 0.0, %v2009
        %v2011 = vpop.f32.mrf.mxu0
        %2012 = vdwg.mxu0
        %v2029 = vunpack.c.l.b16 %v1858
        %v2030 = vunpack.c.l.b16 %v1859
        %v2031 = vunpack.c.l.b16 %v1860
        %v2032 = vunpack.c.l.b16 %v1861
        %v2033 = vunpack.c.l.b16 %v1862
        %v2034 = vunpack.c.l.b16 %v1863
        %v2035 = vunpack.c.l.b16 %v1864
        %v2036 = vunpack.c.l.b16 %v1865
        %v2037 = vunpack.c.l.b16 %v1866
        %v2038 = vunpack.c.l.b16 %v1867
        %v2039 = vunpack.c.l.b16 %v1868
        %v2040 = vunpack.c.l.b16 %v1869
        %v2041 = vunpack.c.l.b16 %v1870
        %v2042 = vunpack.c.l.b16 %v1871
        %v2043 = vunpack.c.l.b16 %v1872
        %v2044 = vunpack.c.l.b16 %v1873
        %v2045 = vpack.c.b16 %v2030, %v2029
        %v2046 = vpack.c.b16 %v2032, %v2031
        %v2047 = vpack.c.b16 %v2034, %v2033
        %v2048 = vpack.c.b16 %v2036, %v2035
        %v2049 = vpack.c.b16 %v2038, %v2037
        %v2050 = vpack.c.b16 %v2040, %v2039
        %v2051 = vpack.c.b16 %v2042, %v2041
        %v2052 = vpack.c.b16 %v2044, %v2043
        %2061 = vmatprep.subr.bf16.mxu0 0
        %2062 = vmatpush1.bf16.msra.mxu0 %v2052
        %2063 = vmatprep.subr.bf16.mxu0 0
        %2064 = vmatpush1.bf16.msra.mxu0 %v2051
        %2065 = vmatprep.subr.bf16.mxu0 0
        %2066 = vmatpush1.bf16.msra.mxu0 %v2050
        %2067 = vmatprep.subr.bf16.mxu0 0
        %2068 = vmatpush1.bf16.msra.mxu0 %v2049
        %2069 = vmatprep.subr.bf16.mxu0 0
        %2070 = vmatpush1.bf16.msra.mxu0 %v2048
        %2071 = vmatprep.subr.bf16.mxu0 0
        %2072 = vmatpush1.bf16.msra.mxu0 %v2047
        %2073 = vmatprep.subr.bf16.mxu0 0
        %2074 = vmatpush1.bf16.msra.mxu0 %v2046
        %2075 = vmatprep.subr.bf16.mxu0 0
        %2076 = vmatpush1.bf16.msra.mxu0 %v2045
        %2077 = vmatprep.subr.bf16.mxu0 0
        %2078 = vmatpush2.bf16.msra.mxu0 0
        %2079 = vmatprep.subr.bf16.mxu0 0
        %2080 = vmatpush2.bf16.msra.mxu0 0
        %2081 = vmatprep.subr.bf16.mxu0 0
        %2082 = vmatpush2.bf16.msra.mxu0 0
        %2083 = vmatprep.subr.bf16.mxu0 0
        %2084 = vmatpush2.bf16.msra.mxu0 0
        %2085 = vmatprep.subr.bf16.mxu0 0
        %2086 = vmatpush2.bf16.msra.mxu0 0
        %2087 = vmatprep.subr.bf16.mxu0 0
        %2088 = vmatpush2.bf16.msra.mxu0 0
        %2089 = vmatprep.subr.bf16.mxu0 0
        %2090 = vmatpush2.bf16.msra.mxu0 0
        %2091 = vmatprep.subr.bf16.mxu0 0
        %2092 = vmatpush2.bf16.msra.mxu0 0
        %2093 = vmatprep.mubr.bf16.mxu0 0
        %2094 = vmatmul.mubr.bf16.gmra.mxu0 %v1922
        %v2095 = vpop.f32.mrf.mxu0
        %v2096 = vadd.f32 %v2007, %v2095
        %v2097 = vpop.f32.mrf.mxu0
        %v2098 = vpop.f32.mrf.mxu0
        %v2099 = vadd.f32 %v2010, %v2098
        %v2100 = vpop.f32.mrf.mxu0
        %2101 = vdwg.mxu0
        %v2102 = vpack.c.bf16 %v1811, %v1808
        %v2119 = vunpack.c.l.b16 %v1890
        %v2120 = vunpack.c.l.b16 %v1891
        %v2121 = vunpack.c.l.b16 %v1892
        %v2122 = vunpack.c.l.b16 %v1893
        %v2123 = vunpack.c.l.b16 %v1894
        %v2124 = vunpack.c.l.b16 %v1895
        %v2125 = vunpack.c.l.b16 %v1896
        %v2126 = vunpack.c.l.b16 %v1897
        %v2127 = vunpack.c.l.b16 %v1898
        %v2128 = vunpack.c.l.b16 %v1899
        %v2129 = vunpack.c.l.b16 %v1900
        %v2130 = vunpack.c.l.b16 %v1901
        %v2131 = vunpack.c.l.b16 %v1902
        %v2132 = vunpack.c.l.b16 %v1903
        %v2133 = vunpack.c.l.b16 %v1904
        %v2134 = vunpack.c.l.b16 %v1905
        %v2135 = vpack.c.b16 %v2120, %v2119
        %v2136 = vpack.c.b16 %v2122, %v2121
        %v2137 = vpack.c.b16 %v2124, %v2123
        %v2138 = vpack.c.b16 %v2126, %v2125
        %v2139 = vpack.c.b16 %v2128, %v2127
        %v2140 = vpack.c.b16 %v2130, %v2129
        %v2141 = vpack.c.b16 %v2132, %v2131
        %v2142 = vpack.c.b16 %v2134, %v2133
        %2151 = vmatprep.subr.bf16.mxu0 0
        %2152 = vmatpush1.bf16.msra.mxu0 %v2142
        %2153 = vmatprep.subr.bf16.mxu0 0
        %2154 = vmatpush1.bf16.msra.mxu0 %v2141
        %2155 = vmatprep.subr.bf16.mxu0 0
        %2156 = vmatpush1.bf16.msra.mxu0 %v2140
        %2157 = vmatprep.subr.bf16.mxu0 0
        %2158 = vmatpush1.bf16.msra.mxu0 %v2139
        %2159 = vmatprep.subr.bf16.mxu0 0
        %2160 = vmatpush1.bf16.msra.mxu0 %v2138
        %2161 = vmatprep.subr.bf16.mxu0 0
        %2162 = vmatpush1.bf16.msra.mxu0 %v2137
        %2163 = vmatprep.subr.bf16.mxu0 0
        %2164 = vmatpush1.bf16.msra.mxu0 %v2136
        %2165 = vmatprep.subr.bf16.mxu0 0
        %2166 = vmatpush1.bf16.msra.mxu0 %v2135
        %2167 = vmatprep.subr.bf16.mxu0 0
        %2168 = vmatpush2.bf16.msra.mxu0 0
        %2169 = vmatprep.subr.bf16.mxu0 0
        %2170 = vmatpush2.bf16.msra.mxu0 0
        %2171 = vmatprep.subr.bf16.mxu0 0
        %2172 = vmatpush2.bf16.msra.mxu0 0
        %2173 = vmatprep.subr.bf16.mxu0 0
        %2174 = vmatpush2.bf16.msra.mxu0 0
        %2175 = vmatprep.subr.bf16.mxu0 0
        %2176 = vmatpush2.bf16.msra.mxu0 0
        %2177 = vmatprep.subr.bf16.mxu0 0
        %2178 = vmatpush2.bf16.msra.mxu0 0
        %2179 = vmatprep.subr.bf16.mxu0 0
        %2180 = vmatpush2.bf16.msra.mxu0 0
        %2181 = vmatprep.subr.bf16.mxu0 0
        %2182 = vmatpush2.bf16.msra.mxu0 0
        %2183 = vmatprep.mubr.bf16.mxu0 0
        %2184 = vmatmul.mubr.bf16.gmra.mxu0 %v2102
        %v2185 = vpop.f32.mrf.mxu0
        %v2186 = vadd.f32 0.0, %v2185
        %v2187 = vpop.f32.mrf.mxu0
        %v2188 = vpop.f32.mrf.mxu0
        %v2189 = vadd.f32 0.0, %v2188
        %v2190 = vpop.f32.mrf.mxu0
        %2191 = vdwg.mxu0
        %v2192 = vadd.f32 %v2096, %v2186
        %v2193 = vadd.f32 %v2099, %v2189
        %v2194 = vpack.c.bf16 %v1855, %v1852
        %v2211 = vunpack.c.l.b16 %v1906
        %v2212 = vunpack.c.l.b16 %v1907
        %v2213 = vunpack.c.l.b16 %v1908
        %v2214 = vunpack.c.l.b16 %v1909
        %v2215 = vunpack.c.l.b16 %v1910
        %v2216 = vunpack.c.l.b16 %v1911
        %v2217 = vunpack.c.l.b16 %v1912
        %v2218 = vunpack.c.l.b16 %v1913
        %v2219 = vunpack.c.l.b16 %v1914
        %v2220 = vunpack.c.l.b16 %v1915
        %v2221 = vunpack.c.l.b16 %v1916
        %v2222 = vunpack.c.l.b16 %v1917
        %v2223 = vunpack.c.l.b16 %v1918
        %v2224 = vunpack.c.l.b16 %v1919
        %v2225 = vunpack.c.l.b16 %v1920
        %v2226 = vunpack.c.l.b16 %v1921
        %v2227 = vpack.c.b16 %v2212, %v2211
        %v2228 = vpack.c.b16 %v2214, %v2213
        %v2229 = vpack.c.b16 %v2216, %v2215
        %v2230 = vpack.c.b16 %v2218, %v2217
        %v2231 = vpack.c.b16 %v2220, %v2219
        %v2232 = vpack.c.b16 %v2222, %v2221
        %v2233 = vpack.c.b16 %v2224, %v2223
        %v2234 = vpack.c.b16 %v2226, %v2225
        %2243 = vmatprep.subr.bf16.mxu0 0
        %2244 = vmatpush1.bf16.msra.mxu0 %v2234
        %2245 = vmatprep.subr.bf16.mxu0 0
        %2246 = vmatpush1.bf16.msra.mxu0 %v2233
        %2247 = vmatprep.subr.bf16.mxu0 0
        %2248 = vmatpush1.bf16.msra.mxu0 %v2232
        %2249 = vmatprep.subr.bf16.mxu0 0
        %2250 = vmatpush1.bf16.msra.mxu0 %v2231
        %2251 = vmatprep.subr.bf16.mxu0 0
        %2252 = vmatpush1.bf16.msra.mxu0 %v2230
        %2253 = vmatprep.subr.bf16.mxu0 0
        %2254 = vmatpush1.bf16.msra.mxu0 %v2229
        %2255 = vmatprep.subr.bf16.mxu0 0
        %2256 = vmatpush1.bf16.msra.mxu0 %v2228
        %2257 = vmatprep.subr.bf16.mxu0 0
        %2258 = vmatpush1.bf16.msra.mxu0 %v2227
        %2259 = vmatprep.subr.bf16.mxu0 0
        %2260 = vmatpush2.bf16.msra.mxu0 0
        %2261 = vmatprep.subr.bf16.mxu0 0
        %2262 = vmatpush2.bf16.msra.mxu0 0
        %2263 = vmatprep.subr.bf16.mxu0 0
        %2264 = vmatpush2.bf16.msra.mxu0 0
        %2265 = vmatprep.subr.bf16.mxu0 0
        %2266 = vmatpush2.bf16.msra.mxu0 0
        %2267 = vmatprep.subr.bf16.mxu0 0
        %2268 = vmatpush2.bf16.msra.mxu0 0
        %2269 = vmatprep.subr.bf16.mxu0 0
        %2270 = vmatpush2.bf16.msra.mxu0 0
        %2271 = vmatprep.subr.bf16.mxu0 0
        %2272 = vmatpush2.bf16.msra.mxu0 0
        %2273 = vmatprep.subr.bf16.mxu0 0
        %2274 = vmatpush2.bf16.msra.mxu0 0
        %2275 = vmatprep.mubr.bf16.mxu0 0
        %2276 = vmatmul.mubr.bf16.gmra.mxu0 %v2194
        %v2277 = vpop.f32.mrf.mxu0
        %v2278 = vadd.f32 0.0, %v2277
        %v2279 = vpop.f32.mrf.mxu0
        %v2280 = vpop.f32.mrf.mxu0
        %v2281 = vadd.f32 0.0, %v2280
        %v2282 = vpop.f32.mrf.mxu0
        %2283 = vdwg.mxu0
        %v2284 = vadd.f32 %v2192, %v2278
        %v2285 = vadd.f32 %v2193, %v2281
        %v2286 = vld [vmem:[%s763] sm:$0x1]
        %v2287 = vld [vmem:[%s766] sm:$0x1]
        %vm2288 = vcmask 1041408
        %v2289 = vsel %vm2288, %v2285, 0.0
        %v2290 = vadd.f32 %v2284, %v2289
        %v2291 = vrot.slane %v2290, 4
        %v2292 = vadd.f32 %v2290, %v2291
        %v2293 = vrot.slane %v2292, 2
        %v2294 = vadd.f32 %v2292, %v2293
        %v2295 = vrot.slane %v2294, 1
        %v2296 = vadd.f32 %v2294, %v2295
        %v2297 = vrcp.pop 10.0
        %v2298 = vmul.f32 %v2296, %v2297
        %v2299 = vsub.f32 %v2284, %v2298
        %v2300 = vsub.f32 %v2285, %v2298
        %v2301 = vmul.f32 %v2299, %v2299
        %v2302 = vmul.f32 %v2300, %v2300
        %v2303 = vsel %vm2288, %v2302, 0.0
        %v2304 = vadd.f32 %v2301, %v2303
        %v2305 = vrot.slane %v2304, 4
        %v2306 = vadd.f32 %v2304, %v2305
        %v2307 = vrot.slane %v2306, 2
        %v2308 = vadd.f32 %v2306, %v2307
        %v2309 = vrot.slane %v2308, 1
        %v2310 = vadd.f32 %v2308, %v2309
        %v2311 = vmul.f32 %v2310, %v2297
        %v2312 = vadd.f32 %v2311, 1e-05
        %v2313 = vrsqrt.pop %v2312
        %v2314 = vmul.f32 %v2299, %v2313
        %v2315 = vmul.f32 %v2300, %v2313
        %v2317 = vlaneseq
        %v2318 = vshrl.u32 %v2317, 7
        %v2319 = vsub.s32 0, %v2318
        %v2320 = vrot.slane %v2286, %v2319
        %v2322 = vmul.f32 %v2314, %v2320
        %v2323 = vmul.f32 %v2315, %v2320
        %v2325 = vlaneseq
        %v2326 = vshrl.u32 %v2325, 7
        %v2327 = vsub.s32 0, %v2326
        %v2328 = vrot.slane %v2287, %v2327
        %v2330 = vadd.f32 %v2322, %v2328
        %v2331 = vadd.f32 %v2323, %v2328
        %v2332 = vmax.f32 %v2330, 0.0
        %v2333 = vmax.f32 %v2331, 0.0
        %v2334 = vpack.c.bf16 %v2333, %v2332
        %v2335 = vld [vmem:[%s659] sm:$0xf]
        %v2336 = vld [vmem:[%s659 + $0x4] sm:$0xf]
        %v2337 = vld [vmem:[%s659 + $0x8] sm:$0xf]
        %v2338 = vld [vmem:[%s659 + $0xc] sm:$0xf]
        %v2339 = vld [vmem:[%s659 + $0x10] sm:$0xf]
        %v2340 = vld [vmem:[%s659 + $0x14] sm:$0xf]
        %v2341 = vld [vmem:[%s659 + $0x18] sm:$0xf]
        %v2342 = vld [vmem:[%s659 + $0x1c] sm:$0xf]
        %v2343 = vld [vmem:[%s659 + $0x20] sm:$0xf]
        %v2344 = vld [vmem:[%s659 + $0x24] sm:$0xf]
        %v2345 = vld [vmem:[%s659 + $0x28] sm:$0xf]
        %v2346 = vld [vmem:[%s659 + $0x2c] sm:$0xf]
        %v2347 = vld [vmem:[%s659 + $0x30] sm:$0xf]
        %v2348 = vld [vmem:[%s659 + $0x34] sm:$0xf]
        %v2349 = vld [vmem:[%s659 + $0x38] sm:$0xf]
        %v2350 = vld [vmem:[%s659 + $0x3c] sm:$0xf]
        %v2367 = vunpack.c.l.b16 %v2335
        %v2368 = vunpack.c.l.b16 %v2336
        %v2369 = vunpack.c.l.b16 %v2337
        %v2370 = vunpack.c.l.b16 %v2338
        %v2371 = vunpack.c.l.b16 %v2339
        %v2372 = vunpack.c.l.b16 %v2340
        %v2373 = vunpack.c.l.b16 %v2341
        %v2374 = vunpack.c.l.b16 %v2342
        %v2375 = vunpack.c.l.b16 %v2343
        %v2376 = vunpack.c.l.b16 %v2344
        %v2377 = vunpack.c.l.b16 %v2345
        %v2378 = vunpack.c.l.b16 %v2346
        %v2379 = vunpack.c.l.b16 %v2347
        %v2380 = vunpack.c.l.b16 %v2348
        %v2381 = vunpack.c.l.b16 %v2349
        %v2382 = vunpack.c.l.b16 %v2350
        %v2383 = vpack.c.b16 %v2368, %v2367
        %v2384 = vpack.c.b16 %v2370, %v2369
        %v2385 = vpack.c.b16 %v2372, %v2371
        %v2386 = vpack.c.b16 %v2374, %v2373
        %v2387 = vpack.c.b16 %v2376, %v2375
        %v2388 = vpack.c.b16 %v2378, %v2377
        %v2389 = vpack.c.b16 %v2380, %v2379
        %v2390 = vpack.c.b16 %v2382, %v2381
        %2399 = vmatprep.subr.bf16.mxu0 0
        %2400 = vmatpush1.bf16.msra.mxu0 %v2390
        %2401 = vmatprep.subr.bf16.mxu0 0
        %2402 = vmatpush1.bf16.msra.mxu0 %v2389
        %2403 = vmatprep.subr.bf16.mxu0 0
        %2404 = vmatpush1.bf16.msra.mxu0 %v2388
        %2405 = vmatprep.subr.bf16.mxu0 0
        %2406 = vmatpush1.bf16.msra.mxu0 %v2387
        %2407 = vmatprep.subr.bf16.mxu0 0
        %2408 = vmatpush1.bf16.msra.mxu0 %v2386
        %2409 = vmatprep.subr.bf16.mxu0 0
        %2410 = vmatpush1.bf16.msra.mxu0 %v2385
        %2411 = vmatprep.subr.bf16.mxu0 0
        %2412 = vmatpush1.bf16.msra.mxu0 %v2384
        %2413 = vmatprep.subr.bf16.mxu0 0
        %2414 = vmatpush1.bf16.msra.mxu0 %v2383
        %2415 = vmatprep.subr.bf16.mxu0 0
        %2416 = vmatpush2.bf16.msra.mxu0 0
        %2417 = vmatprep.subr.bf16.mxu0 0
        %2418 = vmatpush2.bf16.msra.mxu0 0
        %2419 = vmatprep.subr.bf16.mxu0 0
        %2420 = vmatpush2.bf16.msra.mxu0 0
        %2421 = vmatprep.subr.bf16.mxu0 0
        %2422 = vmatpush2.bf16.msra.mxu0 0
        %2423 = vmatprep.subr.bf16.mxu0 0
        %2424 = vmatpush2.bf16.msra.mxu0 0
        %2425 = vmatprep.subr.bf16.mxu0 0
        %2426 = vmatpush2.bf16.msra.mxu0 0
        %2427 = vmatprep.subr.bf16.mxu0 0
        %2428 = vmatpush2.bf16.msra.mxu0 0
        %2429 = vmatprep.subr.bf16.mxu0 0
        %2430 = vmatpush2.bf16.msra.mxu0 0
        %2431 = vmatprep.mubr.bf16.mxu0 0
        %2432 = vmatmul.mubr.bf16.gmra.mxu0 %v2334
        %v2433 = vpop.f32.mrf.mxu0
        %v2434 = vadd.f32 0.0, %v2433
        %v2435 = vpop.f32.mrf.mxu0
        %v2436 = vpop.f32.mrf.mxu0
        %v2437 = vadd.f32 0.0, %v2436
        %v2438 = vpop.f32.mrf.mxu0
        %2439 = vdwg.mxu0
        %v2440 = vld [vmem:[%s769] sm:$0x1]
        %v2441 = vld [vmem:[%s772] sm:$0x1]
        %v2442 = vsel %vm2288, %v2437, 0.0
        %v2443 = vadd.f32 %v2434, %v2442
        %v2444 = vrot.slane %v2443, 4
        %v2445 = vadd.f32 %v2443, %v2444
        %v2446 = vrot.slane %v2445, 2
        %v2447 = vadd.f32 %v2445, %v2446
        %v2448 = vrot.slane %v2447, 1
        %v2449 = vadd.f32 %v2447, %v2448
        %v2450 = vmul.f32 %v2449, %v2297
        %v2451 = vsub.f32 %v2434, %v2450
        %v2452 = vsub.f32 %v2437, %v2450
        %v2453 = vmul.f32 %v2451, %v2451
        %v2454 = vmul.f32 %v2452, %v2452
        %v2455 = vsel %vm2288, %v2454, 0.0
        %v2456 = vadd.f32 %v2453, %v2455
        %v2457 = vrot.slane %v2456, 4
        %v2458 = vadd.f32 %v2456, %v2457
        %v2459 = vrot.slane %v2458, 2
        %v2460 = vadd.f32 %v2458, %v2459
        %v2461 = vrot.slane %v2460, 1
        %v2462 = vadd.f32 %v2460, %v2461
        %v2463 = vmul.f32 %v2462, %v2297
        %v2464 = vadd.f32 %v2463, 1e-05
        %v2465 = vrsqrt.pop %v2464
        %v2466 = vmul.f32 %v2451, %v2465
        %v2467 = vmul.f32 %v2452, %v2465
        %v2469 = vlaneseq
        %v2470 = vshrl.u32 %v2469, 7
        %v2471 = vsub.s32 0, %v2470
        %v2472 = vrot.slane %v2440, %v2471
        %v2474 = vmul.f32 %v2466, %v2472
        %v2475 = vmul.f32 %v2467, %v2472
        %v2477 = vlaneseq
        %v2478 = vshrl.u32 %v2477, 7
        %v2479 = vsub.s32 0, %v2478
        %v2480 = vrot.slane %v2441, %v2479
        %v2482 = vadd.f32 %v2474, %v2480
        %v2483 = vadd.f32 %v2475, %v2480
        %v2484 = vmax.f32 %v2482, 0.0
        %v2485 = vmax.f32 %v2483, 0.0
        %2486 = vst [vmem:[#allocation2] sm:$0xff] %v2484
        %2487 = vst [vmem:[#allocation2 + $0x8] sm:$0x3] %v2485
        %2488 = vst [vmem:[#allocation3] sm:$0xff] %v1718
        %2489 = vst [vmem:[#allocation3 + $0x8] sm:$0xff] %v1719
        %2490 = vst [vmem:[#allocation3 + $0x10] sm:$0x3f] %v1720
        %p2491 = scmp.eq.s32.totalorder %s47, 1
        // Predicated region
        $region101: #{forward.2} parent=83 // pred_check
          %p2492 = pneg %p2491
        $region102: #{forward.2} parent=83 // pred_check_branch
          %2494 = sbr.rel (%p2492) target = $region104
        $region103: #{forward.2} parent=83 // pred_region
          %v2495 = vpack.c.bf16 %v2485, %v2484
          %v2497 = vunpack.c.l.b16 %v2495
          %v2498 = vunpack.c.h.b16 %v2495
          %v2499 = vpack.c.b16 %v2497, %v2497
          %v2500 = vpack.c.b16 %v2498, %v2498
          %2503 = vst [vmem:[%s18] sm:$0xf] %v2499
          %2504 = vst [vmem:[%s18 + $0x4] sm:$0x1] %v2500
          %v2505 = vpack.c.bf16 %v1719, %v1718
          %v2506 = vpack.c.bf16 %v1720, %v1720
          %v2509 = vunpack.c.l.b16 %v2505
          %v2510 = vunpack.c.h.b16 %v2505
          %v2511 = vunpack.c.l.b16 %v2506
          %v2512 = vpack.c.b16 %v2509, %v2509
          %v2513 = vpack.c.b16 %v2510, %v2510
          %v2514 = vpack.c.b16 %v2511, %v2511
          %2518 = vst [vmem:[%s19] sm:$0xf] %v2512
          %2519 = vst [vmem:[%s19 + $0x4] sm:$0xf] %v2513
          %2520 = vst [vmem:[%s19 + $0x8] sm:$0x7] %v2514
        $region104: #{forward.2} parent=83 // pred_fallthru
          _
        // Predicated region
        $region105: #{forward.2} parent=83 // pred_check
          %p2521 = pneg %p456
        $region106: #{forward.2} parent=83 // pred_check_branch
          %2523 = sbr.rel (%p2521) target = $region108
        $region107: #{forward.2} parent=83 // pred_region
          _
        $region108: #{forward.2} parent=83 // pred_fallthru
          _
        // Predicated region
        $region109: #{forward.2} parent=83 // pred_check
          %p2524 = pneg %p477
        $region110: #{forward.2} parent=83 // pred_check_branch
          %2526 = sbr.rel (%p2524) target = $region112
        $region111: #{forward.2} parent=83 // pred_region
          _
        $region112: #{forward.2} parent=83 // pred_fallthru
          _
        // Predicated region
        $region113: #{forward.2} parent=83 // pred_check
          %p2527 = pneg %p456
        $region114: #{forward.2} parent=83 // pred_check_branch
          %2529 = sbr.rel (%p2527) target = $region116
        $region115: #{forward.2} parent=83 // pred_region
          _
        $region116: #{forward.2} parent=83 // pred_fallthru
          _
        // Predicated region
        $region117: #{forward.2} parent=83 // pred_check
          %p2530 = pneg %p477
        $region118: #{forward.2} parent=83 // pred_check_branch
          %2532 = sbr.rel (%p2530) target = $region120
        $region119: #{forward.2} parent=83 // pred_region
          _
        $region120: #{forward.2} parent=83 // pred_fallthru
          _
      $region84: #{forward.2} parent=5 // pred_fallthru
        _
      %p2533 = scmp.le.s32.totalorder 2, %s42
      // Predicated region
      $region121: #{forward.2} parent=5 // pred_check
        %p2534 = pneg %p2533
      $region122: #{forward.2} parent=5 // pred_check_branch
        %2536 = sbr.rel (%p2534) target = $region124
      $region123: #{forward.2} parent=5 // pred_region
        %s2537 = ssub.s32 %s42, 2
      $region124: #{forward.2} parent=5 // pred_fallthru
        _
    $region6: #{forward.2} parent=1 // loop_footer
      %s46 = sadd.s32 1, %s42
    $region7: #{forward.2} parent=1 // loop_footer_branch
      %41 = sbr.rel target = $region3
    $region8: #{forward.2} parent=1 // loop_exit
      _
    %2538 = vsyncpa [#allocation11], 1
    %s2539 = scalar_lea.sflag [#allocation11], 1
    %2540 = vsyncpa %s2539, 1
    %2541 = vsyncpa [#allocation13], 1
    %s2542 = scalar_lea.sflag [#allocation13], 1
    %2543 = vsyncpa %s2542, 1

</llo_original>
